<compile_context>
chip_gen: v5e
topology: v5e:2x2
jax: 0.10.0
libtpu: 0.0.40
codegen_flags: <defaults>
</compile_context>

<pallas_src>
import functools

import jax
import jax.numpy as jnp
import numpy as np
from jax.experimental import pallas as pl

_FC_ROW = 8  # sublane-aligned start row of the fc weight inside the packed params


# ----------------------------------------------------------------------------- kernel
def head3d_kernel(x_ref, w_ref, p_ref, o_ref, *, n, b, t, cout, eps):
    # Full-K Conv3d centre-tap matmul in one shot (bf16 x bf16 -> f32 result).
    # Column block kt of w_ref holds conv_w[:, :, kt, 1, 1].T; with
    # feat_h = feat_w = 1 the other spatial taps only ever see zero padding, so
    # the whole Conv3d reduces to this width-3 temporal conv.
    z = jnp.dot(x_ref[...], w_ref[...], preferred_element_type=jnp.float32)  # (n, 3*cout)
    tap_prev = z[:, 0 * cout:1 * cout]   # tap kd=0, to be read at frame i-1
    tap_mid = z[:, 1 * cout:2 * cout]    # tap kd=1, frame i
    tap_next = z[:, 2 * cout:3 * cout]   # tap kd=2, frame i+1

    # Block-diagonal +-1 shift (permutation) matrices. Rows are (clip, frame)
    # ordered; the same-clip test is a float floor-div, exact for these small
    # indices ((i+0.5)/t is never within rounding distance of an integer).
    ii = jax.lax.broadcasted_iota(jnp.int32, (n, n), 0)   # output row i
    jj = jax.lax.broadcasted_iota(jnp.int32, (n, n), 1)   # source row j
    i_f = ii.astype(jnp.float32)
    j_f = jj.astype(jnp.float32)
    inv_t = 1.0 / t
    same_clip = (jnp.floor((i_f + 0.5) * inv_t) == jnp.floor((j_f + 0.5) * inv_t))
    s_prev = jnp.where((jj == ii - 1) & same_clip, 1.0, 0.0)   # picks row i-1
    s_next = jnp.where((jj == ii + 1) & same_clip, 1.0, 0.0)   # picks row i+1

    # Width-3 temporal conv (+ bias). The shift matmuls zero out the frame-0 /
    # frame-(t-1) neighbours, which matches the Conv3d zero padding, and never
    # leak across clips.
    conv = (jnp.dot(s_prev, tap_prev, preferred_element_type=jnp.float32)
            + tap_mid
            + jnp.dot(s_next, tap_next, preferred_element_type=jnp.float32)
            + p_ref[0:1, :])

    # BatchNorm3d, training mode: biased batch statistics over all n = b*t rows.
    inv_n = 1.0 / n
    mean = jnp.sum(conv, axis=0, keepdims=True) * inv_n
    cen = conv - mean
    var = jnp.sum(cen * cen, axis=0, keepdims=True) * inv_n
    act = jnp.maximum(
        p_ref[1:2, :] * (cen * jax.lax.rsqrt(var + eps)) + p_ref[2:3, :], 0.0)

    # MaxPool3d(3,3,3) pad 1 stride 1 with H = W = 1 -> temporal max over
    # {i-1, i, i+1}. act >= 0 (post-ReLU), so the zero rows injected by the
    # shift matrices are exactly equivalent to PyTorch's -inf padding.
    a_prev = jnp.dot(s_prev, act, preferred_element_type=jnp.float32)
    a_next = jnp.dot(s_next, act, preferred_element_type=jnp.float32)
    pooled = jnp.maximum(jnp.maximum(a_prev, act), a_next)

    # Linear(cout * t -> 1). torch flatten order is (c, t) -> packed rows
    # [_FC_ROW, _FC_ROW + t) hold the weight as (t, cout); each clip's t
    # consecutive rows line up with it directly, so the FC is an elementwise
    # product + full reduce per clip. b is static -> unrolled.
    wfc = p_ref[_FC_ROW:_FC_ROW + t, :]
    parts = []
    for bi in range(b):
        blk = pooled[bi * t:(bi + 1) * t, :] * wfc
        parts.append(jnp.sum(jnp.sum(blk, axis=1, keepdims=True), axis=0, keepdims=True))
    o_ref[...] = jnp.concatenate(parts, axis=0) + p_ref[3:4, 0:1]


# ----------------------------------------------------------------------------- param prep (one-time)
def prepare_head3d_params(params, *, frame_num=10, out_ch=128):
    """One-time repack of Head3D parameters into kernel layouts.

    Keep this off the per-call path (call once, reuse the result)."""
    t, cout = frame_num, out_ch
    # Conv3d centre spatial tap, concatenated over the 3 temporal taps.
    w_center = params["conv_w"][:, :, :, 1, 1]                          # (cout, cin, 3)
    w_cat = jnp.concatenate([w_center[:, :, kt].T for kt in range(3)], axis=1)

    # Pack every small parameter into one (rows, cout) f32 array:
    #   row 0: conv bias, row 1: bn gamma, row 2: bn beta, row 3: fc bias
    #   rows [_FC_ROW, _FC_ROW + t): fc weight repacked (c, t) -> (t, cout).
    rows = ((_FC_ROW + t + 7) // 8) * 8
    packed = jnp.zeros((rows, cout), jnp.float32)
    packed = packed.at[0].set(params["conv_b"].astype(jnp.float32))
    packed = packed.at[1].set(params["bn_gamma"].astype(jnp.float32))
    packed = packed.at[2].set(params["bn_beta"].astype(jnp.float32))
    packed = packed.at[3].set(jnp.full((cout,), params["fc_b"][0], jnp.float32))
    packed = packed.at[_FC_ROW:_FC_ROW + t].set(
        params["fc_w"].reshape(cout, t).T.astype(jnp.float32))
    return {"w_cat": w_cat.astype(jnp.bfloat16), "packed": packed}


# ----------------------------------------------------------------------------- wrapper
@functools.partial(jax.jit, static_argnames=("frame_num", "feat_h", "feat_w",
                                              "in_ch", "out_ch"))
def resnet3dnet_head_forward(feat, prep, *, frame_num=10, feat_h=1, feat_w=1,
                             in_ch=2048, out_ch=128):
    """feat: backbone feature map (N, 2048, 1, 1), N = B * frame_num."""
    assert feat_h == 1 and feat_w == 1
    t, cout = frame_num, out_ch
    # torch: x = x.view(-1, 2048, frame_num, feat_h, feat_w); h = w = 1 so the
    # reshape below is a free reinterpretation of the same buffer.
    x3 = feat.reshape(-1, in_ch, t)
    b = x3.shape[0]
    n = b * t
    # Cast first so the single remaining wrapper transpose moves bf16 (half the
    # bytes, fused with the cast), then order rows (clip, frame) with channels
    # on lanes for the MXU.
    x_rows = jnp.transpose(x3.astype(jnp.bfloat16), (0, 2, 1)).reshape(n, in_ch)

    kernel = functools.partial(head3d_kernel, n=n, b=b, t=t, cout=cout, eps=1e-5)
    flops = 2 * n * in_ch * 3 * cout + 4 * 2 * n * n * cout
    bytes_accessed = (x_rows.size * 2 + prep["w_cat"].size * 2
                      + prep["packed"].size * 4 + b * 4)
    return pl.pallas_call(
        kernel,
        out_shape=jax.ShapeDtypeStruct((b, 1), jnp.float32),
        cost_estimate=pl.CostEstimate(flops=flops, transcendentals=cout,
                                      bytes_accessed=bytes_accessed),
    )(x_rows, prep["w_cat"], prep["packed"])


# ----------------------------------------------------------------------------- pure-JAX reference
def head3d_reference(feat, params, *, frame_num=10, feat_h=1, feat_w=1, in_ch=2048):
    x = feat.reshape(-1, in_ch, frame_num, feat_h, feat_w)
    conv = jax.lax.conv_general_dilated(
        x, params["conv_w"], window_strides=(1, 1, 1),
        padding=((1, 1), (1, 1), (1, 1)),
        dimension_numbers=("NCDHW", "OIDHW", "NCDHW"))
    conv = conv + params["conv_b"].reshape(1, -1, 1, 1, 1)
    mean = jnp.mean(conv, axis=(0, 2, 3, 4), keepdims=True)
    var = jnp.mean((conv - mean) ** 2, axis=(0, 2, 3, 4), keepdims=True)
    xhat = (conv - mean) / jnp.sqrt(var + 1e-5)
    bn = (params["bn_gamma"].reshape(1, -1, 1, 1, 1) * xhat
          + params["bn_beta"].reshape(1, -1, 1, 1, 1))
    r = jnp.maximum(bn, 0.0)
    p = jax.lax.reduce_window(
        r, -jnp.inf, jax.lax.max,
        window_dimensions=(1, 1, 3, 3, 3), window_strides=(1, 1, 1, 1, 1),
        padding=((0, 0), (0, 0), (1, 1), (1, 1), (1, 1)))
    flat = p.reshape(p.shape[0], -1)
    return flat @ params["fc_w"].T + params["fc_b"]


# ----------------------------------------------------------------------------- main
if __name__ == "__main__":
    B, FRAMES, FEAT_H, FEAT_W = 2, 10, 1, 1
    IN_CH, OUT_CH = 2048, 128
    expansion = FRAMES * FEAT_H * FEAT_W

    key = jax.random.PRNGKey(0)
    kx, k1, k2, k3, k4, k5, k6 = jax.random.split(key, 7)

    # Backbone feature map (what ResNet50's trunk would produce): (B*frames, 2048, 1, 1)
    feat = jax.random.normal(kx, (B * FRAMES, IN_CH, 1, 1), jnp.float32)

    # Deterministic synthetic parameters (shapes from Head3D.__init__).
    params = {
        "conv_w": 0.02 * jax.random.normal(k1, (OUT_CH, IN_CH, 3, 3, 3), jnp.float32),
        "conv_b": 0.10 * jax.random.normal(k2, (OUT_CH,), jnp.float32),
        "bn_gamma": 1.0 + 0.10 * jax.random.normal(k3, (OUT_CH,), jnp.float32),
        "bn_beta": 0.10 * jax.random.normal(k4, (OUT_CH,), jnp.float32),
        "fc_w": 0.05 * jax.random.normal(k5, (1, OUT_CH * expansion), jnp.float32),
        "fc_b": 0.10 * jax.random.normal(k6, (1,), jnp.float32),
    }

    prep = prepare_head3d_params(params, frame_num=FRAMES, out_ch=OUT_CH)

    out = resnet3dnet_head_forward(feat, prep, frame_num=FRAMES,
                                   feat_h=FEAT_H, feat_w=FEAT_W,
                                   in_ch=IN_CH, out_ch=OUT_CH)
    out = jax.block_until_ready(out)

    ref = jax.block_until_ready(
        head3d_reference(feat, params, frame_num=FRAMES,
                         feat_h=FEAT_H, feat_w=FEAT_W, in_ch=IN_CH))

    assert out.shape == (B, 1), out.shape
    # bf16 matmul inputs (f32 accumulation) vs. an all-f32 reference.
    np.testing.assert_allclose(np.asarray(out), np.asarray(ref), rtol=2e-2, atol=5e-2)
    print("KERNEL_OK")
</pallas_src>

<mosaic_0001>
module attributes {stable_mosaic.version = 11 : i64} {
  func.func @head3d_kernel(%arg0: memref<20x2048xbf16, #tpu.memory_space<vmem>>, %arg1: memref<2048x384xbf16, #tpu.memory_space<vmem>>, %arg2: memref<24x128xf32, #tpu.memory_space<vmem>>, %arg3: memref<2x1xf32, #tpu.memory_space<vmem>>) attributes {dimension_semantics = [], scalar_prefetch = 0 : i64, scratch_operands = 0 : i64, tpu.core_type = #tpu.core_type<tc>} {
    %c0 = arith.constant 0 : index
    %c0_0 = arith.constant 0 : index
    %0 = vector.load %arg0[%c0, %c0_0] : memref<20x2048xbf16, #tpu.memory_space<vmem>>, vector<20x2048xbf16>
    %c0_1 = arith.constant 0 : index
    %c0_2 = arith.constant 0 : index
    %1 = vector.load %arg1[%c0_1, %c0_2] : memref<2048x384xbf16, #tpu.memory_space<vmem>>, vector<2048x384xbf16>
    %cst = arith.constant dense<0.000000e+00> : vector<20x384xf32>
    %2 = tpu.matmul %0, %1, %cst {dimension_numbers = #tpu.dot_dimension_numbers<[1], [0], [0], [1], [0, 0, 1, 1], [], []>} : vector<20x2048xbf16>, vector<2048x384xbf16>, vector<20x384xf32> -> vector<20x384xf32>
    %3 = vector.extract_strided_slice %2 {offsets = [0, 0], sizes = [20, 128], strides = [1, 1]} : vector<20x384xf32> to vector<20x128xf32>
    %4 = vector.extract_strided_slice %2 {offsets = [0, 128], sizes = [20, 128], strides = [1, 1]} : vector<20x384xf32> to vector<20x128xf32>
    %5 = vector.extract_strided_slice %2 {offsets = [0, 256], sizes = [20, 128], strides = [1, 1]} : vector<20x384xf32> to vector<20x128xf32>
    %6 = tpu.iota {dimensions = array<i32: 0>} : vector<20x20xi32>
    %7 = tpu.iota {dimensions = array<i32: 1>} : vector<20x20xi32>
    %8 = arith.sitofp %6 : vector<20x20xi32> to vector<20x20xf32>
    %9 = arith.sitofp %7 : vector<20x20xi32> to vector<20x20xf32>
    %cst_3 = arith.constant 5.000000e-01 : f32
    %10 = vector.broadcast %cst_3 : f32 to vector<20x20xf32>
    %11 = arith.addf %8, %10 : vector<20x20xf32>
    %cst_4 = arith.constant 1.000000e-01 : f32
    %12 = vector.broadcast %cst_4 : f32 to vector<20x20xf32>
    %13 = arith.mulf %11, %12 : vector<20x20xf32>
    %14 = math.floor %13 : vector<20x20xf32>
    %cst_5 = arith.constant 5.000000e-01 : f32
    %15 = vector.broadcast %cst_5 : f32 to vector<20x20xf32>
    %16 = arith.addf %9, %15 : vector<20x20xf32>
    %cst_6 = arith.constant 1.000000e-01 : f32
    %17 = vector.broadcast %cst_6 : f32 to vector<20x20xf32>
    %18 = arith.mulf %16, %17 : vector<20x20xf32>
    %19 = math.floor %18 : vector<20x20xf32>
    %20 = arith.cmpf oeq, %14, %19 : vector<20x20xf32>
    %c1_i32 = arith.constant 1 : i32
    %21 = vector.broadcast %c1_i32 : i32 to vector<20x20xi32>
    %22 = arith.subi %6, %21 : vector<20x20xi32>
    %23 = arith.cmpi eq, %7, %22 : vector<20x20xi32>
    %24 = arith.andi %23, %20 : vector<20x20xi1>
    %cst_7 = arith.constant 1.000000e+00 : f32
    %cst_8 = arith.constant 0.000000e+00 : f32
    %25 = vector.broadcast %cst_7 : f32 to vector<20x20xf32>
    %26 = vector.broadcast %cst_8 : f32 to vector<20x20xf32>
    %27 = arith.select %24, %25, %26 : vector<20x20xi1>, vector<20x20xf32>
    %c1_i32_9 = arith.constant 1 : i32
    %28 = vector.broadcast %c1_i32_9 : i32 to vector<20x20xi32>
    %29 = arith.addi %6, %28 : vector<20x20xi32>
    %30 = arith.cmpi eq, %7, %29 : vector<20x20xi32>
    %31 = arith.andi %30, %20 : vector<20x20xi1>
    %cst_10 = arith.constant 1.000000e+00 : f32
    %cst_11 = arith.constant 0.000000e+00 : f32
    %32 = vector.broadcast %cst_10 : f32 to vector<20x20xf32>
    %33 = vector.broadcast %cst_11 : f32 to vector<20x20xf32>
    %34 = arith.select %31, %32, %33 : vector<20x20xi1>, vector<20x20xf32>
    %cst_12 = arith.constant dense<0.000000e+00> : vector<20x128xf32>
    %35 = tpu.matmul %27, %3, %cst_12 {dimension_numbers = #tpu.dot_dimension_numbers<[1], [0], [0], [1], [0, 0, 1, 1], [], []>} : vector<20x20xf32>, vector<20x128xf32>, vector<20x128xf32> -> vector<20x128xf32>
    %36 = arith.addf %35, %4 : vector<20x128xf32>
    %cst_13 = arith.constant dense<0.000000e+00> : vector<20x128xf32>
    %37 = tpu.matmul %34, %5, %cst_13 {dimension_numbers = #tpu.dot_dimension_numbers<[1], [0], [0], [1], [0, 0, 1, 1], [], []>} : vector<20x20xf32>, vector<20x128xf32>, vector<20x128xf32> -> vector<20x128xf32>
    %38 = arith.addf %36, %37 : vector<20x128xf32>
    %c0_14 = arith.constant 0 : index
    %c0_15 = arith.constant 0 : index
    %39 = vector.load %arg2[%c0_14, %c0_15] : memref<24x128xf32, #tpu.memory_space<vmem>>, vector<1x128xf32>
    %40 = vector.broadcast %39 : vector<1x128xf32> to vector<20x128xf32>
    %41 = arith.addf %38, %40 : vector<20x128xf32>
    %cst_16 = arith.constant dense<0.000000e+00> : vector<128xf32>
    %42 = vector.multi_reduction <add>, %41, %cst_16 [0] : vector<20x128xf32> to vector<128xf32>
    %43 = vector.shape_cast %42 : vector<128xf32> to vector<1x128xf32>
    %cst_17 = arith.constant 5.000000e-02 : f32
    %44 = vector.broadcast %cst_17 : f32 to vector<1x128xf32>
    %45 = arith.mulf %43, %44 : vector<1x128xf32>
    %46 = vector.broadcast %45 : vector<1x128xf32> to vector<20x128xf32>
    %47 = arith.subf %41, %46 : vector<20x128xf32>
    %48 = arith.mulf %47, %47 : vector<20x128xf32>
    %cst_18 = arith.constant dense<0.000000e+00> : vector<128xf32>
    %49 = vector.multi_reduction <add>, %48, %cst_18 [0] : vector<20x128xf32> to vector<128xf32>
    %50 = vector.shape_cast %49 : vector<128xf32> to vector<1x128xf32>
    %cst_19 = arith.constant 5.000000e-02 : f32
    %51 = vector.broadcast %cst_19 : f32 to vector<1x128xf32>
    %52 = arith.mulf %50, %51 : vector<1x128xf32>
    %c1 = arith.constant 1 : index
    %c0_20 = arith.constant 0 : index
    %53 = vector.load %arg2[%c1, %c0_20] : memref<24x128xf32, #tpu.memory_space<vmem>>, vector<1x128xf32>
    %cst_21 = arith.constant 9.99999974E-6 : f32
    %54 = vector.broadcast %cst_21 : f32 to vector<1x128xf32>
    %55 = arith.addf %52, %54 : vector<1x128xf32>
    %56 = math.rsqrt %55 : vector<1x128xf32>
    %57 = vector.broadcast %56 : vector<1x128xf32> to vector<20x128xf32>
    %58 = arith.mulf %47, %57 : vector<20x128xf32>
    %59 = vector.broadcast %53 : vector<1x128xf32> to vector<20x128xf32>
    %60 = arith.mulf %59, %58 : vector<20x128xf32>
    %c2 = arith.constant 2 : index
    %c0_22 = arith.constant 0 : index
    %61 = vector.load %arg2[%c2, %c0_22] : memref<24x128xf32, #tpu.memory_space<vmem>>, vector<1x128xf32>
    %62 = vector.broadcast %61 : vector<1x128xf32> to vector<20x128xf32>
    %63 = arith.addf %60, %62 : vector<20x128xf32>
    %cst_23 = arith.constant 0.000000e+00 : f32
    %64 = vector.broadcast %cst_23 : f32 to vector<20x128xf32>
    %65 = arith.maximumf %63, %64 : vector<20x128xf32>
    %cst_24 = arith.constant dense<0.000000e+00> : vector<20x128xf32>
    %66 = tpu.matmul %27, %65, %cst_24 {dimension_numbers = #tpu.dot_dimension_numbers<[1], [0], [0], [1], [0, 0, 1, 1], [], []>} : vector<20x20xf32>, vector<20x128xf32>, vector<20x128xf32> -> vector<20x128xf32>
    %cst_25 = arith.constant dense<0.000000e+00> : vector<20x128xf32>
    %67 = tpu.matmul %34, %65, %cst_25 {dimension_numbers = #tpu.dot_dimension_numbers<[1], [0], [0], [1], [0, 0, 1, 1], [], []>} : vector<20x20xf32>, vector<20x128xf32>, vector<20x128xf32> -> vector<20x128xf32>
    %68 = arith.maximumf %66, %65 : vector<20x128xf32>
    %69 = arith.maximumf %68, %67 : vector<20x128xf32>
    %c8 = arith.constant 8 : index
    %c0_26 = arith.constant 0 : index
    %70 = vector.load %arg2[%c8, %c0_26] : memref<24x128xf32, #tpu.memory_space<vmem>>, vector<10x128xf32>
    %71 = vector.extract_strided_slice %69 {offsets = [0, 0], sizes = [10, 128], strides = [1, 1]} : vector<20x128xf32> to vector<10x128xf32>
    %72 = arith.mulf %71, %70 : vector<10x128xf32>
    %cst_27 = arith.constant dense<0.000000e+00> : vector<10xf32>
    %73 = vector.multi_reduction <add>, %72, %cst_27 [1] : vector<10x128xf32> to vector<10xf32>
    %74 = vector.shape_cast %73 : vector<10xf32> to vector<10x1xf32>
    %cst_28 = arith.constant dense<0.000000e+00> : vector<1xf32>
    %75 = vector.multi_reduction <add>, %74, %cst_28 [0] : vector<10x1xf32> to vector<1xf32>
    %76 = vector.shape_cast %75 : vector<1xf32> to vector<1x1xf32>
    %77 = vector.extract_strided_slice %69 {offsets = [10, 0], sizes = [10, 128], strides = [1, 1]} : vector<20x128xf32> to vector<10x128xf32>
    %78 = arith.mulf %77, %70 : vector<10x128xf32>
    %cst_29 = arith.constant dense<0.000000e+00> : vector<10xf32>
    %79 = vector.multi_reduction <add>, %78, %cst_29 [1] : vector<10x128xf32> to vector<10xf32>
    %80 = vector.shape_cast %79 : vector<10xf32> to vector<10x1xf32>
    %cst_30 = arith.constant dense<0.000000e+00> : vector<1xf32>
    %81 = vector.multi_reduction <add>, %80, %cst_30 [0] : vector<10x1xf32> to vector<1xf32>
    %82 = vector.shape_cast %81 : vector<1xf32> to vector<1x1xf32>
    %83 = tpu.concatenate %76, %82 in 0 : vector<1x1xf32>, vector<1x1xf32> -> vector<2x1xf32>
    %c3 = arith.constant 3 : index
    %c0_31 = arith.constant 0 : index
    %84 = vector.load %arg2[%c3, %c0_31] : memref<24x128xf32, #tpu.memory_space<vmem>>, vector<1x1xf32>
    %85 = vector.broadcast %84 : vector<1x1xf32> to vector<2x1xf32>
    %86 = arith.addf %83, %85 : vector<2x1xf32>
    %c0_32 = arith.constant 0 : index
    %c0_33 = arith.constant 0 : index
    %87 = vector.load %arg3[%c0_32, %c0_33] : memref<2x1xf32, #tpu.memory_space<vmem>>, vector<2x1xf32>
    tpu.vector_store %arg3[%c0_32, %c0_33], %86 {strides = array<i32>} : memref<2x1xf32, #tpu.memory_space<vmem>>, vector<2x1xf32>,
    return
  }
}

</mosaic_0001>

<llo_original>
// kernel: resnet3dnet_head_forward.1
$region0: #{resnet3dnet_head_forward.1}
  #allocation0 [shape = 'u32[]', space=smem, size = 0x4, offset = 0x4, fixed_abs, tag = 'smem constant byte address 0x4 - core index']
  #allocation1 [shape = 'u32[72,128]{1,0:T(1,128)}', space=vmem, size = 0x9000, scoped, tag = 'internal scratch']
  %s0 = inlined_call_operand.vmem [shape: bf16[20,2048], index: 0, kind: input, shape index: {}]
  %s1 = inlined_call_operand.vmem [shape: bf16[2048,384], index: 1, kind: input, shape index: {}]
  %s2 = inlined_call_operand.vmem [shape: f32[24,128], index: 2, kind: input, shape index: {}]
  %s3 = inlined_call_operand.vmem [shape: f32[2,1], index: 3, kind: output, shape index: {}]
  %s4 = sld [smem:[#allocation0]]
  $region22: #{resnet3dnet_head_forward.1} parent=0
    _
  %s6 = ssub.s32 1, %s4
  %s7 = scalar_select 0, %s6, %s4
  // Predicated region
  $region2: #{resnet3dnet_head_forward.1} parent=0 // pred_check
    _
  $region3: #{resnet3dnet_head_forward.1} parent=0 // pred_check_branch
    %9 = sbr.rel (0) target = $region5
  $region4: #{resnet3dnet_head_forward.1} parent=0 // pred_region
    _
  $region5: #{resnet3dnet_head_forward.1} parent=0 // pred_fallthru
    _
  // Predicated region
  $region6: #{resnet3dnet_head_forward.1} parent=0 // pred_check
    _
  $region7: #{resnet3dnet_head_forward.1} parent=0 // pred_check_branch
    %11 = sbr.rel (0) target = $region9
  $region8: #{resnet3dnet_head_forward.1} parent=0 // pred_region
    _
  $region9: #{resnet3dnet_head_forward.1} parent=0 // pred_fallthru
    _
  // Predicated region
  $region10: #{resnet3dnet_head_forward.1} parent=0 // pred_check
    _
  $region11: #{resnet3dnet_head_forward.1} parent=0 // pred_check_branch
    %13 = sbr.rel (0) target = $region13
  $region12: #{resnet3dnet_head_forward.1} parent=0 // pred_region
    _
  $region13: #{resnet3dnet_head_forward.1} parent=0 // pred_fallthru
    _
  %v14 = vld [vmem:[%s0] sm:$0xff]
  %v15 = vld [vmem:[%s0 + $0x8] sm:$0xff]
  %v16 = vld [vmem:[%s0 + $0x10] sm:$0xff]
  %v17 = vld [vmem:[%s0 + $0x18] sm:$0xff]
  %v18 = vld [vmem:[%s0 + $0x20] sm:$0xff]
  %v19 = vld [vmem:[%s0 + $0x28] sm:$0xff]
  %v20 = vld [vmem:[%s0 + $0x30] sm:$0xff]
  %v21 = vld [vmem:[%s0 + $0x38] sm:$0xff]
  %v22 = vld [vmem:[%s0 + $0x40] sm:$0xff]
  %v23 = vld [vmem:[%s0 + $0x48] sm:$0xff]
  %v24 = vld [vmem:[%s0 + $0x50] sm:$0xff]
  %v25 = vld [vmem:[%s0 + $0x58] sm:$0xff]
  %v26 = vld [vmem:[%s0 + $0x60] sm:$0xff]
  %v27 = vld [vmem:[%s0 + $0x68] sm:$0xff]
  %v28 = vld [vmem:[%s0 + $0x70] sm:$0xff]
  %v29 = vld [vmem:[%s0 + $0x78] sm:$0xff]
  %v30 = vld [vmem:[%s0 + $0x80] sm:$0x33]
  %v31 = vld [vmem:[%s0 + $0x88] sm:$0x33]
  %v32 = vld [vmem:[%s0 + $0x90] sm:$0x33]
  %v33 = vld [vmem:[%s0 + $0x98] sm:$0x33]
  %v34 = vld [vmem:[%s0 + $0xa0] sm:$0x33]
  %v35 = vld [vmem:[%s0 + $0xa8] sm:$0x33]
  %v36 = vld [vmem:[%s0 + $0xb0] sm:$0x33]
  %v37 = vld [vmem:[%s0 + $0xb8] sm:$0x33]
  %v38 = vld [vmem:[%s1] sm:$0xff]
  %v39 = vld [vmem:[%s1 + $0x8] sm:$0xf]
  %v40 = vld [vmem:[%s1 + $0xc] sm:$0xff]
  %v41 = vld [vmem:[%s1 + $0x14] sm:$0xf]
  %v42 = vld [vmem:[%s1 + $0x18] sm:$0xff]
  %v43 = vld [vmem:[%s1 + $0x20] sm:$0xf]
  %v44 = vld [vmem:[%s1 + $0x24] sm:$0xff]
  %v45 = vld [vmem:[%s1 + $0x2c] sm:$0xf]
  %v46 = vld [vmem:[%s1 + $0x30] sm:$0xff]
  %v47 = vld [vmem:[%s1 + $0x38] sm:$0xf]
  %v48 = vld [vmem:[%s1 + $0x3c] sm:$0xff]
  %v49 = vld [vmem:[%s1 + $0x44] sm:$0xf]
  %v50 = vld [vmem:[%s1 + $0x48] sm:$0xff]
  %v51 = vld [vmem:[%s1 + $0x50] sm:$0xf]
  %v52 = vld [vmem:[%s1 + $0x54] sm:$0xff]
  %v53 = vld [vmem:[%s1 + $0x5c] sm:$0xf]
  %v54 = vld [vmem:[%s1 + $0x60] sm:$0xff]
  %v55 = vld [vmem:[%s1 + $0x68] sm:$0xf]
  %v56 = vld [vmem:[%s1 + $0x6c] sm:$0xff]
  %v57 = vld [vmem:[%s1 + $0x74] sm:$0xf]
  %v58 = vld [vmem:[%s1 + $0x78] sm:$0xff]
  %v59 = vld [vmem:[%s1 + $0x80] sm:$0xf]
  %v60 = vld [vmem:[%s1 + $0x84] sm:$0xff]
  %v61 = vld [vmem:[%s1 + $0x8c] sm:$0xf]
  %v62 = vld [vmem:[%s1 + $0x90] sm:$0xff]
  %v63 = vld [vmem:[%s1 + $0x98] sm:$0xf]
  %v64 = vld [vmem:[%s1 + $0x9c] sm:$0xff]
  %v65 = vld [vmem:[%s1 + $0xa4] sm:$0xf]
  %v66 = vld [vmem:[%s1 + $0xa8] sm:$0xff]
  %v67 = vld [vmem:[%s1 + $0xb0] sm:$0xf]
  %v68 = vld [vmem:[%s1 + $0xb4] sm:$0xff]
  %v69 = vld [vmem:[%s1 + $0xbc] sm:$0xf]
  %v70 = vld [vmem:[%s1 + $0xc0] sm:$0xff]
  %v71 = vld [vmem:[%s1 + $0xc8] sm:$0xf]
  %v72 = vld [vmem:[%s1 + $0xcc] sm:$0xff]
  %v73 = vld [vmem:[%s1 + $0xd4] sm:$0xf]
  %v74 = vld [vmem:[%s1 + $0xd8] sm:$0xff]
  %v75 = vld [vmem:[%s1 + $0xe0] sm:$0xf]
  %v76 = vld [vmem:[%s1 + $0xe4] sm:$0xff]
  %v77 = vld [vmem:[%s1 + $0xec] sm:$0xf]
  %v78 = vld [vmem:[%s1 + $0xf0] sm:$0xff]
  %v79 = vld [vmem:[%s1 + $0xf8] sm:$0xf]
  %v80 = vld [vmem:[%s1 + $0xfc] sm:$0xff]
  %v81 = vld [vmem:[%s1 + $0x104] sm:$0xf]
  %v82 = vld [vmem:[%s1 + $0x108] sm:$0xff]
  %v83 = vld [vmem:[%s1 + $0x110] sm:$0xf]
  %v84 = vld [vmem:[%s1 + $0x114] sm:$0xff]
  %v85 = vld [vmem:[%s1 + $0x11c] sm:$0xf]
  %v86 = vld [vmem:[%s1 + $0x120] sm:$0xff]
  %v87 = vld [vmem:[%s1 + $0x128] sm:$0xf]
  %v88 = vld [vmem:[%s1 + $0x12c] sm:$0xff]
  %v89 = vld [vmem:[%s1 + $0x134] sm:$0xf]
  %v90 = vld [vmem:[%s1 + $0x138] sm:$0xff]
  %v91 = vld [vmem:[%s1 + $0x140] sm:$0xf]
  %v92 = vld [vmem:[%s1 + $0x144] sm:$0xff]
  %v93 = vld [vmem:[%s1 + $0x14c] sm:$0xf]
  %v94 = vld [vmem:[%s1 + $0x150] sm:$0xff]
  %v95 = vld [vmem:[%s1 + $0x158] sm:$0xf]
  %v96 = vld [vmem:[%s1 + $0x15c] sm:$0xff]
  %v97 = vld [vmem:[%s1 + $0x164] sm:$0xf]
  %v98 = vld [vmem:[%s1 + $0x168] sm:$0xff]
  %v99 = vld [vmem:[%s1 + $0x170] sm:$0xf]
  %v100 = vld [vmem:[%s1 + $0x174] sm:$0xff]
  %v101 = vld [vmem:[%s1 + $0x17c] sm:$0xf]
  %v102 = vld [vmem:[%s1 + $0x180] sm:$0xff]
  %v103 = vld [vmem:[%s1 + $0x188] sm:$0xf]
  %v104 = vld [vmem:[%s1 + $0x18c] sm:$0xff]
  %v105 = vld [vmem:[%s1 + $0x194] sm:$0xf]
  %v106 = vld [vmem:[%s1 + $0x198] sm:$0xff]
  %v107 = vld [vmem:[%s1 + $0x1a0] sm:$0xf]
  %v108 = vld [vmem:[%s1 + $0x1a4] sm:$0xff]
  %v109 = vld [vmem:[%s1 + $0x1ac] sm:$0xf]
  %v110 = vld [vmem:[%s1 + $0x1b0] sm:$0xff]
  %v111 = vld [vmem:[%s1 + $0x1b8] sm:$0xf]
  %v112 = vld [vmem:[%s1 + $0x1bc] sm:$0xff]
  %v113 = vld [vmem:[%s1 + $0x1c4] sm:$0xf]
  %v114 = vld [vmem:[%s1 + $0x1c8] sm:$0xff]
  %v115 = vld [vmem:[%s1 + $0x1d0] sm:$0xf]
  %v116 = vld [vmem:[%s1 + $0x1d4] sm:$0xff]
  %v117 = vld [vmem:[%s1 + $0x1dc] sm:$0xf]
  %v118 = vld [vmem:[%s1 + $0x1e0] sm:$0xff]
  %v119 = vld [vmem:[%s1 + $0x1e8] sm:$0xf]
  %v120 = vld [vmem:[%s1 + $0x1ec] sm:$0xff]
  %v121 = vld [vmem:[%s1 + $0x1f4] sm:$0xf]
  %v122 = vld [vmem:[%s1 + $0x1f8] sm:$0xff]
  %v123 = vld [vmem:[%s1 + $0x200] sm:$0xf]
  %v124 = vld [vmem:[%s1 + $0x204] sm:$0xff]
  %v125 = vld [vmem:[%s1 + $0x20c] sm:$0xf]
  %v126 = vld [vmem:[%s1 + $0x210] sm:$0xff]
  %v127 = vld [vmem:[%s1 + $0x218] sm:$0xf]
  %v128 = vld [vmem:[%s1 + $0x21c] sm:$0xff]
  %v129 = vld [vmem:[%s1 + $0x224] sm:$0xf]
  %v130 = vld [vmem:[%s1 + $0x228] sm:$0xff]
  %v131 = vld [vmem:[%s1 + $0x230] sm:$0xf]
  %v132 = vld [vmem:[%s1 + $0x234] sm:$0xff]
  %v133 = vld [vmem:[%s1 + $0x23c] sm:$0xf]
  %v134 = vld [vmem:[%s1 + $0x240] sm:$0xff]
  %v135 = vld [vmem:[%s1 + $0x248] sm:$0xf]
  %v136 = vld [vmem:[%s1 + $0x24c] sm:$0xff]
  %v137 = vld [vmem:[%s1 + $0x254] sm:$0xf]
  %v138 = vld [vmem:[%s1 + $0x258] sm:$0xff]
  %v139 = vld [vmem:[%s1 + $0x260] sm:$0xf]
  %v140 = vld [vmem:[%s1 + $0x264] sm:$0xff]
  %v141 = vld [vmem:[%s1 + $0x26c] sm:$0xf]
  %v142 = vld [vmem:[%s1 + $0x270] sm:$0xff]
  %v143 = vld [vmem:[%s1 + $0x278] sm:$0xf]
  %v144 = vld [vmem:[%s1 + $0x27c] sm:$0xff]
  %v145 = vld [vmem:[%s1 + $0x284] sm:$0xf]
  %v146 = vld [vmem:[%s1 + $0x288] sm:$0xff]
  %v147 = vld [vmem:[%s1 + $0x290] sm:$0xf]
  %v148 = vld [vmem:[%s1 + $0x294] sm:$0xff]
  %v149 = vld [vmem:[%s1 + $0x29c] sm:$0xf]
  %v150 = vld [vmem:[%s1 + $0x2a0] sm:$0xff]
  %v151 = vld [vmem:[%s1 + $0x2a8] sm:$0xf]
  %v152 = vld [vmem:[%s1 + $0x2ac] sm:$0xff]
  %v153 = vld [vmem:[%s1 + $0x2b4] sm:$0xf]
  %v154 = vld [vmem:[%s1 + $0x2b8] sm:$0xff]
  %v155 = vld [vmem:[%s1 + $0x2c0] sm:$0xf]
  %v156 = vld [vmem:[%s1 + $0x2c4] sm:$0xff]
  %v157 = vld [vmem:[%s1 + $0x2cc] sm:$0xf]
  %v158 = vld [vmem:[%s1 + $0x2d0] sm:$0xff]
  %v159 = vld [vmem:[%s1 + $0x2d8] sm:$0xf]
  %v160 = vld [vmem:[%s1 + $0x2dc] sm:$0xff]
  %v161 = vld [vmem:[%s1 + $0x2e4] sm:$0xf]
  %v162 = vld [vmem:[%s1 + $0x2e8] sm:$0xff]
  %v163 = vld [vmem:[%s1 + $0x2f0] sm:$0xf]
  %v164 = vld [vmem:[%s1 + $0x2f4] sm:$0xff]
  %v165 = vld [vmem:[%s1 + $0x2fc] sm:$0xf]
  %v166 = vld [vmem:[%s1 + $0x300] sm:$0xff]
  %v167 = vld [vmem:[%s1 + $0x308] sm:$0xf]
  %v168 = vld [vmem:[%s1 + $0x30c] sm:$0xff]
  %v169 = vld [vmem:[%s1 + $0x314] sm:$0xf]
  %v170 = vld [vmem:[%s1 + $0x318] sm:$0xff]
  %v171 = vld [vmem:[%s1 + $0x320] sm:$0xf]
  %v172 = vld [vmem:[%s1 + $0x324] sm:$0xff]
  %v173 = vld [vmem:[%s1 + $0x32c] sm:$0xf]
  %v174 = vld [vmem:[%s1 + $0x330] sm:$0xff]
  %v175 = vld [vmem:[%s1 + $0x338] sm:$0xf]
  %v176 = vld [vmem:[%s1 + $0x33c] sm:$0xff]
  %v177 = vld [vmem:[%s1 + $0x344] sm:$0xf]
  %v178 = vld [vmem:[%s1 + $0x348] sm:$0xff]
  %v179 = vld [vmem:[%s1 + $0x350] sm:$0xf]
  %v180 = vld [vmem:[%s1 + $0x354] sm:$0xff]
  %v181 = vld [vmem:[%s1 + $0x35c] sm:$0xf]
  %v182 = vld [vmem:[%s1 + $0x360] sm:$0xff]
  %v183 = vld [vmem:[%s1 + $0x368] sm:$0xf]
  %v184 = vld [vmem:[%s1 + $0x36c] sm:$0xff]
  %v185 = vld [vmem:[%s1 + $0x374] sm:$0xf]
  %v186 = vld [vmem:[%s1 + $0x378] sm:$0xff]
  %v187 = vld [vmem:[%s1 + $0x380] sm:$0xf]
  %v188 = vld [vmem:[%s1 + $0x384] sm:$0xff]
  %v189 = vld [vmem:[%s1 + $0x38c] sm:$0xf]
  %v190 = vld [vmem:[%s1 + $0x390] sm:$0xff]
  %v191 = vld [vmem:[%s1 + $0x398] sm:$0xf]
  %v192 = vld [vmem:[%s1 + $0x39c] sm:$0xff]
  %v193 = vld [vmem:[%s1 + $0x3a4] sm:$0xf]
  %v194 = vld [vmem:[%s1 + $0x3a8] sm:$0xff]
  %v195 = vld [vmem:[%s1 + $0x3b0] sm:$0xf]
  %v196 = vld [vmem:[%s1 + $0x3b4] sm:$0xff]
  %v197 = vld [vmem:[%s1 + $0x3bc] sm:$0xf]
  %v198 = vld [vmem:[%s1 + $0x3c0] sm:$0xff]
  %v199 = vld [vmem:[%s1 + $0x3c8] sm:$0xf]
  %v200 = vld [vmem:[%s1 + $0x3cc] sm:$0xff]
  %v201 = vld [vmem:[%s1 + $0x3d4] sm:$0xf]
  %v202 = vld [vmem:[%s1 + $0x3d8] sm:$0xff]
  %v203 = vld [vmem:[%s1 + $0x3e0] sm:$0xf]
  %v204 = vld [vmem:[%s1 + $0x3e4] sm:$0xff]
  %v205 = vld [vmem:[%s1 + $0x3ec] sm:$0xf]
  %v206 = vld [vmem:[%s1 + $0x3f0] sm:$0xff]
  %v207 = vld [vmem:[%s1 + $0x3f8] sm:$0xf]
  %v208 = vld [vmem:[%s1 + $0x3fc] sm:$0xff]
  %v209 = vld [vmem:[%s1 + $0x404] sm:$0xf]
  %v210 = vld [vmem:[%s1 + $0x408] sm:$0xff]
  %v211 = vld [vmem:[%s1 + $0x410] sm:$0xf]
  %v212 = vld [vmem:[%s1 + $0x414] sm:$0xff]
  %v213 = vld [vmem:[%s1 + $0x41c] sm:$0xf]
  %v214 = vld [vmem:[%s1 + $0x420] sm:$0xff]
  %v215 = vld [vmem:[%s1 + $0x428] sm:$0xf]
  %v216 = vld [vmem:[%s1 + $0x42c] sm:$0xff]
  %v217 = vld [vmem:[%s1 + $0x434] sm:$0xf]
  %v218 = vld [vmem:[%s1 + $0x438] sm:$0xff]
  %v219 = vld [vmem:[%s1 + $0x440] sm:$0xf]
  %v220 = vld [vmem:[%s1 + $0x444] sm:$0xff]
  %v221 = vld [vmem:[%s1 + $0x44c] sm:$0xf]
  %v222 = vld [vmem:[%s1 + $0x450] sm:$0xff]
  %v223 = vld [vmem:[%s1 + $0x458] sm:$0xf]
  %v224 = vld [vmem:[%s1 + $0x45c] sm:$0xff]
  %v225 = vld [vmem:[%s1 + $0x464] sm:$0xf]
  %v226 = vld [vmem:[%s1 + $0x468] sm:$0xff]
  %v227 = vld [vmem:[%s1 + $0x470] sm:$0xf]
  %v228 = vld [vmem:[%s1 + $0x474] sm:$0xff]
  %v229 = vld [vmem:[%s1 + $0x47c] sm:$0xf]
  %v230 = vld [vmem:[%s1 + $0x480] sm:$0xff]
  %v231 = vld [vmem:[%s1 + $0x488] sm:$0xf]
  %v232 = vld [vmem:[%s1 + $0x48c] sm:$0xff]
  %v233 = vld [vmem:[%s1 + $0x494] sm:$0xf]
  %v234 = vld [vmem:[%s1 + $0x498] sm:$0xff]
  %v235 = vld [vmem:[%s1 + $0x4a0] sm:$0xf]
  %v236 = vld [vmem:[%s1 + $0x4a4] sm:$0xff]
  %v237 = vld [vmem:[%s1 + $0x4ac] sm:$0xf]
  %v238 = vld [vmem:[%s1 + $0x4b0] sm:$0xff]
  %v239 = vld [vmem:[%s1 + $0x4b8] sm:$0xf]
  %v240 = vld [vmem:[%s1 + $0x4bc] sm:$0xff]
  %v241 = vld [vmem:[%s1 + $0x4c4] sm:$0xf]
  %v242 = vld [vmem:[%s1 + $0x4c8] sm:$0xff]
  %v243 = vld [vmem:[%s1 + $0x4d0] sm:$0xf]
  %v244 = vld [vmem:[%s1 + $0x4d4] sm:$0xff]
  %v245 = vld [vmem:[%s1 + $0x4dc] sm:$0xf]
  %v246 = vld [vmem:[%s1 + $0x4e0] sm:$0xff]
  %v247 = vld [vmem:[%s1 + $0x4e8] sm:$0xf]
  %v248 = vld [vmem:[%s1 + $0x4ec] sm:$0xff]
  %v249 = vld [vmem:[%s1 + $0x4f4] sm:$0xf]
  %v250 = vld [vmem:[%s1 + $0x4f8] sm:$0xff]
  %v251 = vld [vmem:[%s1 + $0x500] sm:$0xf]
  %v252 = vld [vmem:[%s1 + $0x504] sm:$0xff]
  %v253 = vld [vmem:[%s1 + $0x50c] sm:$0xf]
  %v254 = vld [vmem:[%s1 + $0x510] sm:$0xff]
  %v255 = vld [vmem:[%s1 + $0x518] sm:$0xf]
  %v256 = vld [vmem:[%s1 + $0x51c] sm:$0xff]
  %v257 = vld [vmem:[%s1 + $0x524] sm:$0xf]
  %v258 = vld [vmem:[%s1 + $0x528] sm:$0xff]
  %v259 = vld [vmem:[%s1 + $0x530] sm:$0xf]
  %v260 = vld [vmem:[%s1 + $0x534] sm:$0xff]
  %v261 = vld [vmem:[%s1 + $0x53c] sm:$0xf]
  %v262 = vld [vmem:[%s1 + $0x540] sm:$0xff]
  %v263 = vld [vmem:[%s1 + $0x548] sm:$0xf]
  %v264 = vld [vmem:[%s1 + $0x54c] sm:$0xff]
  %v265 = vld [vmem:[%s1 + $0x554] sm:$0xf]
  %v266 = vld [vmem:[%s1 + $0x558] sm:$0xff]
  %v267 = vld [vmem:[%s1 + $0x560] sm:$0xf]
  %v268 = vld [vmem:[%s1 + $0x564] sm:$0xff]
  %v269 = vld [vmem:[%s1 + $0x56c] sm:$0xf]
  %v270 = vld [vmem:[%s1 + $0x570] sm:$0xff]
  %v271 = vld [vmem:[%s1 + $0x578] sm:$0xf]
  %v272 = vld [vmem:[%s1 + $0x57c] sm:$0xff]
  %v273 = vld [vmem:[%s1 + $0x584] sm:$0xf]
  %v274 = vld [vmem:[%s1 + $0x588] sm:$0xff]
  %v275 = vld [vmem:[%s1 + $0x590] sm:$0xf]
  %v276 = vld [vmem:[%s1 + $0x594] sm:$0xff]
  %v277 = vld [vmem:[%s1 + $0x59c] sm:$0xf]
  %v278 = vld [vmem:[%s1 + $0x5a0] sm:$0xff]
  %v279 = vld [vmem:[%s1 + $0x5a8] sm:$0xf]
  %v280 = vld [vmem:[%s1 + $0x5ac] sm:$0xff]
  %v281 = vld [vmem:[%s1 + $0x5b4] sm:$0xf]
  %v282 = vld [vmem:[%s1 + $0x5b8] sm:$0xff]
  %v283 = vld [vmem:[%s1 + $0x5c0] sm:$0xf]
  %v284 = vld [vmem:[%s1 + $0x5c4] sm:$0xff]
  %v285 = vld [vmem:[%s1 + $0x5cc] sm:$0xf]
  %v286 = vld [vmem:[%s1 + $0x5d0] sm:$0xff]
  %v287 = vld [vmem:[%s1 + $0x5d8] sm:$0xf]
  %v288 = vld [vmem:[%s1 + $0x5dc] sm:$0xff]
  %v289 = vld [vmem:[%s1 + $0x5e4] sm:$0xf]
  %v290 = vld [vmem:[%s1 + $0x5e8] sm:$0xff]
  %v291 = vld [vmem:[%s1 + $0x5f0] sm:$0xf]
  %v292 = vld [vmem:[%s1 + $0x5f4] sm:$0xff]
  %v293 = vld [vmem:[%s1 + $0x5fc] sm:$0xf]
  %v294 = vld [vmem:[%s1 + $0x600] sm:$0xff]
  %v295 = vld [vmem:[%s1 + $0x608] sm:$0xf]
  %v296 = vld [vmem:[%s1 + $0x60c] sm:$0xff]
  %v297 = vld [vmem:[%s1 + $0x614] sm:$0xf]
  %v298 = vld [vmem:[%s1 + $0x618] sm:$0xff]
  %v299 = vld [vmem:[%s1 + $0x620] sm:$0xf]
  %v300 = vld [vmem:[%s1 + $0x624] sm:$0xff]
  %v301 = vld [vmem:[%s1 + $0x62c] sm:$0xf]
  %v302 = vld [vmem:[%s1 + $0x630] sm:$0xff]
  %v303 = vld [vmem:[%s1 + $0x638] sm:$0xf]
  %v304 = vld [vmem:[%s1 + $0x63c] sm:$0xff]
  %v305 = vld [vmem:[%s1 + $0x644] sm:$0xf]
  %v306 = vld [vmem:[%s1 + $0x648] sm:$0xff]
  %v307 = vld [vmem:[%s1 + $0x650] sm:$0xf]
  %v308 = vld [vmem:[%s1 + $0x654] sm:$0xff]
  %v309 = vld [vmem:[%s1 + $0x65c] sm:$0xf]
  %v310 = vld [vmem:[%s1 + $0x660] sm:$0xff]
  %v311 = vld [vmem:[%s1 + $0x668] sm:$0xf]
  %v312 = vld [vmem:[%s1 + $0x66c] sm:$0xff]
  %v313 = vld [vmem:[%s1 + $0x674] sm:$0xf]
  %v314 = vld [vmem:[%s1 + $0x678] sm:$0xff]
  %v315 = vld [vmem:[%s1 + $0x680] sm:$0xf]
  %v316 = vld [vmem:[%s1 + $0x684] sm:$0xff]
  %v317 = vld [vmem:[%s1 + $0x68c] sm:$0xf]
  %v318 = vld [vmem:[%s1 + $0x690] sm:$0xff]
  %v319 = vld [vmem:[%s1 + $0x698] sm:$0xf]
  %v320 = vld [vmem:[%s1 + $0x69c] sm:$0xff]
  %v321 = vld [vmem:[%s1 + $0x6a4] sm:$0xf]
  %v322 = vld [vmem:[%s1 + $0x6a8] sm:$0xff]
  %v323 = vld [vmem:[%s1 + $0x6b0] sm:$0xf]
  %v324 = vld [vmem:[%s1 + $0x6b4] sm:$0xff]
  %v325 = vld [vmem:[%s1 + $0x6bc] sm:$0xf]
  %v326 = vld [vmem:[%s1 + $0x6c0] sm:$0xff]
  %v327 = vld [vmem:[%s1 + $0x6c8] sm:$0xf]
  %v328 = vld [vmem:[%s1 + $0x6cc] sm:$0xff]
  %v329 = vld [vmem:[%s1 + $0x6d4] sm:$0xf]
  %v330 = vld [vmem:[%s1 + $0x6d8] sm:$0xff]
  %v331 = vld [vmem:[%s1 + $0x6e0] sm:$0xf]
  %v332 = vld [vmem:[%s1 + $0x6e4] sm:$0xff]
  %v333 = vld [vmem:[%s1 + $0x6ec] sm:$0xf]
  %v334 = vld [vmem:[%s1 + $0x6f0] sm:$0xff]
  %v335 = vld [vmem:[%s1 + $0x6f8] sm:$0xf]
  %v336 = vld [vmem:[%s1 + $0x6fc] sm:$0xff]
  %v337 = vld [vmem:[%s1 + $0x704] sm:$0xf]
  %v338 = vld [vmem:[%s1 + $0x708] sm:$0xff]
  %v339 = vld [vmem:[%s1 + $0x710] sm:$0xf]
  %v340 = vld [vmem:[%s1 + $0x714] sm:$0xff]
  %v341 = vld [vmem:[%s1 + $0x71c] sm:$0xf]
  %v342 = vld [vmem:[%s1 + $0x720] sm:$0xff]
  %v343 = vld [vmem:[%s1 + $0x728] sm:$0xf]
  %v344 = vld [vmem:[%s1 + $0x72c] sm:$0xff]
  %v345 = vld [vmem:[%s1 + $0x734] sm:$0xf]
  %v346 = vld [vmem:[%s1 + $0x738] sm:$0xff]
  %v347 = vld [vmem:[%s1 + $0x740] sm:$0xf]
  %v348 = vld [vmem:[%s1 + $0x744] sm:$0xff]
  %v349 = vld [vmem:[%s1 + $0x74c] sm:$0xf]
  %v350 = vld [vmem:[%s1 + $0x750] sm:$0xff]
  %v351 = vld [vmem:[%s1 + $0x758] sm:$0xf]
  %v352 = vld [vmem:[%s1 + $0x75c] sm:$0xff]
  %v353 = vld [vmem:[%s1 + $0x764] sm:$0xf]
  %v354 = vld [vmem:[%s1 + $0x768] sm:$0xff]
  %v355 = vld [vmem:[%s1 + $0x770] sm:$0xf]
  %v356 = vld [vmem:[%s1 + $0x774] sm:$0xff]
  %v357 = vld [vmem:[%s1 + $0x77c] sm:$0xf]
  %v358 = vld [vmem:[%s1 + $0x780] sm:$0xff]
  %v359 = vld [vmem:[%s1 + $0x788] sm:$0xf]
  %v360 = vld [vmem:[%s1 + $0x78c] sm:$0xff]
  %v361 = vld [vmem:[%s1 + $0x794] sm:$0xf]
  %v362 = vld [vmem:[%s1 + $0x798] sm:$0xff]
  %v363 = vld [vmem:[%s1 + $0x7a0] sm:$0xf]
  %v364 = vld [vmem:[%s1 + $0x7a4] sm:$0xff]
  %v365 = vld [vmem:[%s1 + $0x7ac] sm:$0xf]
  %v366 = vld [vmem:[%s1 + $0x7b0] sm:$0xff]
  %v367 = vld [vmem:[%s1 + $0x7b8] sm:$0xf]
  %v368 = vld [vmem:[%s1 + $0x7bc] sm:$0xff]
  %v369 = vld [vmem:[%s1 + $0x7c4] sm:$0xf]
  %v370 = vld [vmem:[%s1 + $0x7c8] sm:$0xff]
  %v371 = vld [vmem:[%s1 + $0x7d0] sm:$0xf]
  %v372 = vld [vmem:[%s1 + $0x7d4] sm:$0xff]
  %v373 = vld [vmem:[%s1 + $0x7dc] sm:$0xf]
  %v374 = vld [vmem:[%s1 + $0x7e0] sm:$0xff]
  %v375 = vld [vmem:[%s1 + $0x7e8] sm:$0xf]
  %v376 = vld [vmem:[%s1 + $0x7ec] sm:$0xff]
  %v377 = vld [vmem:[%s1 + $0x7f4] sm:$0xf]
  %v378 = vld [vmem:[%s1 + $0x7f8] sm:$0xff]
  %v379 = vld [vmem:[%s1 + $0x800] sm:$0xf]
  %v380 = vld [vmem:[%s1 + $0x804] sm:$0xff]
  %v381 = vld [vmem:[%s1 + $0x80c] sm:$0xf]
  %v382 = vld [vmem:[%s1 + $0x810] sm:$0xff]
  %v383 = vld [vmem:[%s1 + $0x818] sm:$0xf]
  %v384 = vld [vmem:[%s1 + $0x81c] sm:$0xff]
  %v385 = vld [vmem:[%s1 + $0x824] sm:$0xf]
  %v386 = vld [vmem:[%s1 + $0x828] sm:$0xff]
  %v387 = vld [vmem:[%s1 + $0x830] sm:$0xf]
  %v388 = vld [vmem:[%s1 + $0x834] sm:$0xff]
  %v389 = vld [vmem:[%s1 + $0x83c] sm:$0xf]
  %v390 = vld [vmem:[%s1 + $0x840] sm:$0xff]
  %v391 = vld [vmem:[%s1 + $0x848] sm:$0xf]
  %v392 = vld [vmem:[%s1 + $0x84c] sm:$0xff]
  %v393 = vld [vmem:[%s1 + $0x854] sm:$0xf]
  %v394 = vld [vmem:[%s1 + $0x858] sm:$0xff]
  %v395 = vld [vmem:[%s1 + $0x860] sm:$0xf]
  %v396 = vld [vmem:[%s1 + $0x864] sm:$0xff]
  %v397 = vld [vmem:[%s1 + $0x86c] sm:$0xf]
  %v398 = vld [vmem:[%s1 + $0x870] sm:$0xff]
  %v399 = vld [vmem:[%s1 + $0x878] sm:$0xf]
  %v400 = vld [vmem:[%s1 + $0x87c] sm:$0xff]
  %v401 = vld [vmem:[%s1 + $0x884] sm:$0xf]
  %v402 = vld [vmem:[%s1 + $0x888] sm:$0xff]
  %v403 = vld [vmem:[%s1 + $0x890] sm:$0xf]
  %v404 = vld [vmem:[%s1 + $0x894] sm:$0xff]
  %v405 = vld [vmem:[%s1 + $0x89c] sm:$0xf]
  %v406 = vld [vmem:[%s1 + $0x8a0] sm:$0xff]
  %v407 = vld [vmem:[%s1 + $0x8a8] sm:$0xf]
  %v408 = vld [vmem:[%s1 + $0x8ac] sm:$0xff]
  %v409 = vld [vmem:[%s1 + $0x8b4] sm:$0xf]
  %v410 = vld [vmem:[%s1 + $0x8b8] sm:$0xff]
  %v411 = vld [vmem:[%s1 + $0x8c0] sm:$0xf]
  %v412 = vld [vmem:[%s1 + $0x8c4] sm:$0xff]
  %v413 = vld [vmem:[%s1 + $0x8cc] sm:$0xf]
  %v414 = vld [vmem:[%s1 + $0x8d0] sm:$0xff]
  %v415 = vld [vmem:[%s1 + $0x8d8] sm:$0xf]
  %v416 = vld [vmem:[%s1 + $0x8dc] sm:$0xff]
  %v417 = vld [vmem:[%s1 + $0x8e4] sm:$0xf]
  %v418 = vld [vmem:[%s1 + $0x8e8] sm:$0xff]
  %v419 = vld [vmem:[%s1 + $0x8f0] sm:$0xf]
  %v420 = vld [vmem:[%s1 + $0x8f4] sm:$0xff]
  %v421 = vld [vmem:[%s1 + $0x8fc] sm:$0xf]
  %v422 = vld [vmem:[%s1 + $0x900] sm:$0xff]
  %v423 = vld [vmem:[%s1 + $0x908] sm:$0xf]
  %v424 = vld [vmem:[%s1 + $0x90c] sm:$0xff]
  %v425 = vld [vmem:[%s1 + $0x914] sm:$0xf]
  %v426 = vld [vmem:[%s1 + $0x918] sm:$0xff]
  %v427 = vld [vmem:[%s1 + $0x920] sm:$0xf]
  %v428 = vld [vmem:[%s1 + $0x924] sm:$0xff]
  %v429 = vld [vmem:[%s1 + $0x92c] sm:$0xf]
  %v430 = vld [vmem:[%s1 + $0x930] sm:$0xff]
  %v431 = vld [vmem:[%s1 + $0x938] sm:$0xf]
  %v432 = vld [vmem:[%s1 + $0x93c] sm:$0xff]
  %v433 = vld [vmem:[%s1 + $0x944] sm:$0xf]
  %v434 = vld [vmem:[%s1 + $0x948] sm:$0xff]
  %v435 = vld [vmem:[%s1 + $0x950] sm:$0xf]
  %v436 = vld [vmem:[%s1 + $0x954] sm:$0xff]
  %v437 = vld [vmem:[%s1 + $0x95c] sm:$0xf]
  %v438 = vld [vmem:[%s1 + $0x960] sm:$0xff]
  %v439 = vld [vmem:[%s1 + $0x968] sm:$0xf]
  %v440 = vld [vmem:[%s1 + $0x96c] sm:$0xff]
  %v441 = vld [vmem:[%s1 + $0x974] sm:$0xf]
  %v442 = vld [vmem:[%s1 + $0x978] sm:$0xff]
  %v443 = vld [vmem:[%s1 + $0x980] sm:$0xf]
  %v444 = vld [vmem:[%s1 + $0x984] sm:$0xff]
  %v445 = vld [vmem:[%s1 + $0x98c] sm:$0xf]
  %v446 = vld [vmem:[%s1 + $0x990] sm:$0xff]
  %v447 = vld [vmem:[%s1 + $0x998] sm:$0xf]
  %v448 = vld [vmem:[%s1 + $0x99c] sm:$0xff]
  %v449 = vld [vmem:[%s1 + $0x9a4] sm:$0xf]
  %v450 = vld [vmem:[%s1 + $0x9a8] sm:$0xff]
  %v451 = vld [vmem:[%s1 + $0x9b0] sm:$0xf]
  %v452 = vld [vmem:[%s1 + $0x9b4] sm:$0xff]
  %v453 = vld [vmem:[%s1 + $0x9bc] sm:$0xf]
  %v454 = vld [vmem:[%s1 + $0x9c0] sm:$0xff]
  %v455 = vld [vmem:[%s1 + $0x9c8] sm:$0xf]
  %v456 = vld [vmem:[%s1 + $0x9cc] sm:$0xff]
  %v457 = vld [vmem:[%s1 + $0x9d4] sm:$0xf]
  %v458 = vld [vmem:[%s1 + $0x9d8] sm:$0xff]
  %v459 = vld [vmem:[%s1 + $0x9e0] sm:$0xf]
  %v460 = vld [vmem:[%s1 + $0x9e4] sm:$0xff]
  %v461 = vld [vmem:[%s1 + $0x9ec] sm:$0xf]
  %v462 = vld [vmem:[%s1 + $0x9f0] sm:$0xff]
  %v463 = vld [vmem:[%s1 + $0x9f8] sm:$0xf]
  %v464 = vld [vmem:[%s1 + $0x9fc] sm:$0xff]
  %v465 = vld [vmem:[%s1 + $0xa04] sm:$0xf]
  %v466 = vld [vmem:[%s1 + $0xa08] sm:$0xff]
  %v467 = vld [vmem:[%s1 + $0xa10] sm:$0xf]
  %v468 = vld [vmem:[%s1 + $0xa14] sm:$0xff]
  %v469 = vld [vmem:[%s1 + $0xa1c] sm:$0xf]
  %v470 = vld [vmem:[%s1 + $0xa20] sm:$0xff]
  %v471 = vld [vmem:[%s1 + $0xa28] sm:$0xf]
  %v472 = vld [vmem:[%s1 + $0xa2c] sm:$0xff]
  %v473 = vld [vmem:[%s1 + $0xa34] sm:$0xf]
  %v474 = vld [vmem:[%s1 + $0xa38] sm:$0xff]
  %v475 = vld [vmem:[%s1 + $0xa40] sm:$0xf]
  %v476 = vld [vmem:[%s1 + $0xa44] sm:$0xff]
  %v477 = vld [vmem:[%s1 + $0xa4c] sm:$0xf]
  %v478 = vld [vmem:[%s1 + $0xa50] sm:$0xff]
  %v479 = vld [vmem:[%s1 + $0xa58] sm:$0xf]
  %v480 = vld [vmem:[%s1 + $0xa5c] sm:$0xff]
  %v481 = vld [vmem:[%s1 + $0xa64] sm:$0xf]
  %v482 = vld [vmem:[%s1 + $0xa68] sm:$0xff]
  %v483 = vld [vmem:[%s1 + $0xa70] sm:$0xf]
  %v484 = vld [vmem:[%s1 + $0xa74] sm:$0xff]
  %v485 = vld [vmem:[%s1 + $0xa7c] sm:$0xf]
  %v486 = vld [vmem:[%s1 + $0xa80] sm:$0xff]
  %v487 = vld [vmem:[%s1 + $0xa88] sm:$0xf]
  %v488 = vld [vmem:[%s1 + $0xa8c] sm:$0xff]
  %v489 = vld [vmem:[%s1 + $0xa94] sm:$0xf]
  %v490 = vld [vmem:[%s1 + $0xa98] sm:$0xff]
  %v491 = vld [vmem:[%s1 + $0xaa0] sm:$0xf]
  %v492 = vld [vmem:[%s1 + $0xaa4] sm:$0xff]
  %v493 = vld [vmem:[%s1 + $0xaac] sm:$0xf]
  %v494 = vld [vmem:[%s1 + $0xab0] sm:$0xff]
  %v495 = vld [vmem:[%s1 + $0xab8] sm:$0xf]
  %v496 = vld [vmem:[%s1 + $0xabc] sm:$0xff]
  %v497 = vld [vmem:[%s1 + $0xac4] sm:$0xf]
  %v498 = vld [vmem:[%s1 + $0xac8] sm:$0xff]
  %v499 = vld [vmem:[%s1 + $0xad0] sm:$0xf]
  %v500 = vld [vmem:[%s1 + $0xad4] sm:$0xff]
  %v501 = vld [vmem:[%s1 + $0xadc] sm:$0xf]
  %v502 = vld [vmem:[%s1 + $0xae0] sm:$0xff]
  %v503 = vld [vmem:[%s1 + $0xae8] sm:$0xf]
  %v504 = vld [vmem:[%s1 + $0xaec] sm:$0xff]
  %v505 = vld [vmem:[%s1 + $0xaf4] sm:$0xf]
  %v506 = vld [vmem:[%s1 + $0xaf8] sm:$0xff]
  %v507 = vld [vmem:[%s1 + $0xb00] sm:$0xf]
  %v508 = vld [vmem:[%s1 + $0xb04] sm:$0xff]
  %v509 = vld [vmem:[%s1 + $0xb0c] sm:$0xf]
  %v510 = vld [vmem:[%s1 + $0xb10] sm:$0xff]
  %v511 = vld [vmem:[%s1 + $0xb18] sm:$0xf]
  %v512 = vld [vmem:[%s1 + $0xb1c] sm:$0xff]
  %v513 = vld [vmem:[%s1 + $0xb24] sm:$0xf]
  %v514 = vld [vmem:[%s1 + $0xb28] sm:$0xff]
  %v515 = vld [vmem:[%s1 + $0xb30] sm:$0xf]
  %v516 = vld [vmem:[%s1 + $0xb34] sm:$0xff]
  %v517 = vld [vmem:[%s1 + $0xb3c] sm:$0xf]
  %v518 = vld [vmem:[%s1 + $0xb40] sm:$0xff]
  %v519 = vld [vmem:[%s1 + $0xb48] sm:$0xf]
  %v520 = vld [vmem:[%s1 + $0xb4c] sm:$0xff]
  %v521 = vld [vmem:[%s1 + $0xb54] sm:$0xf]
  %v522 = vld [vmem:[%s1 + $0xb58] sm:$0xff]
  %v523 = vld [vmem:[%s1 + $0xb60] sm:$0xf]
  %v524 = vld [vmem:[%s1 + $0xb64] sm:$0xff]
  %v525 = vld [vmem:[%s1 + $0xb6c] sm:$0xf]
  %v526 = vld [vmem:[%s1 + $0xb70] sm:$0xff]
  %v527 = vld [vmem:[%s1 + $0xb78] sm:$0xf]
  %v528 = vld [vmem:[%s1 + $0xb7c] sm:$0xff]
  %v529 = vld [vmem:[%s1 + $0xb84] sm:$0xf]
  %v530 = vld [vmem:[%s1 + $0xb88] sm:$0xff]
  %v531 = vld [vmem:[%s1 + $0xb90] sm:$0xf]
  %v532 = vld [vmem:[%s1 + $0xb94] sm:$0xff]
  %v533 = vld [vmem:[%s1 + $0xb9c] sm:$0xf]
  %v534 = vld [vmem:[%s1 + $0xba0] sm:$0xff]
  %v535 = vld [vmem:[%s1 + $0xba8] sm:$0xf]
  %v536 = vld [vmem:[%s1 + $0xbac] sm:$0xff]
  %v537 = vld [vmem:[%s1 + $0xbb4] sm:$0xf]
  %v538 = vld [vmem:[%s1 + $0xbb8] sm:$0xff]
  %v539 = vld [vmem:[%s1 + $0xbc0] sm:$0xf]
  %v540 = vld [vmem:[%s1 + $0xbc4] sm:$0xff]
  %v541 = vld [vmem:[%s1 + $0xbcc] sm:$0xf]
  %v542 = vld [vmem:[%s1 + $0xbd0] sm:$0xff]
  %v543 = vld [vmem:[%s1 + $0xbd8] sm:$0xf]
  %v544 = vld [vmem:[%s1 + $0xbdc] sm:$0xff]
  %v545 = vld [vmem:[%s1 + $0xbe4] sm:$0xf]
  %v546 = vld [vmem:[%s1 + $0xbe8] sm:$0xff]
  %v547 = vld [vmem:[%s1 + $0xbf0] sm:$0xf]
  %v548 = vld [vmem:[%s1 + $0xbf4] sm:$0xff]
  %v549 = vld [vmem:[%s1 + $0xbfc] sm:$0xf]
  %v574 = vunpack.c.l.b16 %v14
  %v575 = vunpack.c.h.b16 %v14
  %v576 = vunpack.c.l.b16 %v15
  %v577 = vunpack.c.h.b16 %v15
  %v578 = vunpack.c.l.b16 %v16
  %v579 = vunpack.c.h.b16 %v16
  %v580 = vunpack.c.l.b16 %v17
  %v581 = vunpack.c.h.b16 %v17
  %v582 = vunpack.c.l.b16 %v18
  %v583 = vunpack.c.h.b16 %v18
  %v584 = vunpack.c.l.b16 %v19
  %v585 = vunpack.c.h.b16 %v19
  %v586 = vunpack.c.l.b16 %v20
  %v587 = vunpack.c.h.b16 %v20
  %v588 = vunpack.c.l.b16 %v21
  %v589 = vunpack.c.h.b16 %v21
  %v590 = vunpack.c.l.b16 %v22
  %v591 = vunpack.c.h.b16 %v22
  %v592 = vunpack.c.l.b16 %v23
  %v593 = vunpack.c.h.b16 %v23
  %v594 = vunpack.c.l.b16 %v24
  %v595 = vunpack.c.h.b16 %v24
  %v596 = vunpack.c.l.b16 %v25
  %v597 = vunpack.c.h.b16 %v25
  %v598 = vunpack.c.l.b16 %v26
  %v599 = vunpack.c.h.b16 %v26
  %v600 = vunpack.c.l.b16 %v27
  %v601 = vunpack.c.h.b16 %v27
  %v602 = vunpack.c.l.b16 %v28
  %v603 = vunpack.c.h.b16 %v28
  %v604 = vunpack.c.l.b16 %v29
  %v605 = vunpack.c.h.b16 %v29
  %v606 = vunpack.c.l.b16 %v30
  %v607 = vunpack.c.h.b16 %v30
  %v608 = vunpack.c.l.b16 %v31
  %v609 = vunpack.c.h.b16 %v31
  %v610 = vunpack.c.l.b16 %v32
  %v611 = vunpack.c.h.b16 %v32
  %v612 = vunpack.c.l.b16 %v33
  %v613 = vunpack.c.h.b16 %v33
  %v614 = vunpack.c.l.b16 %v34
  %v615 = vunpack.c.h.b16 %v34
  %v616 = vunpack.c.l.b16 %v35
  %v617 = vunpack.c.h.b16 %v35
  %v618 = vunpack.c.l.b16 %v36
  %v619 = vunpack.c.h.b16 %v36
  %v620 = vunpack.c.l.b16 %v37
  %v621 = vunpack.c.h.b16 %v37
  %v622 = vpack.c.b16 %v590, %v574
  %v623 = vpack.c.b16 %v591, %v575
  %v624 = vpack.c.b16 %v592, %v576
  %v625 = vpack.c.b16 %v593, %v577
  %v626 = vpack.c.b16 %v594, %v578
  %v627 = vpack.c.b16 %v595, %v579
  %v628 = vpack.c.b16 %v596, %v580
  %v629 = vpack.c.b16 %v597, %v581
  %v630 = vpack.c.b16 %v598, %v582
  %v631 = vpack.c.b16 %v599, %v583
  %v632 = vpack.c.b16 %v600, %v584
  %v633 = vpack.c.b16 %v601, %v585
  %v634 = vpack.c.b16 %v602, %v586
  %v635 = vpack.c.b16 %v603, %v587
  %v636 = vpack.c.b16 %v604, %v588
  %v637 = vpack.c.b16 %v605, %v589
  %v638 = vpack.c.b16 %v606, %v606
  %v639 = vpack.c.b16 %v607, %v607
  %v640 = vpack.c.b16 %v608, %v608
  %v641 = vpack.c.b16 %v609, %v609
  %v642 = vpack.c.b16 %v610, %v610
  %v643 = vpack.c.b16 %v611, %v611
  %v644 = vpack.c.b16 %v612, %v612
  %v645 = vpack.c.b16 %v613, %v613
  %v646 = vpack.c.b16 %v614, %v614
  %v647 = vpack.c.b16 %v615, %v615
  %v648 = vpack.c.b16 %v616, %v616
  %v649 = vpack.c.b16 %v617, %v617
  %v650 = vpack.c.b16 %v618, %v618
  %v651 = vpack.c.b16 %v619, %v619
  %v652 = vpack.c.b16 %v620, %v620
  %v653 = vpack.c.b16 %v621, %v621
  %v1198 = vunpack.c.l.b16 %v38
  %v1199 = vunpack.c.h.b16 %v38
  %v1200 = vunpack.c.l.b16 %v39
  %v1201 = vunpack.c.l.b16 %v40
  %v1202 = vunpack.c.h.b16 %v40
  %v1203 = vunpack.c.l.b16 %v41
  %v1204 = vunpack.c.l.b16 %v42
  %v1205 = vunpack.c.h.b16 %v42
  %v1206 = vunpack.c.l.b16 %v43
  %v1207 = vunpack.c.l.b16 %v44
  %v1208 = vunpack.c.h.b16 %v44
  %v1209 = vunpack.c.l.b16 %v45
  %v1210 = vunpack.c.l.b16 %v46
  %v1211 = vunpack.c.h.b16 %v46
  %v1212 = vunpack.c.l.b16 %v47
  %v1213 = vunpack.c.l.b16 %v48
  %v1214 = vunpack.c.h.b16 %v48
  %v1215 = vunpack.c.l.b16 %v49
  %v1216 = vunpack.c.l.b16 %v50
  %v1217 = vunpack.c.h.b16 %v50
  %v1218 = vunpack.c.l.b16 %v51
  %v1219 = vunpack.c.l.b16 %v52
  %v1220 = vunpack.c.h.b16 %v52
  %v1221 = vunpack.c.l.b16 %v53
  %v1222 = vunpack.c.l.b16 %v54
  %v1223 = vunpack.c.h.b16 %v54
  %v1224 = vunpack.c.l.b16 %v55
  %v1225 = vunpack.c.l.b16 %v56
  %v1226 = vunpack.c.h.b16 %v56
  %v1227 = vunpack.c.l.b16 %v57
  %v1228 = vunpack.c.l.b16 %v58
  %v1229 = vunpack.c.h.b16 %v58
  %v1230 = vunpack.c.l.b16 %v59
  %v1231 = vunpack.c.l.b16 %v60
  %v1232 = vunpack.c.h.b16 %v60
  %v1233 = vunpack.c.l.b16 %v61
  %v1234 = vunpack.c.l.b16 %v62
  %v1235 = vunpack.c.h.b16 %v62
  %v1236 = vunpack.c.l.b16 %v63
  %v1237 = vunpack.c.l.b16 %v64
  %v1238 = vunpack.c.h.b16 %v64
  %v1239 = vunpack.c.l.b16 %v65
  %v1240 = vunpack.c.l.b16 %v66
  %v1241 = vunpack.c.h.b16 %v66
  %v1242 = vunpack.c.l.b16 %v67
  %v1243 = vunpack.c.l.b16 %v68
  %v1244 = vunpack.c.h.b16 %v68
  %v1245 = vunpack.c.l.b16 %v69
  %v1246 = vunpack.c.l.b16 %v70
  %v1247 = vunpack.c.h.b16 %v70
  %v1248 = vunpack.c.l.b16 %v71
  %v1249 = vunpack.c.l.b16 %v72
  %v1250 = vunpack.c.h.b16 %v72
  %v1251 = vunpack.c.l.b16 %v73
  %v1252 = vunpack.c.l.b16 %v74
  %v1253 = vunpack.c.h.b16 %v74
  %v1254 = vunpack.c.l.b16 %v75
  %v1255 = vunpack.c.l.b16 %v76
  %v1256 = vunpack.c.h.b16 %v76
  %v1257 = vunpack.c.l.b16 %v77
  %v1258 = vunpack.c.l.b16 %v78
  %v1259 = vunpack.c.h.b16 %v78
  %v1260 = vunpack.c.l.b16 %v79
  %v1261 = vunpack.c.l.b16 %v80
  %v1262 = vunpack.c.h.b16 %v80
  %v1263 = vunpack.c.l.b16 %v81
  %v1264 = vunpack.c.l.b16 %v82
  %v1265 = vunpack.c.h.b16 %v82
  %v1266 = vunpack.c.l.b16 %v83
  %v1267 = vunpack.c.l.b16 %v84
  %v1268 = vunpack.c.h.b16 %v84
  %v1269 = vunpack.c.l.b16 %v85
  %v1270 = vunpack.c.l.b16 %v86
  %v1271 = vunpack.c.h.b16 %v86
  %v1272 = vunpack.c.l.b16 %v87
  %v1273 = vunpack.c.l.b16 %v88
  %v1274 = vunpack.c.h.b16 %v88
  %v1275 = vunpack.c.l.b16 %v89
  %v1276 = vunpack.c.l.b16 %v90
  %v1277 = vunpack.c.h.b16 %v90
  %v1278 = vunpack.c.l.b16 %v91
  %v1279 = vunpack.c.l.b16 %v92
  %v1280 = vunpack.c.h.b16 %v92
  %v1281 = vunpack.c.l.b16 %v93
  %v1282 = vunpack.c.l.b16 %v94
  %v1283 = vunpack.c.h.b16 %v94
  %v1284 = vunpack.c.l.b16 %v95
  %v1285 = vunpack.c.l.b16 %v96
  %v1286 = vunpack.c.h.b16 %v96
  %v1287 = vunpack.c.l.b16 %v97
  %v1288 = vunpack.c.l.b16 %v98
  %v1289 = vunpack.c.h.b16 %v98
  %v1290 = vunpack.c.l.b16 %v99
  %v1291 = vunpack.c.l.b16 %v100
  %v1292 = vunpack.c.h.b16 %v100
  %v1293 = vunpack.c.l.b16 %v101
  %v1294 = vunpack.c.l.b16 %v102
  %v1295 = vunpack.c.h.b16 %v102
  %v1296 = vunpack.c.l.b16 %v103
  %v1297 = vunpack.c.l.b16 %v104
  %v1298 = vunpack.c.h.b16 %v104
  %v1299 = vunpack.c.l.b16 %v105
  %v1300 = vunpack.c.l.b16 %v106
  %v1301 = vunpack.c.h.b16 %v106
  %v1302 = vunpack.c.l.b16 %v107
  %v1303 = vunpack.c.l.b16 %v108
  %v1304 = vunpack.c.h.b16 %v108
  %v1305 = vunpack.c.l.b16 %v109
  %v1306 = vunpack.c.l.b16 %v110
  %v1307 = vunpack.c.h.b16 %v110
  %v1308 = vunpack.c.l.b16 %v111
  %v1309 = vunpack.c.l.b16 %v112
  %v1310 = vunpack.c.h.b16 %v112
  %v1311 = vunpack.c.l.b16 %v113
  %v1312 = vunpack.c.l.b16 %v114
  %v1313 = vunpack.c.h.b16 %v114
  %v1314 = vunpack.c.l.b16 %v115
  %v1315 = vunpack.c.l.b16 %v116
  %v1316 = vunpack.c.h.b16 %v116
  %v1317 = vunpack.c.l.b16 %v117
  %v1318 = vunpack.c.l.b16 %v118
  %v1319 = vunpack.c.h.b16 %v118
  %v1320 = vunpack.c.l.b16 %v119
  %v1321 = vunpack.c.l.b16 %v120
  %v1322 = vunpack.c.h.b16 %v120
  %v1323 = vunpack.c.l.b16 %v121
  %v1324 = vunpack.c.l.b16 %v122
  %v1325 = vunpack.c.h.b16 %v122
  %v1326 = vunpack.c.l.b16 %v123
  %v1327 = vunpack.c.l.b16 %v124
  %v1328 = vunpack.c.h.b16 %v124
  %v1329 = vunpack.c.l.b16 %v125
  %v1330 = vunpack.c.l.b16 %v126
  %v1331 = vunpack.c.h.b16 %v126
  %v1332 = vunpack.c.l.b16 %v127
  %v1333 = vunpack.c.l.b16 %v128
  %v1334 = vunpack.c.h.b16 %v128
  %v1335 = vunpack.c.l.b16 %v129
  %v1336 = vunpack.c.l.b16 %v130
  %v1337 = vunpack.c.h.b16 %v130
  %v1338 = vunpack.c.l.b16 %v131
  %v1339 = vunpack.c.l.b16 %v132
  %v1340 = vunpack.c.h.b16 %v132
  %v1341 = vunpack.c.l.b16 %v133
  %v1342 = vunpack.c.l.b16 %v134
  %v1343 = vunpack.c.h.b16 %v134
  %v1344 = vunpack.c.l.b16 %v135
  %v1345 = vunpack.c.l.b16 %v136
  %v1346 = vunpack.c.h.b16 %v136
  %v1347 = vunpack.c.l.b16 %v137
  %v1348 = vunpack.c.l.b16 %v138
  %v1349 = vunpack.c.h.b16 %v138
  %v1350 = vunpack.c.l.b16 %v139
  %v1351 = vunpack.c.l.b16 %v140
  %v1352 = vunpack.c.h.b16 %v140
  %v1353 = vunpack.c.l.b16 %v141
  %v1354 = vunpack.c.l.b16 %v142
  %v1355 = vunpack.c.h.b16 %v142
  %v1356 = vunpack.c.l.b16 %v143
  %v1357 = vunpack.c.l.b16 %v144
  %v1358 = vunpack.c.h.b16 %v144
  %v1359 = vunpack.c.l.b16 %v145
  %v1360 = vunpack.c.l.b16 %v146
  %v1361 = vunpack.c.h.b16 %v146
  %v1362 = vunpack.c.l.b16 %v147
  %v1363 = vunpack.c.l.b16 %v148
  %v1364 = vunpack.c.h.b16 %v148
  %v1365 = vunpack.c.l.b16 %v149
  %v1366 = vunpack.c.l.b16 %v150
  %v1367 = vunpack.c.h.b16 %v150
  %v1368 = vunpack.c.l.b16 %v151
  %v1369 = vunpack.c.l.b16 %v152
  %v1370 = vunpack.c.h.b16 %v152
  %v1371 = vunpack.c.l.b16 %v153
  %v1372 = vunpack.c.l.b16 %v154
  %v1373 = vunpack.c.h.b16 %v154
  %v1374 = vunpack.c.l.b16 %v155
  %v1375 = vunpack.c.l.b16 %v156
  %v1376 = vunpack.c.h.b16 %v156
  %v1377 = vunpack.c.l.b16 %v157
  %v1378 = vunpack.c.l.b16 %v158
  %v1379 = vunpack.c.h.b16 %v158
  %v1380 = vunpack.c.l.b16 %v159
  %v1381 = vunpack.c.l.b16 %v160
  %v1382 = vunpack.c.h.b16 %v160
  %v1383 = vunpack.c.l.b16 %v161
  %v1384 = vunpack.c.l.b16 %v162
  %v1385 = vunpack.c.h.b16 %v162
  %v1386 = vunpack.c.l.b16 %v163
  %v1387 = vunpack.c.l.b16 %v164
  %v1388 = vunpack.c.h.b16 %v164
  %v1389 = vunpack.c.l.b16 %v165
  %v1390 = vunpack.c.l.b16 %v166
  %v1391 = vunpack.c.h.b16 %v166
  %v1392 = vunpack.c.l.b16 %v167
  %v1393 = vunpack.c.l.b16 %v168
  %v1394 = vunpack.c.h.b16 %v168
  %v1395 = vunpack.c.l.b16 %v169
  %v1396 = vunpack.c.l.b16 %v170
  %v1397 = vunpack.c.h.b16 %v170
  %v1398 = vunpack.c.l.b16 %v171
  %v1399 = vunpack.c.l.b16 %v172
  %v1400 = vunpack.c.h.b16 %v172
  %v1401 = vunpack.c.l.b16 %v173
  %v1402 = vunpack.c.l.b16 %v174
  %v1403 = vunpack.c.h.b16 %v174
  %v1404 = vunpack.c.l.b16 %v175
  %v1405 = vunpack.c.l.b16 %v176
  %v1406 = vunpack.c.h.b16 %v176
  %v1407 = vunpack.c.l.b16 %v177
  %v1408 = vunpack.c.l.b16 %v178
  %v1409 = vunpack.c.h.b16 %v178
  %v1410 = vunpack.c.l.b16 %v179
  %v1411 = vunpack.c.l.b16 %v180
  %v1412 = vunpack.c.h.b16 %v180
  %v1413 = vunpack.c.l.b16 %v181
  %v1414 = vunpack.c.l.b16 %v182
  %v1415 = vunpack.c.h.b16 %v182
  %v1416 = vunpack.c.l.b16 %v183
  %v1417 = vunpack.c.l.b16 %v184
  %v1418 = vunpack.c.h.b16 %v184
  %v1419 = vunpack.c.l.b16 %v185
  %v1420 = vunpack.c.l.b16 %v186
  %v1421 = vunpack.c.h.b16 %v186
  %v1422 = vunpack.c.l.b16 %v187
  %v1423 = vunpack.c.l.b16 %v188
  %v1424 = vunpack.c.h.b16 %v188
  %v1425 = vunpack.c.l.b16 %v189
  %v1426 = vunpack.c.l.b16 %v190
  %v1427 = vunpack.c.h.b16 %v190
  %v1428 = vunpack.c.l.b16 %v191
  %v1429 = vunpack.c.l.b16 %v192
  %v1430 = vunpack.c.h.b16 %v192
  %v1431 = vunpack.c.l.b16 %v193
  %v1432 = vunpack.c.l.b16 %v194
  %v1433 = vunpack.c.h.b16 %v194
  %v1434 = vunpack.c.l.b16 %v195
  %v1435 = vunpack.c.l.b16 %v196
  %v1436 = vunpack.c.h.b16 %v196
  %v1437 = vunpack.c.l.b16 %v197
  %v1438 = vunpack.c.l.b16 %v198
  %v1439 = vunpack.c.h.b16 %v198
  %v1440 = vunpack.c.l.b16 %v199
  %v1441 = vunpack.c.l.b16 %v200
  %v1442 = vunpack.c.h.b16 %v200
  %v1443 = vunpack.c.l.b16 %v201
  %v1444 = vunpack.c.l.b16 %v202
  %v1445 = vunpack.c.h.b16 %v202
  %v1446 = vunpack.c.l.b16 %v203
  %v1447 = vunpack.c.l.b16 %v204
  %v1448 = vunpack.c.h.b16 %v204
  %v1449 = vunpack.c.l.b16 %v205
  %v1450 = vunpack.c.l.b16 %v206
  %v1451 = vunpack.c.h.b16 %v206
  %v1452 = vunpack.c.l.b16 %v207
  %v1453 = vunpack.c.l.b16 %v208
  %v1454 = vunpack.c.h.b16 %v208
  %v1455 = vunpack.c.l.b16 %v209
  %v1456 = vunpack.c.l.b16 %v210
  %v1457 = vunpack.c.h.b16 %v210
  %v1458 = vunpack.c.l.b16 %v211
  %v1459 = vunpack.c.l.b16 %v212
  %v1460 = vunpack.c.h.b16 %v212
  %v1461 = vunpack.c.l.b16 %v213
  %v1462 = vunpack.c.l.b16 %v214
  %v1463 = vunpack.c.h.b16 %v214
  %v1464 = vunpack.c.l.b16 %v215
  %v1465 = vunpack.c.l.b16 %v216
  %v1466 = vunpack.c.h.b16 %v216
  %v1467 = vunpack.c.l.b16 %v217
  %v1468 = vunpack.c.l.b16 %v218
  %v1469 = vunpack.c.h.b16 %v218
  %v1470 = vunpack.c.l.b16 %v219
  %v1471 = vunpack.c.l.b16 %v220
  %v1472 = vunpack.c.h.b16 %v220
  %v1473 = vunpack.c.l.b16 %v221
  %v1474 = vunpack.c.l.b16 %v222
  %v1475 = vunpack.c.h.b16 %v222
  %v1476 = vunpack.c.l.b16 %v223
  %v1477 = vunpack.c.l.b16 %v224
  %v1478 = vunpack.c.h.b16 %v224
  %v1479 = vunpack.c.l.b16 %v225
  %v1480 = vunpack.c.l.b16 %v226
  %v1481 = vunpack.c.h.b16 %v226
  %v1482 = vunpack.c.l.b16 %v227
  %v1483 = vunpack.c.l.b16 %v228
  %v1484 = vunpack.c.h.b16 %v228
  %v1485 = vunpack.c.l.b16 %v229
  %v1486 = vunpack.c.l.b16 %v230
  %v1487 = vunpack.c.h.b16 %v230
  %v1488 = vunpack.c.l.b16 %v231
  %v1489 = vunpack.c.l.b16 %v232
  %v1490 = vunpack.c.h.b16 %v232
  %v1491 = vunpack.c.l.b16 %v233
  %v1492 = vunpack.c.l.b16 %v234
  %v1493 = vunpack.c.h.b16 %v234
  %v1494 = vunpack.c.l.b16 %v235
  %v1495 = vunpack.c.l.b16 %v236
  %v1496 = vunpack.c.h.b16 %v236
  %v1497 = vunpack.c.l.b16 %v237
  %v1498 = vunpack.c.l.b16 %v238
  %v1499 = vunpack.c.h.b16 %v238
  %v1500 = vunpack.c.l.b16 %v239
  %v1501 = vunpack.c.l.b16 %v240
  %v1502 = vunpack.c.h.b16 %v240
  %v1503 = vunpack.c.l.b16 %v241
  %v1504 = vunpack.c.l.b16 %v242
  %v1505 = vunpack.c.h.b16 %v242
  %v1506 = vunpack.c.l.b16 %v243
  %v1507 = vunpack.c.l.b16 %v244
  %v1508 = vunpack.c.h.b16 %v244
  %v1509 = vunpack.c.l.b16 %v245
  %v1510 = vunpack.c.l.b16 %v246
  %v1511 = vunpack.c.h.b16 %v246
  %v1512 = vunpack.c.l.b16 %v247
  %v1513 = vunpack.c.l.b16 %v248
  %v1514 = vunpack.c.h.b16 %v248
  %v1515 = vunpack.c.l.b16 %v249
  %v1516 = vunpack.c.l.b16 %v250
  %v1517 = vunpack.c.h.b16 %v250
  %v1518 = vunpack.c.l.b16 %v251
  %v1519 = vunpack.c.l.b16 %v252
  %v1520 = vunpack.c.h.b16 %v252
  %v1521 = vunpack.c.l.b16 %v253
  %v1522 = vunpack.c.l.b16 %v254
  %v1523 = vunpack.c.h.b16 %v254
  %v1524 = vunpack.c.l.b16 %v255
  %v1525 = vunpack.c.l.b16 %v256
  %v1526 = vunpack.c.h.b16 %v256
  %v1527 = vunpack.c.l.b16 %v257
  %v1528 = vunpack.c.l.b16 %v258
  %v1529 = vunpack.c.h.b16 %v258
  %v1530 = vunpack.c.l.b16 %v259
  %v1531 = vunpack.c.l.b16 %v260
  %v1532 = vunpack.c.h.b16 %v260
  %v1533 = vunpack.c.l.b16 %v261
  %v1534 = vunpack.c.l.b16 %v262
  %v1535 = vunpack.c.h.b16 %v262
  %v1536 = vunpack.c.l.b16 %v263
  %v1537 = vunpack.c.l.b16 %v264
  %v1538 = vunpack.c.h.b16 %v264
  %v1539 = vunpack.c.l.b16 %v265
  %v1540 = vunpack.c.l.b16 %v266
  %v1541 = vunpack.c.h.b16 %v266
  %v1542 = vunpack.c.l.b16 %v267
  %v1543 = vunpack.c.l.b16 %v268
  %v1544 = vunpack.c.h.b16 %v268
  %v1545 = vunpack.c.l.b16 %v269
  %v1546 = vunpack.c.l.b16 %v270
  %v1547 = vunpack.c.h.b16 %v270
  %v1548 = vunpack.c.l.b16 %v271
  %v1549 = vunpack.c.l.b16 %v272
  %v1550 = vunpack.c.h.b16 %v272
  %v1551 = vunpack.c.l.b16 %v273
  %v1552 = vunpack.c.l.b16 %v274
  %v1553 = vunpack.c.h.b16 %v274
  %v1554 = vunpack.c.l.b16 %v275
  %v1555 = vunpack.c.l.b16 %v276
  %v1556 = vunpack.c.h.b16 %v276
  %v1557 = vunpack.c.l.b16 %v277
  %v1558 = vunpack.c.l.b16 %v278
  %v1559 = vunpack.c.h.b16 %v278
  %v1560 = vunpack.c.l.b16 %v279
  %v1561 = vunpack.c.l.b16 %v280
  %v1562 = vunpack.c.h.b16 %v280
  %v1563 = vunpack.c.l.b16 %v281
  %v1564 = vunpack.c.l.b16 %v282
  %v1565 = vunpack.c.h.b16 %v282
  %v1566 = vunpack.c.l.b16 %v283
  %v1567 = vunpack.c.l.b16 %v284
  %v1568 = vunpack.c.h.b16 %v284
  %v1569 = vunpack.c.l.b16 %v285
  %v1570 = vunpack.c.l.b16 %v286
  %v1571 = vunpack.c.h.b16 %v286
  %v1572 = vunpack.c.l.b16 %v287
  %v1573 = vunpack.c.l.b16 %v288
  %v1574 = vunpack.c.h.b16 %v288
  %v1575 = vunpack.c.l.b16 %v289
  %v1576 = vunpack.c.l.b16 %v290
  %v1577 = vunpack.c.h.b16 %v290
  %v1578 = vunpack.c.l.b16 %v291
  %v1579 = vunpack.c.l.b16 %v292
  %v1580 = vunpack.c.h.b16 %v292
  %v1581 = vunpack.c.l.b16 %v293
  %v1582 = vunpack.c.l.b16 %v294
  %v1583 = vunpack.c.h.b16 %v294
  %v1584 = vunpack.c.l.b16 %v295
  %v1585 = vunpack.c.l.b16 %v296
  %v1586 = vunpack.c.h.b16 %v296
  %v1587 = vunpack.c.l.b16 %v297
  %v1588 = vunpack.c.l.b16 %v298
  %v1589 = vunpack.c.h.b16 %v298
  %v1590 = vunpack.c.l.b16 %v299
  %v1591 = vunpack.c.l.b16 %v300
  %v1592 = vunpack.c.h.b16 %v300
  %v1593 = vunpack.c.l.b16 %v301
  %v1594 = vunpack.c.l.b16 %v302
  %v1595 = vunpack.c.h.b16 %v302
  %v1596 = vunpack.c.l.b16 %v303
  %v1597 = vunpack.c.l.b16 %v304
  %v1598 = vunpack.c.h.b16 %v304
  %v1599 = vunpack.c.l.b16 %v305
  %v1600 = vunpack.c.l.b16 %v306
  %v1601 = vunpack.c.h.b16 %v306
  %v1602 = vunpack.c.l.b16 %v307
  %v1603 = vunpack.c.l.b16 %v308
  %v1604 = vunpack.c.h.b16 %v308
  %v1605 = vunpack.c.l.b16 %v309
  %v1606 = vunpack.c.l.b16 %v310
  %v1607 = vunpack.c.h.b16 %v310
  %v1608 = vunpack.c.l.b16 %v311
  %v1609 = vunpack.c.l.b16 %v312
  %v1610 = vunpack.c.h.b16 %v312
  %v1611 = vunpack.c.l.b16 %v313
  %v1612 = vunpack.c.l.b16 %v314
  %v1613 = vunpack.c.h.b16 %v314
  %v1614 = vunpack.c.l.b16 %v315
  %v1615 = vunpack.c.l.b16 %v316
  %v1616 = vunpack.c.h.b16 %v316
  %v1617 = vunpack.c.l.b16 %v317
  %v1618 = vunpack.c.l.b16 %v318
  %v1619 = vunpack.c.h.b16 %v318
  %v1620 = vunpack.c.l.b16 %v319
  %v1621 = vunpack.c.l.b16 %v320
  %v1622 = vunpack.c.h.b16 %v320
  %v1623 = vunpack.c.l.b16 %v321
  %v1624 = vunpack.c.l.b16 %v322
  %v1625 = vunpack.c.h.b16 %v322
  %v1626 = vunpack.c.l.b16 %v323
  %v1627 = vunpack.c.l.b16 %v324
  %v1628 = vunpack.c.h.b16 %v324
  %v1629 = vunpack.c.l.b16 %v325
  %v1630 = vunpack.c.l.b16 %v326
  %v1631 = vunpack.c.h.b16 %v326
  %v1632 = vunpack.c.l.b16 %v327
  %v1633 = vunpack.c.l.b16 %v328
  %v1634 = vunpack.c.h.b16 %v328
  %v1635 = vunpack.c.l.b16 %v329
  %v1636 = vunpack.c.l.b16 %v330
  %v1637 = vunpack.c.h.b16 %v330
  %v1638 = vunpack.c.l.b16 %v331
  %v1639 = vunpack.c.l.b16 %v332
  %v1640 = vunpack.c.h.b16 %v332
  %v1641 = vunpack.c.l.b16 %v333
  %v1642 = vunpack.c.l.b16 %v334
  %v1643 = vunpack.c.h.b16 %v334
  %v1644 = vunpack.c.l.b16 %v335
  %v1645 = vunpack.c.l.b16 %v336
  %v1646 = vunpack.c.h.b16 %v336
  %v1647 = vunpack.c.l.b16 %v337
  %v1648 = vunpack.c.l.b16 %v338
  %v1649 = vunpack.c.h.b16 %v338
  %v1650 = vunpack.c.l.b16 %v339
  %v1651 = vunpack.c.l.b16 %v340
  %v1652 = vunpack.c.h.b16 %v340
  %v1653 = vunpack.c.l.b16 %v341
  %v1654 = vunpack.c.l.b16 %v342
  %v1655 = vunpack.c.h.b16 %v342
  %v1656 = vunpack.c.l.b16 %v343
  %v1657 = vunpack.c.l.b16 %v344
  %v1658 = vunpack.c.h.b16 %v344
  %v1659 = vunpack.c.l.b16 %v345
  %v1660 = vunpack.c.l.b16 %v346
  %v1661 = vunpack.c.h.b16 %v346
  %v1662 = vunpack.c.l.b16 %v347
  %v1663 = vunpack.c.l.b16 %v348
  %v1664 = vunpack.c.h.b16 %v348
  %v1665 = vunpack.c.l.b16 %v349
  %v1666 = vunpack.c.l.b16 %v350
  %v1667 = vunpack.c.h.b16 %v350
  %v1668 = vunpack.c.l.b16 %v351
  %v1669 = vunpack.c.l.b16 %v352
  %v1670 = vunpack.c.h.b16 %v352
  %v1671 = vunpack.c.l.b16 %v353
  %v1672 = vunpack.c.l.b16 %v354
  %v1673 = vunpack.c.h.b16 %v354
  %v1674 = vunpack.c.l.b16 %v355
  %v1675 = vunpack.c.l.b16 %v356
  %v1676 = vunpack.c.h.b16 %v356
  %v1677 = vunpack.c.l.b16 %v357
  %v1678 = vunpack.c.l.b16 %v358
  %v1679 = vunpack.c.h.b16 %v358
  %v1680 = vunpack.c.l.b16 %v359
  %v1681 = vunpack.c.l.b16 %v360
  %v1682 = vunpack.c.h.b16 %v360
  %v1683 = vunpack.c.l.b16 %v361
  %v1684 = vunpack.c.l.b16 %v362
  %v1685 = vunpack.c.h.b16 %v362
  %v1686 = vunpack.c.l.b16 %v363
  %v1687 = vunpack.c.l.b16 %v364
  %v1688 = vunpack.c.h.b16 %v364
  %v1689 = vunpack.c.l.b16 %v365
  %v1690 = vunpack.c.l.b16 %v366
  %v1691 = vunpack.c.h.b16 %v366
  %v1692 = vunpack.c.l.b16 %v367
  %v1693 = vunpack.c.l.b16 %v368
  %v1694 = vunpack.c.h.b16 %v368
  %v1695 = vunpack.c.l.b16 %v369
  %v1696 = vunpack.c.l.b16 %v370
  %v1697 = vunpack.c.h.b16 %v370
  %v1698 = vunpack.c.l.b16 %v371
  %v1699 = vunpack.c.l.b16 %v372
  %v1700 = vunpack.c.h.b16 %v372
  %v1701 = vunpack.c.l.b16 %v373
  %v1702 = vunpack.c.l.b16 %v374
  %v1703 = vunpack.c.h.b16 %v374
  %v1704 = vunpack.c.l.b16 %v375
  %v1705 = vunpack.c.l.b16 %v376
  %v1706 = vunpack.c.h.b16 %v376
  %v1707 = vunpack.c.l.b16 %v377
  %v1708 = vunpack.c.l.b16 %v378
  %v1709 = vunpack.c.h.b16 %v378
  %v1710 = vunpack.c.l.b16 %v379
  %v1711 = vunpack.c.l.b16 %v380
  %v1712 = vunpack.c.h.b16 %v380
  %v1713 = vunpack.c.l.b16 %v381
  %v1714 = vunpack.c.l.b16 %v382
  %v1715 = vunpack.c.h.b16 %v382
  %v1716 = vunpack.c.l.b16 %v383
  %v1717 = vunpack.c.l.b16 %v384
  %v1718 = vunpack.c.h.b16 %v384
  %v1719 = vunpack.c.l.b16 %v385
  %v1720 = vunpack.c.l.b16 %v386
  %v1721 = vunpack.c.h.b16 %v386
  %v1722 = vunpack.c.l.b16 %v387
  %v1723 = vunpack.c.l.b16 %v388
  %v1724 = vunpack.c.h.b16 %v388
  %v1725 = vunpack.c.l.b16 %v389
  %v1726 = vunpack.c.l.b16 %v390
  %v1727 = vunpack.c.h.b16 %v390
  %v1728 = vunpack.c.l.b16 %v391
  %v1729 = vunpack.c.l.b16 %v392
  %v1730 = vunpack.c.h.b16 %v392
  %v1731 = vunpack.c.l.b16 %v393
  %v1732 = vunpack.c.l.b16 %v394
  %v1733 = vunpack.c.h.b16 %v394
  %v1734 = vunpack.c.l.b16 %v395
  %v1735 = vunpack.c.l.b16 %v396
  %v1736 = vunpack.c.h.b16 %v396
  %v1737 = vunpack.c.l.b16 %v397
  %v1738 = vunpack.c.l.b16 %v398
  %v1739 = vunpack.c.h.b16 %v398
  %v1740 = vunpack.c.l.b16 %v399
  %v1741 = vunpack.c.l.b16 %v400
  %v1742 = vunpack.c.h.b16 %v400
  %v1743 = vunpack.c.l.b16 %v401
  %v1744 = vunpack.c.l.b16 %v402
  %v1745 = vunpack.c.h.b16 %v402
  %v1746 = vunpack.c.l.b16 %v403
  %v1747 = vunpack.c.l.b16 %v404
  %v1748 = vunpack.c.h.b16 %v404
  %v1749 = vunpack.c.l.b16 %v405
  %v1750 = vunpack.c.l.b16 %v406
  %v1751 = vunpack.c.h.b16 %v406
  %v1752 = vunpack.c.l.b16 %v407
  %v1753 = vunpack.c.l.b16 %v408
  %v1754 = vunpack.c.h.b16 %v408
  %v1755 = vunpack.c.l.b16 %v409
  %v1756 = vunpack.c.l.b16 %v410
  %v1757 = vunpack.c.h.b16 %v410
  %v1758 = vunpack.c.l.b16 %v411
  %v1759 = vunpack.c.l.b16 %v412
  %v1760 = vunpack.c.h.b16 %v412
  %v1761 = vunpack.c.l.b16 %v413
  %v1762 = vunpack.c.l.b16 %v414
  %v1763 = vunpack.c.h.b16 %v414
  %v1764 = vunpack.c.l.b16 %v415
  %v1765 = vunpack.c.l.b16 %v416
  %v1766 = vunpack.c.h.b16 %v416
  %v1767 = vunpack.c.l.b16 %v417
  %v1768 = vunpack.c.l.b16 %v418
  %v1769 = vunpack.c.h.b16 %v418
  %v1770 = vunpack.c.l.b16 %v419
  %v1771 = vunpack.c.l.b16 %v420
  %v1772 = vunpack.c.h.b16 %v420
  %v1773 = vunpack.c.l.b16 %v421
  %v1774 = vunpack.c.l.b16 %v422
  %v1775 = vunpack.c.h.b16 %v422
  %v1776 = vunpack.c.l.b16 %v423
  %v1777 = vunpack.c.l.b16 %v424
  %v1778 = vunpack.c.h.b16 %v424
  %v1779 = vunpack.c.l.b16 %v425
  %v1780 = vunpack.c.l.b16 %v426
  %v1781 = vunpack.c.h.b16 %v426
  %v1782 = vunpack.c.l.b16 %v427
  %v1783 = vunpack.c.l.b16 %v428
  %v1784 = vunpack.c.h.b16 %v428
  %v1785 = vunpack.c.l.b16 %v429
  %v1786 = vunpack.c.l.b16 %v430
  %v1787 = vunpack.c.h.b16 %v430
  %v1788 = vunpack.c.l.b16 %v431
  %v1789 = vunpack.c.l.b16 %v432
  %v1790 = vunpack.c.h.b16 %v432
  %v1791 = vunpack.c.l.b16 %v433
  %v1792 = vunpack.c.l.b16 %v434
  %v1793 = vunpack.c.h.b16 %v434
  %v1794 = vunpack.c.l.b16 %v435
  %v1795 = vunpack.c.l.b16 %v436
  %v1796 = vunpack.c.h.b16 %v436
  %v1797 = vunpack.c.l.b16 %v437
  %v1798 = vunpack.c.l.b16 %v438
  %v1799 = vunpack.c.h.b16 %v438
  %v1800 = vunpack.c.l.b16 %v439
  %v1801 = vunpack.c.l.b16 %v440
  %v1802 = vunpack.c.h.b16 %v440
  %v1803 = vunpack.c.l.b16 %v441
  %v1804 = vunpack.c.l.b16 %v442
  %v1805 = vunpack.c.h.b16 %v442
  %v1806 = vunpack.c.l.b16 %v443
  %v1807 = vunpack.c.l.b16 %v444
  %v1808 = vunpack.c.h.b16 %v444
  %v1809 = vunpack.c.l.b16 %v445
  %v1810 = vunpack.c.l.b16 %v446
  %v1811 = vunpack.c.h.b16 %v446
  %v1812 = vunpack.c.l.b16 %v447
  %v1813 = vunpack.c.l.b16 %v448
  %v1814 = vunpack.c.h.b16 %v448
  %v1815 = vunpack.c.l.b16 %v449
  %v1816 = vunpack.c.l.b16 %v450
  %v1817 = vunpack.c.h.b16 %v450
  %v1818 = vunpack.c.l.b16 %v451
  %v1819 = vunpack.c.l.b16 %v452
  %v1820 = vunpack.c.h.b16 %v452
  %v1821 = vunpack.c.l.b16 %v453
  %v1822 = vunpack.c.l.b16 %v454
  %v1823 = vunpack.c.h.b16 %v454
  %v1824 = vunpack.c.l.b16 %v455
  %v1825 = vunpack.c.l.b16 %v456
  %v1826 = vunpack.c.h.b16 %v456
  %v1827 = vunpack.c.l.b16 %v457
  %v1828 = vunpack.c.l.b16 %v458
  %v1829 = vunpack.c.h.b16 %v458
  %v1830 = vunpack.c.l.b16 %v459
  %v1831 = vunpack.c.l.b16 %v460
  %v1832 = vunpack.c.h.b16 %v460
  %v1833 = vunpack.c.l.b16 %v461
  %v1834 = vunpack.c.l.b16 %v462
  %v1835 = vunpack.c.h.b16 %v462
  %v1836 = vunpack.c.l.b16 %v463
  %v1837 = vunpack.c.l.b16 %v464
  %v1838 = vunpack.c.h.b16 %v464
  %v1839 = vunpack.c.l.b16 %v465
  %v1840 = vunpack.c.l.b16 %v466
  %v1841 = vunpack.c.h.b16 %v466
  %v1842 = vunpack.c.l.b16 %v467
  %v1843 = vunpack.c.l.b16 %v468
  %v1844 = vunpack.c.h.b16 %v468
  %v1845 = vunpack.c.l.b16 %v469
  %v1846 = vunpack.c.l.b16 %v470
  %v1847 = vunpack.c.h.b16 %v470
  %v1848 = vunpack.c.l.b16 %v471
  %v1849 = vunpack.c.l.b16 %v472
  %v1850 = vunpack.c.h.b16 %v472
  %v1851 = vunpack.c.l.b16 %v473
  %v1852 = vunpack.c.l.b16 %v474
  %v1853 = vunpack.c.h.b16 %v474
  %v1854 = vunpack.c.l.b16 %v475
  %v1855 = vunpack.c.l.b16 %v476
  %v1856 = vunpack.c.h.b16 %v476
  %v1857 = vunpack.c.l.b16 %v477
  %v1858 = vunpack.c.l.b16 %v478
  %v1859 = vunpack.c.h.b16 %v478
  %v1860 = vunpack.c.l.b16 %v479
  %v1861 = vunpack.c.l.b16 %v480
  %v1862 = vunpack.c.h.b16 %v480
  %v1863 = vunpack.c.l.b16 %v481
  %v1864 = vunpack.c.l.b16 %v482
  %v1865 = vunpack.c.h.b16 %v482
  %v1866 = vunpack.c.l.b16 %v483
  %v1867 = vunpack.c.l.b16 %v484
  %v1868 = vunpack.c.h.b16 %v484
  %v1869 = vunpack.c.l.b16 %v485
  %v1870 = vunpack.c.l.b16 %v486
  %v1871 = vunpack.c.h.b16 %v486
  %v1872 = vunpack.c.l.b16 %v487
  %v1873 = vunpack.c.l.b16 %v488
  %v1874 = vunpack.c.h.b16 %v488
  %v1875 = vunpack.c.l.b16 %v489
  %v1876 = vunpack.c.l.b16 %v490
  %v1877 = vunpack.c.h.b16 %v490
  %v1878 = vunpack.c.l.b16 %v491
  %v1879 = vunpack.c.l.b16 %v492
  %v1880 = vunpack.c.h.b16 %v492
  %v1881 = vunpack.c.l.b16 %v493
  %v1882 = vunpack.c.l.b16 %v494
  %v1883 = vunpack.c.h.b16 %v494
  %v1884 = vunpack.c.l.b16 %v495
  %v1885 = vunpack.c.l.b16 %v496
  %v1886 = vunpack.c.h.b16 %v496
  %v1887 = vunpack.c.l.b16 %v497
  %v1888 = vunpack.c.l.b16 %v498
  %v1889 = vunpack.c.h.b16 %v498
  %v1890 = vunpack.c.l.b16 %v499
  %v1891 = vunpack.c.l.b16 %v500
  %v1892 = vunpack.c.h.b16 %v500
  %v1893 = vunpack.c.l.b16 %v501
  %v1894 = vunpack.c.l.b16 %v502
  %v1895 = vunpack.c.h.b16 %v502
  %v1896 = vunpack.c.l.b16 %v503
  %v1897 = vunpack.c.l.b16 %v504
  %v1898 = vunpack.c.h.b16 %v504
  %v1899 = vunpack.c.l.b16 %v505
  %v1900 = vunpack.c.l.b16 %v506
  %v1901 = vunpack.c.h.b16 %v506
  %v1902 = vunpack.c.l.b16 %v507
  %v1903 = vunpack.c.l.b16 %v508
  %v1904 = vunpack.c.h.b16 %v508
  %v1905 = vunpack.c.l.b16 %v509
  %v1906 = vunpack.c.l.b16 %v510
  %v1907 = vunpack.c.h.b16 %v510
  %v1908 = vunpack.c.l.b16 %v511
  %v1909 = vunpack.c.l.b16 %v512
  %v1910 = vunpack.c.h.b16 %v512
  %v1911 = vunpack.c.l.b16 %v513
  %v1912 = vunpack.c.l.b16 %v514
  %v1913 = vunpack.c.h.b16 %v514
  %v1914 = vunpack.c.l.b16 %v515
  %v1915 = vunpack.c.l.b16 %v516
  %v1916 = vunpack.c.h.b16 %v516
  %v1917 = vunpack.c.l.b16 %v517
  %v1918 = vunpack.c.l.b16 %v518
  %v1919 = vunpack.c.h.b16 %v518
  %v1920 = vunpack.c.l.b16 %v519
  %v1921 = vunpack.c.l.b16 %v520
  %v1922 = vunpack.c.h.b16 %v520
  %v1923 = vunpack.c.l.b16 %v521
  %v1924 = vunpack.c.l.b16 %v522
  %v1925 = vunpack.c.h.b16 %v522
  %v1926 = vunpack.c.l.b16 %v523
  %v1927 = vunpack.c.l.b16 %v524
  %v1928 = vunpack.c.h.b16 %v524
  %v1929 = vunpack.c.l.b16 %v525
  %v1930 = vunpack.c.l.b16 %v526
  %v1931 = vunpack.c.h.b16 %v526
  %v1932 = vunpack.c.l.b16 %v527
  %v1933 = vunpack.c.l.b16 %v528
  %v1934 = vunpack.c.h.b16 %v528
  %v1935 = vunpack.c.l.b16 %v529
  %v1936 = vunpack.c.l.b16 %v530
  %v1937 = vunpack.c.h.b16 %v530
  %v1938 = vunpack.c.l.b16 %v531
  %v1939 = vunpack.c.l.b16 %v532
  %v1940 = vunpack.c.h.b16 %v532
  %v1941 = vunpack.c.l.b16 %v533
  %v1942 = vunpack.c.l.b16 %v534
  %v1943 = vunpack.c.h.b16 %v534
  %v1944 = vunpack.c.l.b16 %v535
  %v1945 = vunpack.c.l.b16 %v536
  %v1946 = vunpack.c.h.b16 %v536
  %v1947 = vunpack.c.l.b16 %v537
  %v1948 = vunpack.c.l.b16 %v538
  %v1949 = vunpack.c.h.b16 %v538
  %v1950 = vunpack.c.l.b16 %v539
  %v1951 = vunpack.c.l.b16 %v540
  %v1952 = vunpack.c.h.b16 %v540
  %v1953 = vunpack.c.l.b16 %v541
  %v1954 = vunpack.c.l.b16 %v542
  %v1955 = vunpack.c.h.b16 %v542
  %v1956 = vunpack.c.l.b16 %v543
  %v1957 = vunpack.c.l.b16 %v544
  %v1958 = vunpack.c.h.b16 %v544
  %v1959 = vunpack.c.l.b16 %v545
  %v1960 = vunpack.c.l.b16 %v546
  %v1961 = vunpack.c.h.b16 %v546
  %v1962 = vunpack.c.l.b16 %v547
  %v1963 = vunpack.c.l.b16 %v548
  %v1964 = vunpack.c.h.b16 %v548
  %v1965 = vunpack.c.l.b16 %v549
  %v1966 = vpack.c.b16 %v1201, %v1198
  %v1967 = vpack.c.b16 %v1202, %v1199
  %v1968 = vpack.c.b16 %v1203, %v1200
  %v1969 = vpack.c.b16 %v1207, %v1204
  %v1970 = vpack.c.b16 %v1208, %v1205
  %v1971 = vpack.c.b16 %v1209, %v1206
  %v1972 = vpack.c.b16 %v1213, %v1210
  %v1973 = vpack.c.b16 %v1214, %v1211
  %v1974 = vpack.c.b16 %v1215, %v1212
  %v1975 = vpack.c.b16 %v1219, %v1216
  %v1976 = vpack.c.b16 %v1220, %v1217
  %v1977 = vpack.c.b16 %v1221, %v1218
  %v1978 = vpack.c.b16 %v1225, %v1222
  %v1979 = vpack.c.b16 %v1226, %v1223
  %v1980 = vpack.c.b16 %v1227, %v1224
  %v1981 = vpack.c.b16 %v1231, %v1228
  %v1982 = vpack.c.b16 %v1232, %v1229
  %v1983 = vpack.c.b16 %v1233, %v1230
  %v1984 = vpack.c.b16 %v1237, %v1234
  %v1985 = vpack.c.b16 %v1238, %v1235
  %v1986 = vpack.c.b16 %v1239, %v1236
  %v1987 = vpack.c.b16 %v1243, %v1240
  %v1988 = vpack.c.b16 %v1244, %v1241
  %v1989 = vpack.c.b16 %v1245, %v1242
  %v1990 = vpack.c.b16 %v1249, %v1246
  %v1991 = vpack.c.b16 %v1250, %v1247
  %v1992 = vpack.c.b16 %v1251, %v1248
  %v1993 = vpack.c.b16 %v1255, %v1252
  %v1994 = vpack.c.b16 %v1256, %v1253
  %v1995 = vpack.c.b16 %v1257, %v1254
  %v1996 = vpack.c.b16 %v1261, %v1258
  %v1997 = vpack.c.b16 %v1262, %v1259
  %v1998 = vpack.c.b16 %v1263, %v1260
  %v1999 = vpack.c.b16 %v1267, %v1264
  %v2000 = vpack.c.b16 %v1268, %v1265
  %v2001 = vpack.c.b16 %v1269, %v1266
  %v2002 = vpack.c.b16 %v1273, %v1270
  %v2003 = vpack.c.b16 %v1274, %v1271
  %v2004 = vpack.c.b16 %v1275, %v1272
  %v2005 = vpack.c.b16 %v1279, %v1276
  %v2006 = vpack.c.b16 %v1280, %v1277
  %v2007 = vpack.c.b16 %v1281, %v1278
  %v2008 = vpack.c.b16 %v1285, %v1282
  %v2009 = vpack.c.b16 %v1286, %v1283
  %v2010 = vpack.c.b16 %v1287, %v1284
  %v2011 = vpack.c.b16 %v1291, %v1288
  %v2012 = vpack.c.b16 %v1292, %v1289
  %v2013 = vpack.c.b16 %v1293, %v1290
  %v2014 = vpack.c.b16 %v1297, %v1294
  %v2015 = vpack.c.b16 %v1298, %v1295
  %v2016 = vpack.c.b16 %v1299, %v1296
  %v2017 = vpack.c.b16 %v1303, %v1300
  %v2018 = vpack.c.b16 %v1304, %v1301
  %v2019 = vpack.c.b16 %v1305, %v1302
  %v2020 = vpack.c.b16 %v1309, %v1306
  %v2021 = vpack.c.b16 %v1310, %v1307
  %v2022 = vpack.c.b16 %v1311, %v1308
  %v2023 = vpack.c.b16 %v1315, %v1312
  %v2024 = vpack.c.b16 %v1316, %v1313
  %v2025 = vpack.c.b16 %v1317, %v1314
  %v2026 = vpack.c.b16 %v1321, %v1318
  %v2027 = vpack.c.b16 %v1322, %v1319
  %v2028 = vpack.c.b16 %v1323, %v1320
  %v2029 = vpack.c.b16 %v1327, %v1324
  %v2030 = vpack.c.b16 %v1328, %v1325
  %v2031 = vpack.c.b16 %v1329, %v1326
  %v2032 = vpack.c.b16 %v1333, %v1330
  %v2033 = vpack.c.b16 %v1334, %v1331
  %v2034 = vpack.c.b16 %v1335, %v1332
  %v2035 = vpack.c.b16 %v1339, %v1336
  %v2036 = vpack.c.b16 %v1340, %v1337
  %v2037 = vpack.c.b16 %v1341, %v1338
  %v2038 = vpack.c.b16 %v1345, %v1342
  %v2039 = vpack.c.b16 %v1346, %v1343
  %v2040 = vpack.c.b16 %v1347, %v1344
  %v2041 = vpack.c.b16 %v1351, %v1348
  %v2042 = vpack.c.b16 %v1352, %v1349
  %v2043 = vpack.c.b16 %v1353, %v1350
  %v2044 = vpack.c.b16 %v1357, %v1354
  %v2045 = vpack.c.b16 %v1358, %v1355
  %v2046 = vpack.c.b16 %v1359, %v1356
  %v2047 = vpack.c.b16 %v1363, %v1360
  %v2048 = vpack.c.b16 %v1364, %v1361
  %v2049 = vpack.c.b16 %v1365, %v1362
  %v2050 = vpack.c.b16 %v1369, %v1366
  %v2051 = vpack.c.b16 %v1370, %v1367
  %v2052 = vpack.c.b16 %v1371, %v1368
  %v2053 = vpack.c.b16 %v1375, %v1372
  %v2054 = vpack.c.b16 %v1376, %v1373
  %v2055 = vpack.c.b16 %v1377, %v1374
  %v2056 = vpack.c.b16 %v1381, %v1378
  %v2057 = vpack.c.b16 %v1382, %v1379
  %v2058 = vpack.c.b16 %v1383, %v1380
  %v2059 = vpack.c.b16 %v1387, %v1384
  %v2060 = vpack.c.b16 %v1388, %v1385
  %v2061 = vpack.c.b16 %v1389, %v1386
  %v2062 = vpack.c.b16 %v1393, %v1390
  %v2063 = vpack.c.b16 %v1394, %v1391
  %v2064 = vpack.c.b16 %v1395, %v1392
  %v2065 = vpack.c.b16 %v1399, %v1396
  %v2066 = vpack.c.b16 %v1400, %v1397
  %v2067 = vpack.c.b16 %v1401, %v1398
  %v2068 = vpack.c.b16 %v1405, %v1402
  %v2069 = vpack.c.b16 %v1406, %v1403
  %v2070 = vpack.c.b16 %v1407, %v1404
  %v2071 = vpack.c.b16 %v1411, %v1408
  %v2072 = vpack.c.b16 %v1412, %v1409
  %v2073 = vpack.c.b16 %v1413, %v1410
  %v2074 = vpack.c.b16 %v1417, %v1414
  %v2075 = vpack.c.b16 %v1418, %v1415
  %v2076 = vpack.c.b16 %v1419, %v1416
  %v2077 = vpack.c.b16 %v1423, %v1420
  %v2078 = vpack.c.b16 %v1424, %v1421
  %v2079 = vpack.c.b16 %v1425, %v1422
  %v2080 = vpack.c.b16 %v1429, %v1426
  %v2081 = vpack.c.b16 %v1430, %v1427
  %v2082 = vpack.c.b16 %v1431, %v1428
  %v2083 = vpack.c.b16 %v1435, %v1432
  %v2084 = vpack.c.b16 %v1436, %v1433
  %v2085 = vpack.c.b16 %v1437, %v1434
  %v2086 = vpack.c.b16 %v1441, %v1438
  %v2087 = vpack.c.b16 %v1442, %v1439
  %v2088 = vpack.c.b16 %v1443, %v1440
  %v2089 = vpack.c.b16 %v1447, %v1444
  %v2090 = vpack.c.b16 %v1448, %v1445
  %v2091 = vpack.c.b16 %v1449, %v1446
  %v2092 = vpack.c.b16 %v1453, %v1450
  %v2093 = vpack.c.b16 %v1454, %v1451
  %v2094 = vpack.c.b16 %v1455, %v1452
  %v2095 = vpack.c.b16 %v1459, %v1456
  %v2096 = vpack.c.b16 %v1460, %v1457
  %v2097 = vpack.c.b16 %v1461, %v1458
  %v2098 = vpack.c.b16 %v1465, %v1462
  %v2099 = vpack.c.b16 %v1466, %v1463
  %v2100 = vpack.c.b16 %v1467, %v1464
  %v2101 = vpack.c.b16 %v1471, %v1468
  %v2102 = vpack.c.b16 %v1472, %v1469
  %v2103 = vpack.c.b16 %v1473, %v1470
  %v2104 = vpack.c.b16 %v1477, %v1474
  %v2105 = vpack.c.b16 %v1478, %v1475
  %v2106 = vpack.c.b16 %v1479, %v1476
  %v2107 = vpack.c.b16 %v1483, %v1480
  %v2108 = vpack.c.b16 %v1484, %v1481
  %v2109 = vpack.c.b16 %v1485, %v1482
  %v2110 = vpack.c.b16 %v1489, %v1486
  %v2111 = vpack.c.b16 %v1490, %v1487
  %v2112 = vpack.c.b16 %v1491, %v1488
  %v2113 = vpack.c.b16 %v1495, %v1492
  %v2114 = vpack.c.b16 %v1496, %v1493
  %v2115 = vpack.c.b16 %v1497, %v1494
  %v2116 = vpack.c.b16 %v1501, %v1498
  %v2117 = vpack.c.b16 %v1502, %v1499
  %v2118 = vpack.c.b16 %v1503, %v1500
  %v2119 = vpack.c.b16 %v1507, %v1504
  %v2120 = vpack.c.b16 %v1508, %v1505
  %v2121 = vpack.c.b16 %v1509, %v1506
  %v2122 = vpack.c.b16 %v1513, %v1510
  %v2123 = vpack.c.b16 %v1514, %v1511
  %v2124 = vpack.c.b16 %v1515, %v1512
  %v2125 = vpack.c.b16 %v1519, %v1516
  %v2126 = vpack.c.b16 %v1520, %v1517
  %v2127 = vpack.c.b16 %v1521, %v1518
  %v2128 = vpack.c.b16 %v1525, %v1522
  %v2129 = vpack.c.b16 %v1526, %v1523
  %v2130 = vpack.c.b16 %v1527, %v1524
  %v2131 = vpack.c.b16 %v1531, %v1528
  %v2132 = vpack.c.b16 %v1532, %v1529
  %v2133 = vpack.c.b16 %v1533, %v1530
  %v2134 = vpack.c.b16 %v1537, %v1534
  %v2135 = vpack.c.b16 %v1538, %v1535
  %v2136 = vpack.c.b16 %v1539, %v1536
  %v2137 = vpack.c.b16 %v1543, %v1540
  %v2138 = vpack.c.b16 %v1544, %v1541
  %v2139 = vpack.c.b16 %v1545, %v1542
  %v2140 = vpack.c.b16 %v1549, %v1546
  %v2141 = vpack.c.b16 %v1550, %v1547
  %v2142 = vpack.c.b16 %v1551, %v1548
  %v2143 = vpack.c.b16 %v1555, %v1552
  %v2144 = vpack.c.b16 %v1556, %v1553
  %v2145 = vpack.c.b16 %v1557, %v1554
  %v2146 = vpack.c.b16 %v1561, %v1558
  %v2147 = vpack.c.b16 %v1562, %v1559
  %v2148 = vpack.c.b16 %v1563, %v1560
  %v2149 = vpack.c.b16 %v1567, %v1564
  %v2150 = vpack.c.b16 %v1568, %v1565
  %v2151 = vpack.c.b16 %v1569, %v1566
  %v2152 = vpack.c.b16 %v1573, %v1570
  %v2153 = vpack.c.b16 %v1574, %v1571
  %v2154 = vpack.c.b16 %v1575, %v1572
  %v2155 = vpack.c.b16 %v1579, %v1576
  %v2156 = vpack.c.b16 %v1580, %v1577
  %v2157 = vpack.c.b16 %v1581, %v1578
  %v2158 = vpack.c.b16 %v1585, %v1582
  %v2159 = vpack.c.b16 %v1586, %v1583
  %v2160 = vpack.c.b16 %v1587, %v1584
  %v2161 = vpack.c.b16 %v1591, %v1588
  %v2162 = vpack.c.b16 %v1592, %v1589
  %v2163 = vpack.c.b16 %v1593, %v1590
  %v2164 = vpack.c.b16 %v1597, %v1594
  %v2165 = vpack.c.b16 %v1598, %v1595
  %v2166 = vpack.c.b16 %v1599, %v1596
  %v2167 = vpack.c.b16 %v1603, %v1600
  %v2168 = vpack.c.b16 %v1604, %v1601
  %v2169 = vpack.c.b16 %v1605, %v1602
  %v2170 = vpack.c.b16 %v1609, %v1606
  %v2171 = vpack.c.b16 %v1610, %v1607
  %v2172 = vpack.c.b16 %v1611, %v1608
  %v2173 = vpack.c.b16 %v1615, %v1612
  %v2174 = vpack.c.b16 %v1616, %v1613
  %v2175 = vpack.c.b16 %v1617, %v1614
  %v2176 = vpack.c.b16 %v1621, %v1618
  %v2177 = vpack.c.b16 %v1622, %v1619
  %v2178 = vpack.c.b16 %v1623, %v1620
  %v2179 = vpack.c.b16 %v1627, %v1624
  %v2180 = vpack.c.b16 %v1628, %v1625
  %v2181 = vpack.c.b16 %v1629, %v1626
  %v2182 = vpack.c.b16 %v1633, %v1630
  %v2183 = vpack.c.b16 %v1634, %v1631
  %v2184 = vpack.c.b16 %v1635, %v1632
  %v2185 = vpack.c.b16 %v1639, %v1636
  %v2186 = vpack.c.b16 %v1640, %v1637
  %v2187 = vpack.c.b16 %v1641, %v1638
  %v2188 = vpack.c.b16 %v1645, %v1642
  %v2189 = vpack.c.b16 %v1646, %v1643
  %v2190 = vpack.c.b16 %v1647, %v1644
  %v2191 = vpack.c.b16 %v1651, %v1648
  %v2192 = vpack.c.b16 %v1652, %v1649
  %v2193 = vpack.c.b16 %v1653, %v1650
  %v2194 = vpack.c.b16 %v1657, %v1654
  %v2195 = vpack.c.b16 %v1658, %v1655
  %v2196 = vpack.c.b16 %v1659, %v1656
  %v2197 = vpack.c.b16 %v1663, %v1660
  %v2198 = vpack.c.b16 %v1664, %v1661
  %v2199 = vpack.c.b16 %v1665, %v1662
  %v2200 = vpack.c.b16 %v1669, %v1666
  %v2201 = vpack.c.b16 %v1670, %v1667
  %v2202 = vpack.c.b16 %v1671, %v1668
  %v2203 = vpack.c.b16 %v1675, %v1672
  %v2204 = vpack.c.b16 %v1676, %v1673
  %v2205 = vpack.c.b16 %v1677, %v1674
  %v2206 = vpack.c.b16 %v1681, %v1678
  %v2207 = vpack.c.b16 %v1682, %v1679
  %v2208 = vpack.c.b16 %v1683, %v1680
  %v2209 = vpack.c.b16 %v1687, %v1684
  %v2210 = vpack.c.b16 %v1688, %v1685
  %v2211 = vpack.c.b16 %v1689, %v1686
  %v2212 = vpack.c.b16 %v1693, %v1690
  %v2213 = vpack.c.b16 %v1694, %v1691
  %v2214 = vpack.c.b16 %v1695, %v1692
  %v2215 = vpack.c.b16 %v1699, %v1696
  %v2216 = vpack.c.b16 %v1700, %v1697
  %v2217 = vpack.c.b16 %v1701, %v1698
  %v2218 = vpack.c.b16 %v1705, %v1702
  %v2219 = vpack.c.b16 %v1706, %v1703
  %v2220 = vpack.c.b16 %v1707, %v1704
  %v2221 = vpack.c.b16 %v1711, %v1708
  %v2222 = vpack.c.b16 %v1712, %v1709
  %v2223 = vpack.c.b16 %v1713, %v1710
  %v2224 = vpack.c.b16 %v1717, %v1714
  %v2225 = vpack.c.b16 %v1718, %v1715
  %v2226 = vpack.c.b16 %v1719, %v1716
  %v2227 = vpack.c.b16 %v1723, %v1720
  %v2228 = vpack.c.b16 %v1724, %v1721
  %v2229 = vpack.c.b16 %v1725, %v1722
  %v2230 = vpack.c.b16 %v1729, %v1726
  %v2231 = vpack.c.b16 %v1730, %v1727
  %v2232 = vpack.c.b16 %v1731, %v1728
  %v2233 = vpack.c.b16 %v1735, %v1732
  %v2234 = vpack.c.b16 %v1736, %v1733
  %v2235 = vpack.c.b16 %v1737, %v1734
  %v2236 = vpack.c.b16 %v1741, %v1738
  %v2237 = vpack.c.b16 %v1742, %v1739
  %v2238 = vpack.c.b16 %v1743, %v1740
  %v2239 = vpack.c.b16 %v1747, %v1744
  %v2240 = vpack.c.b16 %v1748, %v1745
  %v2241 = vpack.c.b16 %v1749, %v1746
  %v2242 = vpack.c.b16 %v1753, %v1750
  %v2243 = vpack.c.b16 %v1754, %v1751
  %v2244 = vpack.c.b16 %v1755, %v1752
  %v2245 = vpack.c.b16 %v1759, %v1756
  %v2246 = vpack.c.b16 %v1760, %v1757
  %v2247 = vpack.c.b16 %v1761, %v1758
  %v2248 = vpack.c.b16 %v1765, %v1762
  %v2249 = vpack.c.b16 %v1766, %v1763
  %v2250 = vpack.c.b16 %v1767, %v1764
  %v2251 = vpack.c.b16 %v1771, %v1768
  %v2252 = vpack.c.b16 %v1772, %v1769
  %v2253 = vpack.c.b16 %v1773, %v1770
  %v2254 = vpack.c.b16 %v1777, %v1774
  %v2255 = vpack.c.b16 %v1778, %v1775
  %v2256 = vpack.c.b16 %v1779, %v1776
  %v2257 = vpack.c.b16 %v1783, %v1780
  %v2258 = vpack.c.b16 %v1784, %v1781
  %v2259 = vpack.c.b16 %v1785, %v1782
  %v2260 = vpack.c.b16 %v1789, %v1786
  %v2261 = vpack.c.b16 %v1790, %v1787
  %v2262 = vpack.c.b16 %v1791, %v1788
  %v2263 = vpack.c.b16 %v1795, %v1792
  %v2264 = vpack.c.b16 %v1796, %v1793
  %v2265 = vpack.c.b16 %v1797, %v1794
  %v2266 = vpack.c.b16 %v1801, %v1798
  %v2267 = vpack.c.b16 %v1802, %v1799
  %v2268 = vpack.c.b16 %v1803, %v1800
  %v2269 = vpack.c.b16 %v1807, %v1804
  %v2270 = vpack.c.b16 %v1808, %v1805
  %v2271 = vpack.c.b16 %v1809, %v1806
  %v2272 = vpack.c.b16 %v1813, %v1810
  %v2273 = vpack.c.b16 %v1814, %v1811
  %v2274 = vpack.c.b16 %v1815, %v1812
  %v2275 = vpack.c.b16 %v1819, %v1816
  %v2276 = vpack.c.b16 %v1820, %v1817
  %v2277 = vpack.c.b16 %v1821, %v1818
  %v2278 = vpack.c.b16 %v1825, %v1822
  %v2279 = vpack.c.b16 %v1826, %v1823
  %v2280 = vpack.c.b16 %v1827, %v1824
  %v2281 = vpack.c.b16 %v1831, %v1828
  %v2282 = vpack.c.b16 %v1832, %v1829
  %v2283 = vpack.c.b16 %v1833, %v1830
  %v2284 = vpack.c.b16 %v1837, %v1834
  %v2285 = vpack.c.b16 %v1838, %v1835
  %v2286 = vpack.c.b16 %v1839, %v1836
  %v2287 = vpack.c.b16 %v1843, %v1840
  %v2288 = vpack.c.b16 %v1844, %v1841
  %v2289 = vpack.c.b16 %v1845, %v1842
  %v2290 = vpack.c.b16 %v1849, %v1846
  %v2291 = vpack.c.b16 %v1850, %v1847
  %v2292 = vpack.c.b16 %v1851, %v1848
  %v2293 = vpack.c.b16 %v1855, %v1852
  %v2294 = vpack.c.b16 %v1856, %v1853
  %v2295 = vpack.c.b16 %v1857, %v1854
  %v2296 = vpack.c.b16 %v1861, %v1858
  %v2297 = vpack.c.b16 %v1862, %v1859
  %v2298 = vpack.c.b16 %v1863, %v1860
  %v2299 = vpack.c.b16 %v1867, %v1864
  %v2300 = vpack.c.b16 %v1868, %v1865
  %v2301 = vpack.c.b16 %v1869, %v1866
  %v2302 = vpack.c.b16 %v1873, %v1870
  %v2303 = vpack.c.b16 %v1874, %v1871
  %v2304 = vpack.c.b16 %v1875, %v1872
  %v2305 = vpack.c.b16 %v1879, %v1876
  %v2306 = vpack.c.b16 %v1880, %v1877
  %v2307 = vpack.c.b16 %v1881, %v1878
  %v2308 = vpack.c.b16 %v1885, %v1882
  %v2309 = vpack.c.b16 %v1886, %v1883
  %v2310 = vpack.c.b16 %v1887, %v1884
  %v2311 = vpack.c.b16 %v1891, %v1888
  %v2312 = vpack.c.b16 %v1892, %v1889
  %v2313 = vpack.c.b16 %v1893, %v1890
  %v2314 = vpack.c.b16 %v1897, %v1894
  %v2315 = vpack.c.b16 %v1898, %v1895
  %v2316 = vpack.c.b16 %v1899, %v1896
  %v2317 = vpack.c.b16 %v1903, %v1900
  %v2318 = vpack.c.b16 %v1904, %v1901
  %v2319 = vpack.c.b16 %v1905, %v1902
  %v2320 = vpack.c.b16 %v1909, %v1906
  %v2321 = vpack.c.b16 %v1910, %v1907
  %v2322 = vpack.c.b16 %v1911, %v1908
  %v2323 = vpack.c.b16 %v1915, %v1912
  %v2324 = vpack.c.b16 %v1916, %v1913
  %v2325 = vpack.c.b16 %v1917, %v1914
  %v2326 = vpack.c.b16 %v1921, %v1918
  %v2327 = vpack.c.b16 %v1922, %v1919
  %v2328 = vpack.c.b16 %v1923, %v1920
  %v2329 = vpack.c.b16 %v1927, %v1924
  %v2330 = vpack.c.b16 %v1928, %v1925
  %v2331 = vpack.c.b16 %v1929, %v1926
  %v2332 = vpack.c.b16 %v1933, %v1930
  %v2333 = vpack.c.b16 %v1934, %v1931
  %v2334 = vpack.c.b16 %v1935, %v1932
  %v2335 = vpack.c.b16 %v1939, %v1936
  %v2336 = vpack.c.b16 %v1940, %v1937
  %v2337 = vpack.c.b16 %v1941, %v1938
  %v2338 = vpack.c.b16 %v1945, %v1942
  %v2339 = vpack.c.b16 %v1946, %v1943
  %v2340 = vpack.c.b16 %v1947, %v1944
  %v2341 = vpack.c.b16 %v1951, %v1948
  %v2342 = vpack.c.b16 %v1952, %v1949
  %v2343 = vpack.c.b16 %v1953, %v1950
  %v2344 = vpack.c.b16 %v1957, %v1954
  %v2345 = vpack.c.b16 %v1958, %v1955
  %v2346 = vpack.c.b16 %v1959, %v1956
  %v2347 = vpack.c.b16 %v1963, %v1960
  %v2348 = vpack.c.b16 %v1964, %v1961
  %v2349 = vpack.c.b16 %v1965, %v1962
  %2734 = vmatpush.bf16.msra.mxu0 %v1987
  %2735 = vmatpush.bf16.msra.mxu0 %v1984
  %2736 = vmatpush.bf16.msra.mxu0 %v1981
  %2737 = vmatpush.bf16.msra.mxu0 %v1978
  %2738 = vmatpush.bf16.msra.mxu0 %v1975
  %2739 = vmatpush.bf16.msra.mxu0 %v1972
  %2740 = vmatpush.bf16.msra.mxu0 %v1969
  %2741 = vmatpush.bf16.msra.mxu0 %v1966
  %2742 = vmatmul.bf16.gmra.mxu0 %v622
  %v2743 = vpop.f32.mrf.mxu0
  %v2744 = vadd.f32 0.0, %v2743
  %v2745 = vpop.f32.mrf.mxu0
  %v2746 = vadd.f32 0.0, %v2745
  %2747 = vmatmul.bf16.gmra.mxu0 %v638
  %v2748 = vpop.f32.mrf.mxu0
  %v2749 = vadd.f32 0.0, %v2748
  %v2750 = vpop.f32.mrf.mxu0
  %2751 = vdwg.mxu0
  %2752 = vmatpush.bf16.msra.mxu0 %v2011
  %2753 = vmatpush.bf16.msra.mxu0 %v2008
  %2754 = vmatpush.bf16.msra.mxu0 %v2005
  %2755 = vmatpush.bf16.msra.mxu0 %v2002
  %2756 = vmatpush.bf16.msra.mxu0 %v1999
  %2757 = vmatpush.bf16.msra.mxu0 %v1996
  %2758 = vmatpush.bf16.msra.mxu0 %v1993
  %2759 = vmatpush.bf16.msra.mxu0 %v1990
  %2760 = vmatmul.bf16.gmra.mxu0 %v623
  %v2761 = vpop.f32.mrf.mxu0
  %v2762 = vadd.f32 %v2744, %v2761
  %v2763 = vpop.f32.mrf.mxu0
  %v2764 = vadd.f32 %v2746, %v2763
  %2765 = vmatmul.bf16.gmra.mxu0 %v639
  %v2766 = vpop.f32.mrf.mxu0
  %v2767 = vadd.f32 %v2749, %v2766
  %v2768 = vpop.f32.mrf.mxu0
  %2769 = vdwg.mxu0
  %2770 = vmatpush.bf16.msra.mxu0 %v2035
  %2771 = vmatpush.bf16.msra.mxu0 %v2032
  %2772 = vmatpush.bf16.msra.mxu0 %v2029
  %2773 = vmatpush.bf16.msra.mxu0 %v2026
  %2774 = vmatpush.bf16.msra.mxu0 %v2023
  %2775 = vmatpush.bf16.msra.mxu0 %v2020
  %2776 = vmatpush.bf16.msra.mxu0 %v2017
  %2777 = vmatpush.bf16.msra.mxu0 %v2014
  %2778 = vmatmul.bf16.gmra.mxu0 %v624
  %v2779 = vpop.f32.mrf.mxu0
  %v2780 = vadd.f32 %v2762, %v2779
  %v2781 = vpop.f32.mrf.mxu0
  %v2782 = vadd.f32 %v2764, %v2781
  %2783 = vmatmul.bf16.gmra.mxu0 %v640
  %v2784 = vpop.f32.mrf.mxu0
  %v2785 = vadd.f32 %v2767, %v2784
  %v2786 = vpop.f32.mrf.mxu0
  %2787 = vdwg.mxu0
  %2788 = vmatpush.bf16.msra.mxu0 %v2059
  %2789 = vmatpush.bf16.msra.mxu0 %v2056
  %2790 = vmatpush.bf16.msra.mxu0 %v2053
  %2791 = vmatpush.bf16.msra.mxu0 %v2050
  %2792 = vmatpush.bf16.msra.mxu0 %v2047
  %2793 = vmatpush.bf16.msra.mxu0 %v2044
  %2794 = vmatpush.bf16.msra.mxu0 %v2041
  %2795 = vmatpush.bf16.msra.mxu0 %v2038
  %2796 = vmatmul.bf16.gmra.mxu0 %v625
  %v2797 = vpop.f32.mrf.mxu0
  %v2798 = vadd.f32 %v2780, %v2797
  %v2799 = vpop.f32.mrf.mxu0
  %v2800 = vadd.f32 %v2782, %v2799
  %2801 = vmatmul.bf16.gmra.mxu0 %v641
  %v2802 = vpop.f32.mrf.mxu0
  %v2803 = vadd.f32 %v2785, %v2802
  %v2804 = vpop.f32.mrf.mxu0
  %2805 = vdwg.mxu0
  %2806 = vmatpush.bf16.msra.mxu0 %v2083
  %2807 = vmatpush.bf16.msra.mxu0 %v2080
  %2808 = vmatpush.bf16.msra.mxu0 %v2077
  %2809 = vmatpush.bf16.msra.mxu0 %v2074
  %2810 = vmatpush.bf16.msra.mxu0 %v2071
  %2811 = vmatpush.bf16.msra.mxu0 %v2068
  %2812 = vmatpush.bf16.msra.mxu0 %v2065
  %2813 = vmatpush.bf16.msra.mxu0 %v2062
  %2814 = vmatmul.bf16.gmra.mxu0 %v626
  %v2815 = vpop.f32.mrf.mxu0
  %v2816 = vadd.f32 %v2798, %v2815
  %v2817 = vpop.f32.mrf.mxu0
  %v2818 = vadd.f32 %v2800, %v2817
  %2819 = vmatmul.bf16.gmra.mxu0 %v642
  %v2820 = vpop.f32.mrf.mxu0
  %v2821 = vadd.f32 %v2803, %v2820
  %v2822 = vpop.f32.mrf.mxu0
  %2823 = vdwg.mxu0
  %2824 = vmatpush.bf16.msra.mxu0 %v2107
  %2825 = vmatpush.bf16.msra.mxu0 %v2104
  %2826 = vmatpush.bf16.msra.mxu0 %v2101
  %2827 = vmatpush.bf16.msra.mxu0 %v2098
  %2828 = vmatpush.bf16.msra.mxu0 %v2095
  %2829 = vmatpush.bf16.msra.mxu0 %v2092
  %2830 = vmatpush.bf16.msra.mxu0 %v2089
  %2831 = vmatpush.bf16.msra.mxu0 %v2086
  %2832 = vmatmul.bf16.gmra.mxu0 %v627
  %v2833 = vpop.f32.mrf.mxu0
  %v2834 = vadd.f32 %v2816, %v2833
  %v2835 = vpop.f32.mrf.mxu0
  %v2836 = vadd.f32 %v2818, %v2835
  %2837 = vmatmul.bf16.gmra.mxu0 %v643
  %v2838 = vpop.f32.mrf.mxu0
  %v2839 = vadd.f32 %v2821, %v2838
  %v2840 = vpop.f32.mrf.mxu0
  %2841 = vdwg.mxu0
  %2842 = vmatpush.bf16.msra.mxu0 %v2131
  %2843 = vmatpush.bf16.msra.mxu0 %v2128
  %2844 = vmatpush.bf16.msra.mxu0 %v2125
  %2845 = vmatpush.bf16.msra.mxu0 %v2122
  %2846 = vmatpush.bf16.msra.mxu0 %v2119
  %2847 = vmatpush.bf16.msra.mxu0 %v2116
  %2848 = vmatpush.bf16.msra.mxu0 %v2113
  %2849 = vmatpush.bf16.msra.mxu0 %v2110
  %2850 = vmatmul.bf16.gmra.mxu0 %v628
  %v2851 = vpop.f32.mrf.mxu0
  %v2852 = vadd.f32 %v2834, %v2851
  %v2853 = vpop.f32.mrf.mxu0
  %v2854 = vadd.f32 %v2836, %v2853
  %2855 = vmatmul.bf16.gmra.mxu0 %v644
  %v2856 = vpop.f32.mrf.mxu0
  %v2857 = vadd.f32 %v2839, %v2856
  %v2858 = vpop.f32.mrf.mxu0
  %2859 = vdwg.mxu0
  %2860 = vmatpush.bf16.msra.mxu0 %v2155
  %2861 = vmatpush.bf16.msra.mxu0 %v2152
  %2862 = vmatpush.bf16.msra.mxu0 %v2149
  %2863 = vmatpush.bf16.msra.mxu0 %v2146
  %2864 = vmatpush.bf16.msra.mxu0 %v2143
  %2865 = vmatpush.bf16.msra.mxu0 %v2140
  %2866 = vmatpush.bf16.msra.mxu0 %v2137
  %2867 = vmatpush.bf16.msra.mxu0 %v2134
  %2868 = vmatmul.bf16.gmra.mxu0 %v629
  %v2869 = vpop.f32.mrf.mxu0
  %v2870 = vadd.f32 %v2852, %v2869
  %v2871 = vpop.f32.mrf.mxu0
  %v2872 = vadd.f32 %v2854, %v2871
  %2873 = vmatmul.bf16.gmra.mxu0 %v645
  %v2874 = vpop.f32.mrf.mxu0
  %v2875 = vadd.f32 %v2857, %v2874
  %v2876 = vpop.f32.mrf.mxu0
  %2877 = vdwg.mxu0
  %2878 = vmatpush.bf16.msra.mxu0 %v2179
  %2879 = vmatpush.bf16.msra.mxu0 %v2176
  %2880 = vmatpush.bf16.msra.mxu0 %v2173
  %2881 = vmatpush.bf16.msra.mxu0 %v2170
  %2882 = vmatpush.bf16.msra.mxu0 %v2167
  %2883 = vmatpush.bf16.msra.mxu0 %v2164
  %2884 = vmatpush.bf16.msra.mxu0 %v2161
  %2885 = vmatpush.bf16.msra.mxu0 %v2158
  %2886 = vmatmul.bf16.gmra.mxu0 %v630
  %v2887 = vpop.f32.mrf.mxu0
  %v2888 = vadd.f32 %v2870, %v2887
  %v2889 = vpop.f32.mrf.mxu0
  %v2890 = vadd.f32 %v2872, %v2889
  %2891 = vmatmul.bf16.gmra.mxu0 %v646
  %v2892 = vpop.f32.mrf.mxu0
  %v2893 = vadd.f32 %v2875, %v2892
  %v2894 = vpop.f32.mrf.mxu0
  %2895 = vdwg.mxu0
  %2896 = vmatpush.bf16.msra.mxu0 %v2203
  %2897 = vmatpush.bf16.msra.mxu0 %v2200
  %2898 = vmatpush.bf16.msra.mxu0 %v2197
  %2899 = vmatpush.bf16.msra.mxu0 %v2194
  %2900 = vmatpush.bf16.msra.mxu0 %v2191
  %2901 = vmatpush.bf16.msra.mxu0 %v2188
  %2902 = vmatpush.bf16.msra.mxu0 %v2185
  %2903 = vmatpush.bf16.msra.mxu0 %v2182
  %2904 = vmatmul.bf16.gmra.mxu0 %v631
  %v2905 = vpop.f32.mrf.mxu0
  %v2906 = vadd.f32 %v2888, %v2905
  %v2907 = vpop.f32.mrf.mxu0
  %v2908 = vadd.f32 %v2890, %v2907
  %2909 = vmatmul.bf16.gmra.mxu0 %v647
  %v2910 = vpop.f32.mrf.mxu0
  %v2911 = vadd.f32 %v2893, %v2910
  %v2912 = vpop.f32.mrf.mxu0
  %2913 = vdwg.mxu0
  %2914 = vmatpush.bf16.msra.mxu0 %v2227
  %2915 = vmatpush.bf16.msra.mxu0 %v2224
  %2916 = vmatpush.bf16.msra.mxu0 %v2221
  %2917 = vmatpush.bf16.msra.mxu0 %v2218
  %2918 = vmatpush.bf16.msra.mxu0 %v2215
  %2919 = vmatpush.bf16.msra.mxu0 %v2212
  %2920 = vmatpush.bf16.msra.mxu0 %v2209
  %2921 = vmatpush.bf16.msra.mxu0 %v2206
  %2922 = vmatmul.bf16.gmra.mxu0 %v632
  %v2923 = vpop.f32.mrf.mxu0
  %v2924 = vadd.f32 %v2906, %v2923
  %v2925 = vpop.f32.mrf.mxu0
  %v2926 = vadd.f32 %v2908, %v2925
  %2927 = vmatmul.bf16.gmra.mxu0 %v648
  %v2928 = vpop.f32.mrf.mxu0
  %v2929 = vadd.f32 %v2911, %v2928
  %v2930 = vpop.f32.mrf.mxu0
  %2931 = vdwg.mxu0
  %2932 = vmatpush.bf16.msra.mxu0 %v2251
  %2933 = vmatpush.bf16.msra.mxu0 %v2248
  %2934 = vmatpush.bf16.msra.mxu0 %v2245
  %2935 = vmatpush.bf16.msra.mxu0 %v2242
  %2936 = vmatpush.bf16.msra.mxu0 %v2239
  %2937 = vmatpush.bf16.msra.mxu0 %v2236
  %2938 = vmatpush.bf16.msra.mxu0 %v2233
  %2939 = vmatpush.bf16.msra.mxu0 %v2230
  %2940 = vmatmul.bf16.gmra.mxu0 %v633
  %v2941 = vpop.f32.mrf.mxu0
  %v2942 = vadd.f32 %v2924, %v2941
  %v2943 = vpop.f32.mrf.mxu0
  %v2944 = vadd.f32 %v2926, %v2943
  %2945 = vmatmul.bf16.gmra.mxu0 %v649
  %v2946 = vpop.f32.mrf.mxu0
  %v2947 = vadd.f32 %v2929, %v2946
  %v2948 = vpop.f32.mrf.mxu0
  %2949 = vdwg.mxu0
  %2950 = vmatpush.bf16.msra.mxu0 %v2275
  %2951 = vmatpush.bf16.msra.mxu0 %v2272
  %2952 = vmatpush.bf16.msra.mxu0 %v2269
  %2953 = vmatpush.bf16.msra.mxu0 %v2266
  %2954 = vmatpush.bf16.msra.mxu0 %v2263
  %2955 = vmatpush.bf16.msra.mxu0 %v2260
  %2956 = vmatpush.bf16.msra.mxu0 %v2257
  %2957 = vmatpush.bf16.msra.mxu0 %v2254
  %2958 = vmatmul.bf16.gmra.mxu0 %v634
  %v2959 = vpop.f32.mrf.mxu0
  %v2960 = vadd.f32 %v2942, %v2959
  %v2961 = vpop.f32.mrf.mxu0
  %v2962 = vadd.f32 %v2944, %v2961
  %2963 = vmatmul.bf16.gmra.mxu0 %v650
  %v2964 = vpop.f32.mrf.mxu0
  %v2965 = vadd.f32 %v2947, %v2964
  %v2966 = vpop.f32.mrf.mxu0
  %2967 = vdwg.mxu0
  %2968 = vmatpush.bf16.msra.mxu0 %v2299
  %2969 = vmatpush.bf16.msra.mxu0 %v2296
  %2970 = vmatpush.bf16.msra.mxu0 %v2293
  %2971 = vmatpush.bf16.msra.mxu0 %v2290
  %2972 = vmatpush.bf16.msra.mxu0 %v2287
  %2973 = vmatpush.bf16.msra.mxu0 %v2284
  %2974 = vmatpush.bf16.msra.mxu0 %v2281
  %2975 = vmatpush.bf16.msra.mxu0 %v2278
  %2976 = vmatmul.bf16.gmra.mxu0 %v635
  %v2977 = vpop.f32.mrf.mxu0
  %v2978 = vadd.f32 %v2960, %v2977
  %v2979 = vpop.f32.mrf.mxu0
  %v2980 = vadd.f32 %v2962, %v2979
  %2981 = vmatmul.bf16.gmra.mxu0 %v651
  %v2982 = vpop.f32.mrf.mxu0
  %v2983 = vadd.f32 %v2965, %v2982
  %v2984 = vpop.f32.mrf.mxu0
  %2985 = vdwg.mxu0
  %2986 = vmatpush.bf16.msra.mxu0 %v2323
  %2987 = vmatpush.bf16.msra.mxu0 %v2320
  %2988 = vmatpush.bf16.msra.mxu0 %v2317
  %2989 = vmatpush.bf16.msra.mxu0 %v2314
  %2990 = vmatpush.bf16.msra.mxu0 %v2311
  %2991 = vmatpush.bf16.msra.mxu0 %v2308
  %2992 = vmatpush.bf16.msra.mxu0 %v2305
  %2993 = vmatpush.bf16.msra.mxu0 %v2302
  %2994 = vmatmul.bf16.gmra.mxu0 %v636
  %v2995 = vpop.f32.mrf.mxu0
  %v2996 = vadd.f32 %v2978, %v2995
  %v2997 = vpop.f32.mrf.mxu0
  %v2998 = vadd.f32 %v2980, %v2997
  %2999 = vmatmul.bf16.gmra.mxu0 %v652
  %v3000 = vpop.f32.mrf.mxu0
  %v3001 = vadd.f32 %v2983, %v3000
  %v3002 = vpop.f32.mrf.mxu0
  %3003 = vdwg.mxu0
  %3004 = vmatpush.bf16.msra.mxu0 %v2347
  %3005 = vmatpush.bf16.msra.mxu0 %v2344
  %3006 = vmatpush.bf16.msra.mxu0 %v2341
  %3007 = vmatpush.bf16.msra.mxu0 %v2338
  %3008 = vmatpush.bf16.msra.mxu0 %v2335
  %3009 = vmatpush.bf16.msra.mxu0 %v2332
  %3010 = vmatpush.bf16.msra.mxu0 %v2329
  %3011 = vmatpush.bf16.msra.mxu0 %v2326
  %3012 = vmatmul.bf16.gmra.mxu0 %v637
  %v3013 = vpop.f32.mrf.mxu0
  %v3014 = vadd.f32 %v2996, %v3013
  %v3015 = vpop.f32.mrf.mxu0
  %v3016 = vadd.f32 %v2998, %v3015
  %3017 = vmatmul.bf16.gmra.mxu0 %v653
  %v3018 = vpop.f32.mrf.mxu0
  %v3019 = vadd.f32 %v3001, %v3018
  %v3020 = vpop.f32.mrf.mxu0
  %3021 = vdwg.mxu0
  %3022 = vmatpush.bf16.msra.mxu0 %v1988
  %3023 = vmatpush.bf16.msra.mxu0 %v1985
  %3024 = vmatpush.bf16.msra.mxu0 %v1982
  %3025 = vmatpush.bf16.msra.mxu0 %v1979
  %3026 = vmatpush.bf16.msra.mxu0 %v1976
  %3027 = vmatpush.bf16.msra.mxu0 %v1973
  %3028 = vmatpush.bf16.msra.mxu0 %v1970
  %3029 = vmatpush.bf16.msra.mxu0 %v1967
  %3030 = vmatmul.bf16.gmra.mxu0 %v622
  %v3031 = vpop.f32.mrf.mxu0
  %v3032 = vadd.f32 0.0, %v3031
  %v3033 = vpop.f32.mrf.mxu0
  %v3034 = vadd.f32 0.0, %v3033
  %3035 = vmatmul.bf16.gmra.mxu0 %v638
  %v3036 = vpop.f32.mrf.mxu0
  %v3037 = vadd.f32 0.0, %v3036
  %v3038 = vpop.f32.mrf.mxu0
  %3039 = vdwg.mxu0
  %3040 = vmatpush.bf16.msra.mxu0 %v2012
  %3041 = vmatpush.bf16.msra.mxu0 %v2009
  %3042 = vmatpush.bf16.msra.mxu0 %v2006
  %3043 = vmatpush.bf16.msra.mxu0 %v2003
  %3044 = vmatpush.bf16.msra.mxu0 %v2000
  %3045 = vmatpush.bf16.msra.mxu0 %v1997
  %3046 = vmatpush.bf16.msra.mxu0 %v1994
  %3047 = vmatpush.bf16.msra.mxu0 %v1991
  %3048 = vmatmul.bf16.gmra.mxu0 %v623
  %v3049 = vpop.f32.mrf.mxu0
  %v3050 = vadd.f32 %v3032, %v3049
  %v3051 = vpop.f32.mrf.mxu0
  %v3052 = vadd.f32 %v3034, %v3051
  %3053 = vmatmul.bf16.gmra.mxu0 %v639
  %v3054 = vpop.f32.mrf.mxu0
  %v3055 = vadd.f32 %v3037, %v3054
  %v3056 = vpop.f32.mrf.mxu0
  %3057 = vdwg.mxu0
  %3058 = vmatpush.bf16.msra.mxu0 %v2036
  %3059 = vmatpush.bf16.msra.mxu0 %v2033
  %3060 = vmatpush.bf16.msra.mxu0 %v2030
  %3061 = vmatpush.bf16.msra.mxu0 %v2027
  %3062 = vmatpush.bf16.msra.mxu0 %v2024
  %3063 = vmatpush.bf16.msra.mxu0 %v2021
  %3064 = vmatpush.bf16.msra.mxu0 %v2018
  %3065 = vmatpush.bf16.msra.mxu0 %v2015
  %3066 = vmatmul.bf16.gmra.mxu0 %v624
  %v3067 = vpop.f32.mrf.mxu0
  %v3068 = vadd.f32 %v3050, %v3067
  %v3069 = vpop.f32.mrf.mxu0
  %v3070 = vadd.f32 %v3052, %v3069
  %3071 = vmatmul.bf16.gmra.mxu0 %v640
  %v3072 = vpop.f32.mrf.mxu0
  %v3073 = vadd.f32 %v3055, %v3072
  %v3074 = vpop.f32.mrf.mxu0
  %3075 = vdwg.mxu0
  %3076 = vmatpush.bf16.msra.mxu0 %v2060
  %3077 = vmatpush.bf16.msra.mxu0 %v2057
  %3078 = vmatpush.bf16.msra.mxu0 %v2054
  %3079 = vmatpush.bf16.msra.mxu0 %v2051
  %3080 = vmatpush.bf16.msra.mxu0 %v2048
  %3081 = vmatpush.bf16.msra.mxu0 %v2045
  %3082 = vmatpush.bf16.msra.mxu0 %v2042
  %3083 = vmatpush.bf16.msra.mxu0 %v2039
  %3084 = vmatmul.bf16.gmra.mxu0 %v625
  %v3085 = vpop.f32.mrf.mxu0
  %v3086 = vadd.f32 %v3068, %v3085
  %v3087 = vpop.f32.mrf.mxu0
  %v3088 = vadd.f32 %v3070, %v3087
  %3089 = vmatmul.bf16.gmra.mxu0 %v641
  %v3090 = vpop.f32.mrf.mxu0
  %v3091 = vadd.f32 %v3073, %v3090
  %v3092 = vpop.f32.mrf.mxu0
  %3093 = vdwg.mxu0
  %3094 = vmatpush.bf16.msra.mxu0 %v2084
  %3095 = vmatpush.bf16.msra.mxu0 %v2081
  %3096 = vmatpush.bf16.msra.mxu0 %v2078
  %3097 = vmatpush.bf16.msra.mxu0 %v2075
  %3098 = vmatpush.bf16.msra.mxu0 %v2072
  %3099 = vmatpush.bf16.msra.mxu0 %v2069
  %3100 = vmatpush.bf16.msra.mxu0 %v2066
  %3101 = vmatpush.bf16.msra.mxu0 %v2063
  %3102 = vmatmul.bf16.gmra.mxu0 %v626
  %v3103 = vpop.f32.mrf.mxu0
  %v3104 = vadd.f32 %v3086, %v3103
  %v3105 = vpop.f32.mrf.mxu0
  %v3106 = vadd.f32 %v3088, %v3105
  %3107 = vmatmul.bf16.gmra.mxu0 %v642
  %v3108 = vpop.f32.mrf.mxu0
  %v3109 = vadd.f32 %v3091, %v3108
  %v3110 = vpop.f32.mrf.mxu0
  %3111 = vdwg.mxu0
  %3112 = vmatpush.bf16.msra.mxu0 %v2108
  %3113 = vmatpush.bf16.msra.mxu0 %v2105
  %3114 = vmatpush.bf16.msra.mxu0 %v2102
  %3115 = vmatpush.bf16.msra.mxu0 %v2099
  %3116 = vmatpush.bf16.msra.mxu0 %v2096
  %3117 = vmatpush.bf16.msra.mxu0 %v2093
  %3118 = vmatpush.bf16.msra.mxu0 %v2090
  %3119 = vmatpush.bf16.msra.mxu0 %v2087
  %3120 = vmatmul.bf16.gmra.mxu0 %v627
  %v3121 = vpop.f32.mrf.mxu0
  %v3122 = vadd.f32 %v3104, %v3121
  %v3123 = vpop.f32.mrf.mxu0
  %v3124 = vadd.f32 %v3106, %v3123
  %3125 = vmatmul.bf16.gmra.mxu0 %v643
  %v3126 = vpop.f32.mrf.mxu0
  %v3127 = vadd.f32 %v3109, %v3126
  %v3128 = vpop.f32.mrf.mxu0
  %3129 = vdwg.mxu0
  %3130 = vmatpush.bf16.msra.mxu0 %v2132
  %3131 = vmatpush.bf16.msra.mxu0 %v2129
  %3132 = vmatpush.bf16.msra.mxu0 %v2126
  %3133 = vmatpush.bf16.msra.mxu0 %v2123
  %3134 = vmatpush.bf16.msra.mxu0 %v2120
  %3135 = vmatpush.bf16.msra.mxu0 %v2117
  %3136 = vmatpush.bf16.msra.mxu0 %v2114
  %3137 = vmatpush.bf16.msra.mxu0 %v2111
  %3138 = vmatmul.bf16.gmra.mxu0 %v628
  %v3139 = vpop.f32.mrf.mxu0
  %v3140 = vadd.f32 %v3122, %v3139
  %v3141 = vpop.f32.mrf.mxu0
  %v3142 = vadd.f32 %v3124, %v3141
  %3143 = vmatmul.bf16.gmra.mxu0 %v644
  %v3144 = vpop.f32.mrf.mxu0
  %v3145 = vadd.f32 %v3127, %v3144
  %v3146 = vpop.f32.mrf.mxu0
  %3147 = vdwg.mxu0
  %3148 = vmatpush.bf16.msra.mxu0 %v2156
  %3149 = vmatpush.bf16.msra.mxu0 %v2153
  %3150 = vmatpush.bf16.msra.mxu0 %v2150
  %3151 = vmatpush.bf16.msra.mxu0 %v2147
  %3152 = vmatpush.bf16.msra.mxu0 %v2144
  %3153 = vmatpush.bf16.msra.mxu0 %v2141
  %3154 = vmatpush.bf16.msra.mxu0 %v2138
  %3155 = vmatpush.bf16.msra.mxu0 %v2135
  %3156 = vmatmul.bf16.gmra.mxu0 %v629
  %v3157 = vpop.f32.mrf.mxu0
  %v3158 = vadd.f32 %v3140, %v3157
  %v3159 = vpop.f32.mrf.mxu0
  %v3160 = vadd.f32 %v3142, %v3159
  %3161 = vmatmul.bf16.gmra.mxu0 %v645
  %v3162 = vpop.f32.mrf.mxu0
  %v3163 = vadd.f32 %v3145, %v3162
  %v3164 = vpop.f32.mrf.mxu0
  %3165 = vdwg.mxu0
  %3166 = vmatpush.bf16.msra.mxu0 %v2180
  %3167 = vmatpush.bf16.msra.mxu0 %v2177
  %3168 = vmatpush.bf16.msra.mxu0 %v2174
  %3169 = vmatpush.bf16.msra.mxu0 %v2171
  %3170 = vmatpush.bf16.msra.mxu0 %v2168
  %3171 = vmatpush.bf16.msra.mxu0 %v2165
  %3172 = vmatpush.bf16.msra.mxu0 %v2162
  %3173 = vmatpush.bf16.msra.mxu0 %v2159
  %3174 = vmatmul.bf16.gmra.mxu0 %v630
  %v3175 = vpop.f32.mrf.mxu0
  %v3176 = vadd.f32 %v3158, %v3175
  %v3177 = vpop.f32.mrf.mxu0
  %v3178 = vadd.f32 %v3160, %v3177
  %3179 = vmatmul.bf16.gmra.mxu0 %v646
  %v3180 = vpop.f32.mrf.mxu0
  %v3181 = vadd.f32 %v3163, %v3180
  %v3182 = vpop.f32.mrf.mxu0
  %3183 = vdwg.mxu0
  %3184 = vmatpush.bf16.msra.mxu0 %v2204
  %3185 = vmatpush.bf16.msra.mxu0 %v2201
  %3186 = vmatpush.bf16.msra.mxu0 %v2198
  %3187 = vmatpush.bf16.msra.mxu0 %v2195
  %3188 = vmatpush.bf16.msra.mxu0 %v2192
  %3189 = vmatpush.bf16.msra.mxu0 %v2189
  %3190 = vmatpush.bf16.msra.mxu0 %v2186
  %3191 = vmatpush.bf16.msra.mxu0 %v2183
  %3192 = vmatmul.bf16.gmra.mxu0 %v631
  %v3193 = vpop.f32.mrf.mxu0
  %v3194 = vadd.f32 %v3176, %v3193
  %v3195 = vpop.f32.mrf.mxu0
  %v3196 = vadd.f32 %v3178, %v3195
  %3197 = vmatmul.bf16.gmra.mxu0 %v647
  %v3198 = vpop.f32.mrf.mxu0
  %v3199 = vadd.f32 %v3181, %v3198
  %v3200 = vpop.f32.mrf.mxu0
  %3201 = vdwg.mxu0
  %3202 = vmatpush.bf16.msra.mxu0 %v2228
  %3203 = vmatpush.bf16.msra.mxu0 %v2225
  %3204 = vmatpush.bf16.msra.mxu0 %v2222
  %3205 = vmatpush.bf16.msra.mxu0 %v2219
  %3206 = vmatpush.bf16.msra.mxu0 %v2216
  %3207 = vmatpush.bf16.msra.mxu0 %v2213
  %3208 = vmatpush.bf16.msra.mxu0 %v2210
  %3209 = vmatpush.bf16.msra.mxu0 %v2207
  %3210 = vmatmul.bf16.gmra.mxu0 %v632
  %v3211 = vpop.f32.mrf.mxu0
  %v3212 = vadd.f32 %v3194, %v3211
  %v3213 = vpop.f32.mrf.mxu0
  %v3214 = vadd.f32 %v3196, %v3213
  %3215 = vmatmul.bf16.gmra.mxu0 %v648
  %v3216 = vpop.f32.mrf.mxu0
  %v3217 = vadd.f32 %v3199, %v3216
  %v3218 = vpop.f32.mrf.mxu0
  %3219 = vdwg.mxu0
  %3220 = vmatpush.bf16.msra.mxu0 %v2252
  %3221 = vmatpush.bf16.msra.mxu0 %v2249
  %3222 = vmatpush.bf16.msra.mxu0 %v2246
  %3223 = vmatpush.bf16.msra.mxu0 %v2243
  %3224 = vmatpush.bf16.msra.mxu0 %v2240
  %3225 = vmatpush.bf16.msra.mxu0 %v2237
  %3226 = vmatpush.bf16.msra.mxu0 %v2234
  %3227 = vmatpush.bf16.msra.mxu0 %v2231
  %3228 = vmatmul.bf16.gmra.mxu0 %v633
  %v3229 = vpop.f32.mrf.mxu0
  %v3230 = vadd.f32 %v3212, %v3229
  %v3231 = vpop.f32.mrf.mxu0
  %v3232 = vadd.f32 %v3214, %v3231
  %3233 = vmatmul.bf16.gmra.mxu0 %v649
  %v3234 = vpop.f32.mrf.mxu0
  %v3235 = vadd.f32 %v3217, %v3234
  %v3236 = vpop.f32.mrf.mxu0
  %3237 = vdwg.mxu0
  %3238 = vmatpush.bf16.msra.mxu0 %v2276
  %3239 = vmatpush.bf16.msra.mxu0 %v2273
  %3240 = vmatpush.bf16.msra.mxu0 %v2270
  %3241 = vmatpush.bf16.msra.mxu0 %v2267
  %3242 = vmatpush.bf16.msra.mxu0 %v2264
  %3243 = vmatpush.bf16.msra.mxu0 %v2261
  %3244 = vmatpush.bf16.msra.mxu0 %v2258
  %3245 = vmatpush.bf16.msra.mxu0 %v2255
  %3246 = vmatmul.bf16.gmra.mxu0 %v634
  %v3247 = vpop.f32.mrf.mxu0
  %v3248 = vadd.f32 %v3230, %v3247
  %v3249 = vpop.f32.mrf.mxu0
  %v3250 = vadd.f32 %v3232, %v3249
  %3251 = vmatmul.bf16.gmra.mxu0 %v650
  %v3252 = vpop.f32.mrf.mxu0
  %v3253 = vadd.f32 %v3235, %v3252
  %v3254 = vpop.f32.mrf.mxu0
  %3255 = vdwg.mxu0
  %3256 = vmatpush.bf16.msra.mxu0 %v2300
  %3257 = vmatpush.bf16.msra.mxu0 %v2297
  %3258 = vmatpush.bf16.msra.mxu0 %v2294
  %3259 = vmatpush.bf16.msra.mxu0 %v2291
  %3260 = vmatpush.bf16.msra.mxu0 %v2288
  %3261 = vmatpush.bf16.msra.mxu0 %v2285
  %3262 = vmatpush.bf16.msra.mxu0 %v2282
  %3263 = vmatpush.bf16.msra.mxu0 %v2279
  %3264 = vmatmul.bf16.gmra.mxu0 %v635
  %v3265 = vpop.f32.mrf.mxu0
  %v3266 = vadd.f32 %v3248, %v3265
  %v3267 = vpop.f32.mrf.mxu0
  %v3268 = vadd.f32 %v3250, %v3267
  %3269 = vmatmul.bf16.gmra.mxu0 %v651
  %v3270 = vpop.f32.mrf.mxu0
  %v3271 = vadd.f32 %v3253, %v3270
  %v3272 = vpop.f32.mrf.mxu0
  %3273 = vdwg.mxu0
  %3274 = vmatpush.bf16.msra.mxu0 %v2324
  %3275 = vmatpush.bf16.msra.mxu0 %v2321
  %3276 = vmatpush.bf16.msra.mxu0 %v2318
  %3277 = vmatpush.bf16.msra.mxu0 %v2315
  %3278 = vmatpush.bf16.msra.mxu0 %v2312
  %3279 = vmatpush.bf16.msra.mxu0 %v2309
  %3280 = vmatpush.bf16.msra.mxu0 %v2306
  %3281 = vmatpush.bf16.msra.mxu0 %v2303
  %3282 = vmatmul.bf16.gmra.mxu0 %v636
  %v3283 = vpop.f32.mrf.mxu0
  %v3284 = vadd.f32 %v3266, %v3283
  %v3285 = vpop.f32.mrf.mxu0
  %v3286 = vadd.f32 %v3268, %v3285
  %3287 = vmatmul.bf16.gmra.mxu0 %v652
  %v3288 = vpop.f32.mrf.mxu0
  %v3289 = vadd.f32 %v3271, %v3288
  %v3290 = vpop.f32.mrf.mxu0
  %3291 = vdwg.mxu0
  %3292 = vmatpush.bf16.msra.mxu0 %v2348
  %3293 = vmatpush.bf16.msra.mxu0 %v2345
  %3294 = vmatpush.bf16.msra.mxu0 %v2342
  %3295 = vmatpush.bf16.msra.mxu0 %v2339
  %3296 = vmatpush.bf16.msra.mxu0 %v2336
  %3297 = vmatpush.bf16.msra.mxu0 %v2333
  %3298 = vmatpush.bf16.msra.mxu0 %v2330
  %3299 = vmatpush.bf16.msra.mxu0 %v2327
  %3300 = vmatmul.bf16.gmra.mxu0 %v637
  %v3301 = vpop.f32.mrf.mxu0
  %v3302 = vadd.f32 %v3284, %v3301
  %v3303 = vpop.f32.mrf.mxu0
  %v3304 = vadd.f32 %v3286, %v3303
  %3305 = vmatmul.bf16.gmra.mxu0 %v653
  %v3306 = vpop.f32.mrf.mxu0
  %v3307 = vadd.f32 %v3289, %v3306
  %v3308 = vpop.f32.mrf.mxu0
  %3309 = vdwg.mxu0
  %3310 = vmatpush.bf16.msra.mxu0 %v1989
  %3311 = vmatpush.bf16.msra.mxu0 %v1986
  %3312 = vmatpush.bf16.msra.mxu0 %v1983
  %3313 = vmatpush.bf16.msra.mxu0 %v1980
  %3314 = vmatpush.bf16.msra.mxu0 %v1977
  %3315 = vmatpush.bf16.msra.mxu0 %v1974
  %3316 = vmatpush.bf16.msra.mxu0 %v1971
  %3317 = vmatpush.bf16.msra.mxu0 %v1968
  %3318 = vmatmul.bf16.gmra.mxu0 %v622
  %v3319 = vpop.f32.mrf.mxu0
  %v3320 = vadd.f32 0.0, %v3319
  %v3321 = vpop.f32.mrf.mxu0
  %v3322 = vadd.f32 0.0, %v3321
  %3323 = vmatmul.bf16.gmra.mxu0 %v638
  %v3324 = vpop.f32.mrf.mxu0
  %v3325 = vadd.f32 0.0, %v3324
  %v3326 = vpop.f32.mrf.mxu0
  %3327 = vdwg.mxu0
  %3328 = vmatpush.bf16.msra.mxu0 %v2013
  %3329 = vmatpush.bf16.msra.mxu0 %v2010
  %3330 = vmatpush.bf16.msra.mxu0 %v2007
  %3331 = vmatpush.bf16.msra.mxu0 %v2004
  %3332 = vmatpush.bf16.msra.mxu0 %v2001
  %3333 = vmatpush.bf16.msra.mxu0 %v1998
  %3334 = vmatpush.bf16.msra.mxu0 %v1995
  %3335 = vmatpush.bf16.msra.mxu0 %v1992
  %3336 = vmatmul.bf16.gmra.mxu0 %v623
  %v3337 = vpop.f32.mrf.mxu0
  %v3338 = vadd.f32 %v3320, %v3337
  %v3339 = vpop.f32.mrf.mxu0
  %v3340 = vadd.f32 %v3322, %v3339
  %3341 = vmatmul.bf16.gmra.mxu0 %v639
  %v3342 = vpop.f32.mrf.mxu0
  %v3343 = vadd.f32 %v3325, %v3342
  %v3344 = vpop.f32.mrf.mxu0
  %3345 = vdwg.mxu0
  %3346 = vmatpush.bf16.msra.mxu0 %v2037
  %3347 = vmatpush.bf16.msra.mxu0 %v2034
  %3348 = vmatpush.bf16.msra.mxu0 %v2031
  %3349 = vmatpush.bf16.msra.mxu0 %v2028
  %3350 = vmatpush.bf16.msra.mxu0 %v2025
  %3351 = vmatpush.bf16.msra.mxu0 %v2022
  %3352 = vmatpush.bf16.msra.mxu0 %v2019
  %3353 = vmatpush.bf16.msra.mxu0 %v2016
  %3354 = vmatmul.bf16.gmra.mxu0 %v624
  %v3355 = vpop.f32.mrf.mxu0
  %v3356 = vadd.f32 %v3338, %v3355
  %v3357 = vpop.f32.mrf.mxu0
  %v3358 = vadd.f32 %v3340, %v3357
  %3359 = vmatmul.bf16.gmra.mxu0 %v640
  %v3360 = vpop.f32.mrf.mxu0
  %v3361 = vadd.f32 %v3343, %v3360
  %v3362 = vpop.f32.mrf.mxu0
  %3363 = vdwg.mxu0
  %3364 = vmatpush.bf16.msra.mxu0 %v2061
  %3365 = vmatpush.bf16.msra.mxu0 %v2058
  %3366 = vmatpush.bf16.msra.mxu0 %v2055
  %3367 = vmatpush.bf16.msra.mxu0 %v2052
  %3368 = vmatpush.bf16.msra.mxu0 %v2049
  %3369 = vmatpush.bf16.msra.mxu0 %v2046
  %3370 = vmatpush.bf16.msra.mxu0 %v2043
  %3371 = vmatpush.bf16.msra.mxu0 %v2040
  %3372 = vmatmul.bf16.gmra.mxu0 %v625
  %v3373 = vpop.f32.mrf.mxu0
  %v3374 = vadd.f32 %v3356, %v3373
  %v3375 = vpop.f32.mrf.mxu0
  %v3376 = vadd.f32 %v3358, %v3375
  %3377 = vmatmul.bf16.gmra.mxu0 %v641
  %v3378 = vpop.f32.mrf.mxu0
  %v3379 = vadd.f32 %v3361, %v3378
  %v3380 = vpop.f32.mrf.mxu0
  %3381 = vdwg.mxu0
  %3382 = vmatpush.bf16.msra.mxu0 %v2085
  %3383 = vmatpush.bf16.msra.mxu0 %v2082
  %3384 = vmatpush.bf16.msra.mxu0 %v2079
  %3385 = vmatpush.bf16.msra.mxu0 %v2076
  %3386 = vmatpush.bf16.msra.mxu0 %v2073
  %3387 = vmatpush.bf16.msra.mxu0 %v2070
  %3388 = vmatpush.bf16.msra.mxu0 %v2067
  %3389 = vmatpush.bf16.msra.mxu0 %v2064
  %3390 = vmatmul.bf16.gmra.mxu0 %v626
  %v3391 = vpop.f32.mrf.mxu0
  %v3392 = vadd.f32 %v3374, %v3391
  %v3393 = vpop.f32.mrf.mxu0
  %v3394 = vadd.f32 %v3376, %v3393
  %3395 = vmatmul.bf16.gmra.mxu0 %v642
  %v3396 = vpop.f32.mrf.mxu0
  %v3397 = vadd.f32 %v3379, %v3396
  %v3398 = vpop.f32.mrf.mxu0
  %3399 = vdwg.mxu0
  %3400 = vmatpush.bf16.msra.mxu0 %v2109
  %3401 = vmatpush.bf16.msra.mxu0 %v2106
  %3402 = vmatpush.bf16.msra.mxu0 %v2103
  %3403 = vmatpush.bf16.msra.mxu0 %v2100
  %3404 = vmatpush.bf16.msra.mxu0 %v2097
  %3405 = vmatpush.bf16.msra.mxu0 %v2094
  %3406 = vmatpush.bf16.msra.mxu0 %v2091
  %3407 = vmatpush.bf16.msra.mxu0 %v2088
  %3408 = vmatmul.bf16.gmra.mxu0 %v627
  %v3409 = vpop.f32.mrf.mxu0
  %v3410 = vadd.f32 %v3392, %v3409
  %v3411 = vpop.f32.mrf.mxu0
  %v3412 = vadd.f32 %v3394, %v3411
  %3413 = vmatmul.bf16.gmra.mxu0 %v643
  %v3414 = vpop.f32.mrf.mxu0
  %v3415 = vadd.f32 %v3397, %v3414
  %v3416 = vpop.f32.mrf.mxu0
  %3417 = vdwg.mxu0
  %3418 = vmatpush.bf16.msra.mxu0 %v2133
  %3419 = vmatpush.bf16.msra.mxu0 %v2130
  %3420 = vmatpush.bf16.msra.mxu0 %v2127
  %3421 = vmatpush.bf16.msra.mxu0 %v2124
  %3422 = vmatpush.bf16.msra.mxu0 %v2121
  %3423 = vmatpush.bf16.msra.mxu0 %v2118
  %3424 = vmatpush.bf16.msra.mxu0 %v2115
  %3425 = vmatpush.bf16.msra.mxu0 %v2112
  %3426 = vmatmul.bf16.gmra.mxu0 %v628
  %v3427 = vpop.f32.mrf.mxu0
  %v3428 = vadd.f32 %v3410, %v3427
  %v3429 = vpop.f32.mrf.mxu0
  %v3430 = vadd.f32 %v3412, %v3429
  %3431 = vmatmul.bf16.gmra.mxu0 %v644
  %v3432 = vpop.f32.mrf.mxu0
  %v3433 = vadd.f32 %v3415, %v3432
  %v3434 = vpop.f32.mrf.mxu0
  %3435 = vdwg.mxu0
  %3436 = vmatpush.bf16.msra.mxu0 %v2157
  %3437 = vmatpush.bf16.msra.mxu0 %v2154
  %3438 = vmatpush.bf16.msra.mxu0 %v2151
  %3439 = vmatpush.bf16.msra.mxu0 %v2148
  %3440 = vmatpush.bf16.msra.mxu0 %v2145
  %3441 = vmatpush.bf16.msra.mxu0 %v2142
  %3442 = vmatpush.bf16.msra.mxu0 %v2139
  %3443 = vmatpush.bf16.msra.mxu0 %v2136
  %3444 = vmatmul.bf16.gmra.mxu0 %v629
  %v3445 = vpop.f32.mrf.mxu0
  %v3446 = vadd.f32 %v3428, %v3445
  %v3447 = vpop.f32.mrf.mxu0
  %v3448 = vadd.f32 %v3430, %v3447
  %3449 = vmatmul.bf16.gmra.mxu0 %v645
  %v3450 = vpop.f32.mrf.mxu0
  %v3451 = vadd.f32 %v3433, %v3450
  %v3452 = vpop.f32.mrf.mxu0
  %3453 = vdwg.mxu0
  %3454 = vmatpush.bf16.msra.mxu0 %v2181
  %3455 = vmatpush.bf16.msra.mxu0 %v2178
  %3456 = vmatpush.bf16.msra.mxu0 %v2175
  %3457 = vmatpush.bf16.msra.mxu0 %v2172
  %3458 = vmatpush.bf16.msra.mxu0 %v2169
  %3459 = vmatpush.bf16.msra.mxu0 %v2166
  %3460 = vmatpush.bf16.msra.mxu0 %v2163
  %3461 = vmatpush.bf16.msra.mxu0 %v2160
  %3462 = vmatmul.bf16.gmra.mxu0 %v630
  %v3463 = vpop.f32.mrf.mxu0
  %v3464 = vadd.f32 %v3446, %v3463
  %v3465 = vpop.f32.mrf.mxu0
  %v3466 = vadd.f32 %v3448, %v3465
  %3467 = vmatmul.bf16.gmra.mxu0 %v646
  %v3468 = vpop.f32.mrf.mxu0
  %v3469 = vadd.f32 %v3451, %v3468
  %v3470 = vpop.f32.mrf.mxu0
  %3471 = vdwg.mxu0
  %3472 = vmatpush.bf16.msra.mxu0 %v2205
  %3473 = vmatpush.bf16.msra.mxu0 %v2202
  %3474 = vmatpush.bf16.msra.mxu0 %v2199
  %3475 = vmatpush.bf16.msra.mxu0 %v2196
  %3476 = vmatpush.bf16.msra.mxu0 %v2193
  %3477 = vmatpush.bf16.msra.mxu0 %v2190
  %3478 = vmatpush.bf16.msra.mxu0 %v2187
  %3479 = vmatpush.bf16.msra.mxu0 %v2184
  %3480 = vmatmul.bf16.gmra.mxu0 %v631
  %v3481 = vpop.f32.mrf.mxu0
  %v3482 = vadd.f32 %v3464, %v3481
  %v3483 = vpop.f32.mrf.mxu0
  %v3484 = vadd.f32 %v3466, %v3483
  %3485 = vmatmul.bf16.gmra.mxu0 %v647
  %v3486 = vpop.f32.mrf.mxu0
  %v3487 = vadd.f32 %v3469, %v3486
  %v3488 = vpop.f32.mrf.mxu0
  %3489 = vdwg.mxu0
  %3490 = vmatpush.bf16.msra.mxu0 %v2229
  %3491 = vmatpush.bf16.msra.mxu0 %v2226
  %3492 = vmatpush.bf16.msra.mxu0 %v2223
  %3493 = vmatpush.bf16.msra.mxu0 %v2220
  %3494 = vmatpush.bf16.msra.mxu0 %v2217
  %3495 = vmatpush.bf16.msra.mxu0 %v2214
  %3496 = vmatpush.bf16.msra.mxu0 %v2211
  %3497 = vmatpush.bf16.msra.mxu0 %v2208
  %3498 = vmatmul.bf16.gmra.mxu0 %v632
  %v3499 = vpop.f32.mrf.mxu0
  %v3500 = vadd.f32 %v3482, %v3499
  %v3501 = vpop.f32.mrf.mxu0
  %v3502 = vadd.f32 %v3484, %v3501
  %3503 = vmatmul.bf16.gmra.mxu0 %v648
  %v3504 = vpop.f32.mrf.mxu0
  %v3505 = vadd.f32 %v3487, %v3504
  %v3506 = vpop.f32.mrf.mxu0
  %3507 = vdwg.mxu0
  %3508 = vmatpush.bf16.msra.mxu0 %v2253
  %3509 = vmatpush.bf16.msra.mxu0 %v2250
  %3510 = vmatpush.bf16.msra.mxu0 %v2247
  %3511 = vmatpush.bf16.msra.mxu0 %v2244
  %3512 = vmatpush.bf16.msra.mxu0 %v2241
  %3513 = vmatpush.bf16.msra.mxu0 %v2238
  %3514 = vmatpush.bf16.msra.mxu0 %v2235
  %3515 = vmatpush.bf16.msra.mxu0 %v2232
  %3516 = vmatmul.bf16.gmra.mxu0 %v633
  %v3517 = vpop.f32.mrf.mxu0
  %v3518 = vadd.f32 %v3500, %v3517
  %v3519 = vpop.f32.mrf.mxu0
  %v3520 = vadd.f32 %v3502, %v3519
  %3521 = vmatmul.bf16.gmra.mxu0 %v649
  %v3522 = vpop.f32.mrf.mxu0
  %v3523 = vadd.f32 %v3505, %v3522
  %v3524 = vpop.f32.mrf.mxu0
  %3525 = vdwg.mxu0
  %3526 = vmatpush.bf16.msra.mxu0 %v2277
  %3527 = vmatpush.bf16.msra.mxu0 %v2274
  %3528 = vmatpush.bf16.msra.mxu0 %v2271
  %3529 = vmatpush.bf16.msra.mxu0 %v2268
  %3530 = vmatpush.bf16.msra.mxu0 %v2265
  %3531 = vmatpush.bf16.msra.mxu0 %v2262
  %3532 = vmatpush.bf16.msra.mxu0 %v2259
  %3533 = vmatpush.bf16.msra.mxu0 %v2256
  %3534 = vmatmul.bf16.gmra.mxu0 %v634
  %v3535 = vpop.f32.mrf.mxu0
  %v3536 = vadd.f32 %v3518, %v3535
  %v3537 = vpop.f32.mrf.mxu0
  %v3538 = vadd.f32 %v3520, %v3537
  %3539 = vmatmul.bf16.gmra.mxu0 %v650
  %v3540 = vpop.f32.mrf.mxu0
  %v3541 = vadd.f32 %v3523, %v3540
  %v3542 = vpop.f32.mrf.mxu0
  %3543 = vdwg.mxu0
  %3544 = vmatpush.bf16.msra.mxu0 %v2301
  %3545 = vmatpush.bf16.msra.mxu0 %v2298
  %3546 = vmatpush.bf16.msra.mxu0 %v2295
  %3547 = vmatpush.bf16.msra.mxu0 %v2292
  %3548 = vmatpush.bf16.msra.mxu0 %v2289
  %3549 = vmatpush.bf16.msra.mxu0 %v2286
  %3550 = vmatpush.bf16.msra.mxu0 %v2283
  %3551 = vmatpush.bf16.msra.mxu0 %v2280
  %3552 = vmatmul.bf16.gmra.mxu0 %v635
  %v3553 = vpop.f32.mrf.mxu0
  %v3554 = vadd.f32 %v3536, %v3553
  %v3555 = vpop.f32.mrf.mxu0
  %v3556 = vadd.f32 %v3538, %v3555
  %3557 = vmatmul.bf16.gmra.mxu0 %v651
  %v3558 = vpop.f32.mrf.mxu0
  %v3559 = vadd.f32 %v3541, %v3558
  %v3560 = vpop.f32.mrf.mxu0
  %3561 = vdwg.mxu0
  %3562 = vmatpush.bf16.msra.mxu0 %v2325
  %3563 = vmatpush.bf16.msra.mxu0 %v2322
  %3564 = vmatpush.bf16.msra.mxu0 %v2319
  %3565 = vmatpush.bf16.msra.mxu0 %v2316
  %3566 = vmatpush.bf16.msra.mxu0 %v2313
  %3567 = vmatpush.bf16.msra.mxu0 %v2310
  %3568 = vmatpush.bf16.msra.mxu0 %v2307
  %3569 = vmatpush.bf16.msra.mxu0 %v2304
  %3570 = vmatmul.bf16.gmra.mxu0 %v636
  %v3571 = vpop.f32.mrf.mxu0
  %v3572 = vadd.f32 %v3554, %v3571
  %v3573 = vpop.f32.mrf.mxu0
  %v3574 = vadd.f32 %v3556, %v3573
  %3575 = vmatmul.bf16.gmra.mxu0 %v652
  %v3576 = vpop.f32.mrf.mxu0
  %v3577 = vadd.f32 %v3559, %v3576
  %v3578 = vpop.f32.mrf.mxu0
  %3579 = vdwg.mxu0
  %3580 = vmatpush.bf16.msra.mxu0 %v2349
  %3581 = vmatpush.bf16.msra.mxu0 %v2346
  %3582 = vmatpush.bf16.msra.mxu0 %v2343
  %3583 = vmatpush.bf16.msra.mxu0 %v2340
  %3584 = vmatpush.bf16.msra.mxu0 %v2337
  %3585 = vmatpush.bf16.msra.mxu0 %v2334
  %3586 = vmatpush.bf16.msra.mxu0 %v2331
  %3587 = vmatpush.bf16.msra.mxu0 %v2328
  %3588 = vmatmul.bf16.gmra.mxu0 %v637
  %v3589 = vpop.f32.mrf.mxu0
  %v3590 = vadd.f32 %v3572, %v3589
  %v3591 = vpop.f32.mrf.mxu0
  %v3592 = vadd.f32 %v3574, %v3591
  %3593 = vmatmul.bf16.gmra.mxu0 %v653
  %v3594 = vpop.f32.mrf.mxu0
  %v3595 = vadd.f32 %v3577, %v3594
  %v3596 = vpop.f32.mrf.mxu0
  %3597 = vdwg.mxu0
  %v3598 = vlaneseq
  %v3599 = vshrl.u32 %v3598, 7
  %v3600 = vadd.s32 %v3599, 8
  %v3601 = vadd.s32 %v3599, 16
  %v3602 = vlaneseq
  %v3603 = vand.u32 %v3602, 127
  %v3604 = vcvt.s32.f32 %v3599
  %v3605 = vcvt.s32.f32 %v3600
  %v3606 = vcvt.s32.f32 %v3601
  %v3607 = vcvt.s32.f32 %v3603
  %v3608 = vadd.f32 %v3604, 0.5
  %v3609 = vadd.f32 %v3605, 0.5
  %v3610 = vadd.f32 %v3606, 0.5
  %v3611 = vmul.f32 %v3608, 0.1
  %v3612 = vmul.f32 %v3609, 0.1
  %v3613 = vmul.f32 %v3610, 0.1
  %v3614 = vfloor.f32 %v3611
  %v3615 = vfloor.f32 %v3612
  %v3616 = vfloor.f32 %v3613
  %v3617 = vadd.f32 %v3607, 0.5
  %v3618 = vmul.f32 %v3617, 0.1
  %v3619 = vfloor.f32 %v3618
  %vm3620 = vcmp.eq.f32.partialorder %v3614, %v3619
  %vm3621 = vcmp.eq.f32.partialorder %v3615, %v3619
  %vm3622 = vcmp.eq.f32.partialorder %v3616, %v3619
  %v3623 = vsub.s32 %v3599, 1
  %v3624 = vsub.s32 %v3600, 1
  %v3625 = vsub.s32 %v3601, 1
  %vm3626 = vcmp.eq.s32.totalorder %v3603, %v3623
  %vm3627 = vcmp.eq.s32.totalorder %v3603, %v3624
  %vm3628 = vcmp.eq.s32.totalorder %v3603, %v3625
  %vm3629 = vmand %vm3626, %vm3620
  %vm3630 = vmand %vm3627, %vm3621
  %vm3631 = vmand %vm3628, %vm3622
  %v3632 = vsel %vm3629, 1.0, 0.0
  %v3633 = vsel %vm3630, 1.0, 0.0
  %v3634 = vsel %vm3631, 1.0, 0.0
  %v3635 = vadd.s32 %v3599, 1
  %v3636 = vadd.s32 %v3600, 1
  %v3637 = vadd.s32 %v3601, 1
  %vm3638 = vcmp.eq.s32.totalorder %v3603, %v3635
  %vm3639 = vcmp.eq.s32.totalorder %v3603, %v3636
  %vm3640 = vcmp.eq.s32.totalorder %v3603, %v3637
  %vm3641 = vmand %vm3638, %vm3620
  %vm3642 = vmand %vm3639, %vm3621
  %vm3643 = vmand %vm3640, %vm3622
  %v3644 = vsel %vm3641, 1.0, 0.0
  %v3645 = vsel %vm3642, 1.0, 0.0
  %v3646 = vsel %vm3643, 1.0, 0.0
  %vm3647 = vcmask 162816
  %v3649 = vsel %vm3647, %v3632, 0
  %v3652 = vsel %vm3647, %v3633, 0
  %v3655 = vsel %vm3647, %v3634, 0
  %vm3657 = vcmask 1043456
  %v3659 = vsel %vm3657, %v3019, 0
  %3661 = vmatpush.msra.mxu0 0.0
  %3662 = vmatpush.msra.mxu0 0.0
  %3663 = vmatpush.msra.mxu0 0.0
  %3664 = vmatpush.msra.mxu0 0.0
  %3665 = vmatpush.msra.mxu0 0.0
  %3666 = vmatpush.msra.mxu0 0.0
  %3667 = vmatpush.msra.mxu0 0.0
  %3668 = vmatpush.msra.mxu0 0.0
  %3669 = vmatpush.msra.mxu0 0.0
  %3670 = vmatpush.msra.mxu0 0.0
  %3671 = vmatpush.msra.mxu0 0.0
  %3672 = vmatpush.msra.mxu0 0.0
  %3673 = vmatpush.msra.mxu0 0.0
  %3674 = vmatpush.msra.mxu0 %v3659
  %3675 = vmatpush.msra.mxu0 %v3016
  %3676 = vmatpush.msra.mxu0 %v3014
  %3677 = vmatmul.f32.gmra.mxu0 %v3649
  %v3678 = vpop.f32.mrf.mxu0
  %v3679 = vadd.f32 %v3302, %v3678
  %3680 = vmatmul.f32.gmra.mxu0 %v3652
  %v3681 = vpop.f32.mrf.mxu0
  %v3682 = vadd.f32 %v3304, %v3681
  %3683 = vmatmul.f32.gmra.mxu0 %v3655
  %v3684 = vpop.f32.mrf.mxu0
  %v3685 = vadd.f32 %v3307, %v3684
  %3686 = vdwg.mxu0
  %v3688 = vsel %vm3647, %v3644, 0
  %v3691 = vsel %vm3647, %v3645, 0
  %v3694 = vsel %vm3647, %v3646, 0
  %v3697 = vsel %vm3657, %v3595, 0
  %3699 = vmatpush.msra.mxu0 0.0
  %3700 = vmatpush.msra.mxu0 0.0
  %3701 = vmatpush.msra.mxu0 0.0
  %3702 = vmatpush.msra.mxu0 0.0
  %3703 = vmatpush.msra.mxu0 0.0
  %3704 = vmatpush.msra.mxu0 0.0
  %3705 = vmatpush.msra.mxu0 0.0
  %3706 = vmatpush.msra.mxu0 0.0
  %3707 = vmatpush.msra.mxu0 0.0
  %3708 = vmatpush.msra.mxu0 0.0
  %3709 = vmatpush.msra.mxu0 0.0
  %3710 = vmatpush.msra.mxu0 0.0
  %3711 = vmatpush.msra.mxu0 0.0
  %3712 = vmatpush.msra.mxu0 %v3697
  %3713 = vmatpush.msra.mxu0 %v3592
  %3714 = vmatpush.msra.mxu0 %v3590
  %3715 = vmatmul.f32.gmra.mxu0 %v3688
  %v3716 = vpop.f32.mrf.mxu0
  %v3717 = vadd.f32 0.0, %v3716
  %3718 = vmatmul.f32.gmra.mxu0 %v3691
  %v3719 = vpop.f32.mrf.mxu0
  %v3720 = vadd.f32 0.0, %v3719
  %3721 = vmatmul.f32.gmra.mxu0 %v3694
  %v3722 = vpop.f32.mrf.mxu0
  %v3723 = vadd.f32 0.0, %v3722
  %3724 = vdwg.mxu0
  %v3725 = vadd.f32 %v3679, %v3717
  %v3726 = vadd.f32 %v3682, %v3720
  %v3727 = vadd.f32 %v3685, %v3723
  %v3728 = vld [vmem:[%s2] sm:$0x1]
  %v3729 = vperm.slane %v3728, 0
  %v3730 = vadd.f32 %v3725, %v3729
  %v3731 = vadd.f32 %v3726, %v3729
  %v3732 = vadd.f32 %v3727, %v3729
  %v3733 = vadd.f32 %v3730, %v3731
  %v3734 = vsel %vm3657, %v3732, 0.0
  %v3735 = vadd.f32 %v3733, %v3734
  %v3736 = vrot.slane %v3735, 4
  %v3737 = vadd.f32 %v3735, %v3736
  %v3738 = vrot.slane %v3737, 2
  %v3739 = vadd.f32 %v3737, %v3738
  %v3740 = vrot.slane %v3739, 1
  %v3741 = vadd.f32 %v3739, %v3740
  %v3742 = vmul.f32 %v3741, 0.05
  %v3743 = vsub.f32 %v3730, %v3742
  %v3744 = vsub.f32 %v3731, %v3742
  %v3745 = vsub.f32 %v3732, %v3742
  %v3746 = vmul.f32 %v3743, %v3743
  %v3747 = vmul.f32 %v3744, %v3744
  %v3748 = vmul.f32 %v3745, %v3745
  %v3749 = vadd.f32 %v3746, %v3747
  %v3750 = vsel %vm3657, %v3748, 0.0
  %v3751 = vadd.f32 %v3749, %v3750
  %v3752 = vrot.slane %v3751, 4
  %v3753 = vadd.f32 %v3751, %v3752
  %v3754 = vrot.slane %v3753, 2
  %v3755 = vadd.f32 %v3753, %v3754
  %v3756 = vrot.slane %v3755, 1
  %v3757 = vadd.f32 %v3755, %v3756
  %v3758 = vmul.f32 %v3757, 0.05
  %v3759 = vld [vmem:[%s2 + $0x1] sm:$0x1]
  %v3760 = vadd.f32 %v3758, 1e-05
  %v3761 = vrsqrt.pop %v3760
  %v3762 = vmul.f32 %v3761, %v3760
  %v3763 = vmul.f32 %v3762, %v3761
  %v3764 = vmul.f32 0.5, %v3763
  %v3765 = vsub.f32 1.5, %v3764
  %v3766 = vmul.f32 %v3761, %v3765
  %vm3767 = vweird.f32 %v3760
  %vm3768 = vweird.f32 %v3761
  %vm3769 = vmor %vm3767, %vm3768
  %v3770 = vsel %vm3769, %v3761, %v3766
  %v3771 = vmul.f32 %v3743, %v3770
  %v3772 = vmul.f32 %v3744, %v3770
  %v3773 = vmul.f32 %v3745, %v3770
  %v3774 = vperm.slane %v3759, 0
  %v3775 = vmul.f32 %v3774, %v3771
  %v3776 = vmul.f32 %v3774, %v3772
  %v3777 = vmul.f32 %v3774, %v3773
  %v3778 = vld [vmem:[%s2 + $0x2] sm:$0x1]
  %v3779 = vperm.slane %v3778, 0
  %v3780 = vadd.f32 %v3775, %v3779
  %v3781 = vadd.f32 %v3776, %v3779
  %v3782 = vadd.f32 %v3777, %v3779
  %v3783 = vmax.f32 %v3780, 0.0
  %v3784 = vmax.f32 %v3781, 0.0
  %v3785 = vmax.f32 %v3782, 0.0
  %v3787 = vsel %vm3657, %v3785, 0
  %3789 = vmatpush.msra.mxu0 0.0
  %3790 = vmatpush.msra.mxu0 0.0
  %3791 = vmatpush.msra.mxu0 0.0
  %3792 = vmatpush.msra.mxu0 0.0
  %3793 = vmatpush.msra.mxu0 0.0
  %3794 = vmatpush.msra.mxu0 0.0
  %3795 = vmatpush.msra.mxu0 0.0
  %3796 = vmatpush.msra.mxu0 0.0
  %3797 = vmatpush.msra.mxu0 0.0
  %3798 = vmatpush.msra.mxu0 0.0
  %3799 = vmatpush.msra.mxu0 0.0
  %3800 = vmatpush.msra.mxu0 0.0
  %3801 = vmatpush.msra.mxu0 0.0
  %3802 = vmatpush.msra.mxu0 %v3787
  %3803 = vmatpush.msra.mxu0 %v3784
  %3804 = vmatpush.msra.mxu0 %v3783
  %3805 = vmatmul.f32.gmra.mxu0 %v3649
  %v3806 = vpop.f32.mrf.mxu0
  %v3807 = vadd.f32 0.0, %v3806
  %3808 = vmatmul.f32.gmra.mxu0 %v3652
  %v3809 = vpop.f32.mrf.mxu0
  %v3810 = vadd.f32 0.0, %v3809
  %3811 = vmatmul.f32.gmra.mxu0 %v3655
  %v3812 = vpop.f32.mrf.mxu0
  %v3813 = vadd.f32 0.0, %v3812
  %3814 = vdwg.mxu0
  %3815 = vmatpush.msra.mxu0 0.0
  %3816 = vmatpush.msra.mxu0 0.0
  %3817 = vmatpush.msra.mxu0 0.0
  %3818 = vmatpush.msra.mxu0 0.0
  %3819 = vmatpush.msra.mxu0 0.0
  %3820 = vmatpush.msra.mxu0 0.0
  %3821 = vmatpush.msra.mxu0 0.0
  %3822 = vmatpush.msra.mxu0 0.0
  %3823 = vmatpush.msra.mxu0 0.0
  %3824 = vmatpush.msra.mxu0 0.0
  %3825 = vmatpush.msra.mxu0 0.0
  %3826 = vmatpush.msra.mxu0 0.0
  %3827 = vmatpush.msra.mxu0 0.0
  %3828 = vmatpush.msra.mxu0 %v3787
  %3829 = vmatpush.msra.mxu0 %v3784
  %3830 = vmatpush.msra.mxu0 %v3783
  %3831 = vmatmul.f32.gmra.mxu0 %v3688
  %v3832 = vpop.f32.mrf.mxu0
  %v3833 = vadd.f32 0.0, %v3832
  %3834 = vmatmul.f32.gmra.mxu0 %v3691
  %v3835 = vpop.f32.mrf.mxu0
  %v3836 = vadd.f32 0.0, %v3835
  %3837 = vmatmul.f32.gmra.mxu0 %v3694
  %v3838 = vpop.f32.mrf.mxu0
  %v3839 = vadd.f32 0.0, %v3838
  %3840 = vdwg.mxu0
  %v3841 = vmax.f32 %v3807, %v3783
  %v3842 = vmax.f32 %v3810, %v3784
  %v3843 = vmax.f32 %v3813, %v3785
  %v3844 = vmax.f32 %v3841, %v3833
  %v3845 = vmax.f32 %v3842, %v3836
  %v3846 = vmax.f32 %v3843, %v3839
  %v3847 = vld [vmem:[%s2 + $0x8] sm:$0xff]
  %v3848 = vld [vmem:[%s2 + $0x10] sm:$0x3]
  %v3849 = vmul.f32 %v3844, %v3847
  %v3850 = vmul.f32 %v3845, %v3848
  %3851 = vadd.xlane.f32.xlu0 %v3849
  %v3852 = vpop.xlane.xlu0 %3851
  %vm3853 = vcmask 1041408
  %v3854 = vsel %vm3853, %v3850, 0.0
  %3855 = vadd.xlane.f32.xlu0 %v3854
  %v3856 = vpop.xlane.xlu0 %3855
  %v3857 = vsel %vm3853, %v3856, 0.0
  %v3858 = vadd.f32 %v3852, %v3857
  %v3859 = vrot.slane %v3858, 4
  %v3860 = vadd.f32 %v3858, %v3859
  %v3861 = vrot.slane %v3860, 2
  %v3862 = vadd.f32 %v3860, %v3861
  %v3863 = vrot.slane %v3862, 1
  %v3864 = vadd.f32 %v3862, %v3863
  %v3867 = vrot.slane %v3847, 6
  %v3868 = vrot.slane %v3848, 6
  %v3869 = vsel %vm3853, %v3867, %v3868
  %v3872 = vmul.f32 %v3845, %v3867
  %v3873 = vmul.f32 %v3846, %v3869
  %vm3874 = vcmask 1047554
  %v3875 = vsel %vm3874, %v3872, 0.0
  %3876 = vadd.xlane.f32.xlu0 %v3875
  %v3877 = vpop.xlane.xlu0 %3876
  %v3878 = vsel %vm3657, %v3873, 0.0
  %3879 = vadd.xlane.f32.xlu0 %v3878
  %v3880 = vpop.xlane.xlu0 %3879
  %vm3883 = vcmask 1045504
  %v3884 = vrot.slane %v3877, 2
  %v3885 = vrot.slane %v3880, 2
  %v3886 = vsel %vm3883, %v3884, %v3885
  %v3889 = vsel %vm3853, %v3885, 0.0
  %v3890 = vadd.f32 %v3886, %v3889
  %v3891 = vrot.slane %v3890, 4
  %v3892 = vadd.f32 %v3890, %v3891
  %v3893 = vrot.slane %v3892, 2
  %v3894 = vadd.f32 %v3892, %v3893
  %v3895 = vrot.slane %v3894, 1
  %v3896 = vadd.f32 %v3894, %v3895
  %vm3897 = vcmask 1040384
  %v3898 = vsel %vm3897, %v3864, %v3896
  %v3899 = vld [vmem:[%s2 + $0x3] sm:$0x1]
  %v3900 = vperm.slane %v3899, 0
  %v3901 = vadd.f32 %v3898, %v3900
  %vm3902 = vcmask 1024
  %3903 = vst.msk [vmem:[%s3] sm:$0x3] %vm3902, %v3901
  // Predicated region
  $region14: #{resnet3dnet_head_forward.1} parent=0 // pred_check
    _
  $region15: #{resnet3dnet_head_forward.1} parent=0 // pred_check_branch
    %3905 = sbr.rel (0) target = $region17
  $region16: #{resnet3dnet_head_forward.1} parent=0 // pred_region
    _
  $region17: #{resnet3dnet_head_forward.1} parent=0 // pred_fallthru
    _
  // Predicated region
  $region18: #{resnet3dnet_head_forward.1} parent=0 // pred_check
    _
  $region19: #{resnet3dnet_head_forward.1} parent=0 // pred_check_branch
    %3907 = sbr.rel (0) target = $region21
  $region20: #{resnet3dnet_head_forward.1} parent=0 // pred_region
    _
  $region21: #{resnet3dnet_head_forward.1} parent=0 // pred_fallthru
    _

</llo_original>
